<compile_context>
chip_gen: v7x
topology: tpu7x:2x2x1
jax: 0.10.0
libtpu: 0.0.40
codegen_flags: <defaults>
</compile_context>

<pallas_src>
import math
import numpy as np

import jax
import jax.numpy as jnp
from jax.experimental import pallas as pl
from jax.experimental.pallas import tpu as pltpu

LN_EPS = 1e-5


def gen_pe(max_length, d_model, n=10000):
    pe = np.zeros(max_length * d_model).reshape(max_length, d_model)
    for k in np.arange(max_length):
        for i in np.arange(d_model // 2):
            theta = k / n ** (2 * i / d_model)
            pe[k, 2 * i] = math.sin(theta)
            pe[k, 2 * i + 1] = math.cos(theta)
    return pe


# ----------------------------------------------------------------------------
# Parameter construction (deterministic, synthetic)
# ----------------------------------------------------------------------------
def init_params(key, input_size, num_classes, seq_len, d_model, nhead, num_layers):
    F, C, S, D, L = input_size, num_classes, seq_len, d_model, num_layers
    ks = list(jax.random.split(key, 16))

    def dense(k, fan_in, shape):
        return (jax.random.normal(k, shape, jnp.float32) / np.sqrt(fan_in)).astype(jnp.float32)

    params = {
        # fc_encoding: Linear(F -> D)
        "enc_w": dense(ks[0], F, (F, D)),
        "enc_b": dense(ks[1], F, (1, D)) * 0.1,
        # positional encoding (non-trainable buffer in the torch module)
        "pe": jnp.asarray(gen_pe(S, D), dtype=jnp.float32),
        # cls token, exactly as in the torch module: rng(seed=42)
        "cls": jnp.asarray(
            np.random.default_rng(seed=42).standard_normal((D,)), jnp.float32
        ).reshape(1, D),
        # per-layer transformer-encoder weights (stacked on leading axis L)
        "win_w": dense(ks[2], D, (L, D, 3 * D)),
        "win_b": dense(ks[3], D, (L, 1, 3 * D)) * 0.1,
        "wout_w": dense(ks[4], D, (L, D, D)),
        "wout_b": dense(ks[5], D, (L, 1, D)) * 0.1,
        "ln1_w": jnp.ones((L, 1, D), jnp.float32),
        "ln1_b": jnp.zeros((L, 1, D), jnp.float32),
        "ff1_w": dense(ks[6], D, (L, D, 4 * D)),
        "ff1_b": dense(ks[7], D, (L, 1, 4 * D)) * 0.1,
        "ff2_w": dense(ks[8], 4 * D, (L, 4 * D, D)),
        "ff2_b": dense(ks[9], 4 * D, (L, 1, D)) * 0.1,
        "ln2_w": jnp.ones((L, 1, D), jnp.float32),
        "ln2_b": jnp.zeros((L, 1, D), jnp.float32),
        # fc_decoding: Linear(D -> C)
        "dec_w": dense(ks[10], D, (D, C)),
        "dec_b": dense(ks[11], D, (1, C)) * 0.1,
    }
    return params


# ----------------------------------------------------------------------------
# helpers (f32 math)
# ----------------------------------------------------------------------------
def _layernorm(x, w, b):
    mu = jnp.mean(x, axis=-1, keepdims=True)
    xc = x - mu
    var = jnp.mean(xc * xc, axis=-1, keepdims=True)
    return xc * jax.lax.rsqrt(var + LN_EPS) * w + b


def _softmax_last(x):
    x = x - jnp.max(x, axis=-1, keepdims=True)
    e = jnp.exp(x)
    return e / jnp.sum(e, axis=-1, keepdims=True)


# ----------------------------------------------------------------------------
# Pallas kernel
# ----------------------------------------------------------------------------
def tep_transformer_forward(x, params, *, nhead, batch_block=None):
    B, S, F = x.shape
    L, D, threeD = params["win_w"].shape
    assert threeD == 3 * D
    C = params["dec_w"].shape[1]
    H = nhead
    DH = D // H
    S1 = S + 1                            # sequence length after CLS prepend
    SP = ((S1 + 7) // 8) * 8              # pad to sublane multiple (9 -> 16)
    scale = 1.0 / math.sqrt(DH)

    BB = B if batch_block is None else batch_block
    assert B % BB == 0, "batch must divide evenly into batch blocks"
    n_blocks = B // BB

    bf16 = jnp.bfloat16

    # --- wrapper-side prep: fold enc bias + PE, cast matmul weights to bf16 ---
    prep = {
        "enc_w": params["enc_w"].astype(bf16),
        # (enc_b + pe) tiled to (BB*S, D): same for every batch block
        "encb_pe": jnp.tile(params["enc_b"] + params["pe"], (BB, 1)),
        "cls": params["cls"],
        "win_w": params["win_w"].astype(bf16),
        "win_b": params["win_b"],
        "wout_w": params["wout_w"].astype(bf16),
        "wout_b": params["wout_b"],
        "ln1_w": params["ln1_w"],
        "ln1_b": params["ln1_b"],
        "ln2_w": params["ln2_w"],
        "ln2_b": params["ln2_b"],
        "ff1_w": params["ff1_w"].astype(bf16),
        "ff1_b": params["ff1_b"],
        "ff2_w": params["ff2_w"].astype(bf16),
        "ff2_b": params["ff2_b"],
        "dec_w": params["dec_w"].astype(bf16),
        "dec_b": params["dec_b"],
    }
    weight_order = ("enc_w", "encb_pe", "cls",
                    "win_w", "win_b", "wout_w", "wout_b",
                    "ln1_w", "ln1_b", "ln2_w", "ln2_b",
                    "ff1_w", "ff1_b", "ff2_w", "ff2_b",
                    "dec_w", "dec_b")
    weights = [prep[k] for k in weight_order]

    def kernel(x_ref, enc_w_ref, encb_pe_ref, cls_ref,
               win_w_ref, win_b_ref, wout_w_ref, wout_b_ref,
               ln1_w_ref, ln1_b_ref, ln2_w_ref, ln2_b_ref,
               ff1_w_ref, ff1_b_ref, ff2_w_ref, ff2_b_ref,
               dec_w_ref, dec_b_ref, out_ref):
        # ---- fc_encoding: whole batch block folded into the matmul rows ----
        xb = x_ref[...].reshape(BB * S, F).astype(bf16)            # (BB*S, F)
        enc = jnp.dot(xb, enc_w_ref[...],
                      preferred_element_type=jnp.float32)          # (BB*S, D)
        enc = enc + encb_pe_ref[...]                               # bias + PE (fused)

        # ---- prepend CLS and pad each example's sequence to SP rows ----
        zpad = jnp.zeros((SP - S1, D), jnp.float32)
        h2 = jnp.concatenate(
            [jnp.concatenate([cls_ref[...], enc[b * S:(b + 1) * S, :], zpad],
                             axis=0)
             for b in range(BB)],
            axis=0)                                                # (BB*SP, D)

        # key-column validity mask (padded keys -> -inf before softmax)
        key_valid = jax.lax.broadcasted_iota(jnp.int32, (1, SP), 1) < S1

        def split_heads(m2):  # (BB*SP, D) -> (H*BB, SP, DH), heads stacked on batch
            return jnp.concatenate(
                [m2[:, hh * DH:(hh + 1) * DH].reshape(BB, SP, DH)
                 for hh in range(H)],
                axis=0)

        # ---- transformer encoder layers (post-norm, ReLU FFN, dropout=id) ----
        for l in range(L):
            qkv = jnp.dot(h2.astype(bf16), win_w_ref[l],
                          preferred_element_type=jnp.float32) + win_b_ref[l]  # (BB*SP, 3D)

            qh = split_heads(qkv[:, 0 * D:1 * D]).astype(bf16)     # (H*BB, SP, DH)
            kh = split_heads(qkv[:, 1 * D:2 * D]).astype(bf16)
            vh = split_heads(qkv[:, 2 * D:3 * D]).astype(bf16)

            # all heads & examples in one batched dot_general; the contraction
            # absorbs the K transpose (no explicit .T)
            s = jnp.einsum("bqd,bkd->bqk", qh, kh,
                           preferred_element_type=jnp.float32) * scale        # (H*BB, SP, SP)
            s = jnp.where(key_valid, s, -1e30)
            p = _softmax_last(s)                                               # f32
            o = jnp.einsum("bqk,bkd->bqd", p.astype(bf16), vh,
                           preferred_element_type=jnp.float32)                 # (H*BB, SP, DH)

            # merge heads back onto lanes
            attn = jnp.concatenate(
                [o[hh * BB:(hh + 1) * BB] for hh in range(H)],
                axis=-1).reshape(BB * SP, D)                                   # (BB*SP, D)
            attn = jnp.dot(attn.astype(bf16), wout_w_ref[l],
                           preferred_element_type=jnp.float32) + wout_b_ref[l]

            h2 = _layernorm(h2 + attn, ln1_w_ref[l], ln1_b_ref[l])

            ff = jnp.dot(h2.astype(bf16), ff1_w_ref[l],
                         preferred_element_type=jnp.float32) + ff1_b_ref[l]
            ff = jnp.maximum(ff, 0.0)
            ff = jnp.dot(ff.astype(bf16), ff2_w_ref[l],
                         preferred_element_type=jnp.float32) + ff2_b_ref[l]

            h2 = _layernorm(h2 + ff, ln2_w_ref[l], ln2_b_ref[l])

        # ---- fc_decoding on the CLS rows (row b*SP of each example) ----
        cls_rows = jnp.concatenate(
            [h2[b * SP:b * SP + 1, :] for b in range(BB)], axis=0)             # (BB, D)
        logits = jnp.dot(cls_rows.astype(bf16), dec_w_ref[...],
                         preferred_element_type=jnp.float32) + dec_b_ref[...]  # (BB, C)
        out_ref[...] = _softmax_last(logits)

    def full_spec(a):
        nd = a.ndim
        return pl.BlockSpec(a.shape, lambda i, _nd=nd: (0,) * _nd)

    in_specs = ([pl.BlockSpec((BB, S, F), lambda i: (i, 0, 0))]
                + [full_spec(w) for w in weights])
    # Disjoint per-step output blocks: safe with "parallel" semantics and
    # lets the batch axis shard across both TensorCores on v7x.
    out_spec = pl.BlockSpec((BB, C), lambda i: (i, 0))

    return pl.pallas_call(
        kernel,
        out_shape=jax.ShapeDtypeStruct((B, C), jnp.float32),
        grid_spec=pltpu.PrefetchScalarGridSpec(
            num_scalar_prefetch=0,
            grid=(n_blocks,),
            in_specs=in_specs,
            out_specs=out_spec,
        ),
        compiler_params=pltpu.CompilerParams(
            dimension_semantics=("parallel",),
        ),
    )(x, *weights)


# ----------------------------------------------------------------------------
# Pure-JAX f32 reference (mirrors PyTorch eval-mode semantics)
# ----------------------------------------------------------------------------
def tep_reference(x, p, *, nhead):
    B, S, F = x.shape
    L, D, _ = p["win_w"].shape
    H, DH = nhead, D // nhead
    enc = x @ p["enc_w"] + p["enc_b"] + p["pe"]                      # (B,S,D)
    cls = jnp.broadcast_to(p["cls"][None], (B, 1, D))
    h = jnp.concatenate([cls, enc], axis=1)                          # (B,S+1,D)
    for l in range(L):
        qkv = h @ p["win_w"][l] + p["win_b"][l]
        q, k, v = qkv[..., :D], qkv[..., D:2 * D], qkv[..., 2 * D:]
        q = q.reshape(B, -1, H, DH)
        k = k.reshape(B, -1, H, DH)
        v = v.reshape(B, -1, H, DH)
        s = jnp.einsum("bqhd,bkhd->bhqk", q, k) / math.sqrt(DH)
        pattn = jax.nn.softmax(s, axis=-1)
        o = jnp.einsum("bhqk,bkhd->bqhd", pattn, v).reshape(B, -1, D)
        o = o @ p["wout_w"][l] + p["wout_b"][l]
        h = _layernorm(h + o, p["ln1_w"][l], p["ln1_b"][l])
        ff = jnp.maximum(h @ p["ff1_w"][l] + p["ff1_b"][l], 0.0)
        ff = ff @ p["ff2_w"][l] + p["ff2_b"][l]
        h = _layernorm(h + ff, p["ln2_w"][l], p["ln2_b"][l])
    logits = h[:, 0, :] @ p["dec_w"] + p["dec_b"]
    return jax.nn.softmax(logits, axis=-1)


if __name__ == "__main__":
    # Small shapes consistent with the module's forward:
    # input_size=4, num_classes=4, sequence_length=8, embedding_dim=32,
    # nhead=4, num_layers=2, batch=2.
    B, F, C, S, D, H, L = 2, 4, 4, 8, 32, 4, 2

    root = jax.random.PRNGKey(0)
    kx, kp = jax.random.split(root)
    x = jax.random.normal(kx, (B, S, F), dtype=jnp.float32)
    params = init_params(kp, F, C, S, D, H, L)

    out = tep_transformer_forward(x, params, nhead=H)
    out = jax.block_until_ready(out)

    ref = tep_reference(x, params, nhead=H)
    assert out.shape == (B, C)
    # Tolerance accounts for bf16-cast matmul operands (f32 accumulation).
    assert np.allclose(np.asarray(out), np.asarray(ref), atol=2.5e-2, rtol=2.5e-2), (
        "mismatch vs reference", np.abs(np.asarray(out) - np.asarray(ref)).max())

    print("KERNEL_OK")
</pallas_src>

<mosaic_0001>
module attributes {stable_mosaic.version = 11 : i64} {
  func.func @kernel(%arg0: i32, %arg1: memref<2x8x4xf32, #tpu.memory_space<vmem>>, %arg2: memref<4x32xbf16, #tpu.memory_space<vmem>>, %arg3: memref<16x32xf32, #tpu.memory_space<vmem>>, %arg4: memref<1x32xf32, #tpu.memory_space<vmem>>, %arg5: memref<2x32x96xbf16, #tpu.memory_space<vmem>>, %arg6: memref<2x1x96xf32, #tpu.memory_space<vmem>>, %arg7: memref<2x32x32xbf16, #tpu.memory_space<vmem>>, %arg8: memref<2x1x32xf32, #tpu.memory_space<vmem>>, %arg9: memref<2x1x32xf32, #tpu.memory_space<vmem>>, %arg10: memref<2x1x32xf32, #tpu.memory_space<vmem>>, %arg11: memref<2x1x32xf32, #tpu.memory_space<vmem>>, %arg12: memref<2x1x32xf32, #tpu.memory_space<vmem>>, %arg13: memref<2x32x128xbf16, #tpu.memory_space<vmem>>, %arg14: memref<2x1x128xf32, #tpu.memory_space<vmem>>, %arg15: memref<2x128x32xbf16, #tpu.memory_space<vmem>>, %arg16: memref<2x1x32xf32, #tpu.memory_space<vmem>>, %arg17: memref<32x4xbf16, #tpu.memory_space<vmem>>, %arg18: memref<1x4xf32, #tpu.memory_space<vmem>>, %arg19: memref<2x4xf32, #tpu.memory_space<vmem>>) attributes {dimension_semantics = [#tpu.dimension_semantics<parallel>], iteration_bounds = array<i64: 1>, scalar_prefetch = 0 : i64, scratch_operands = 0 : i64, tpu.core_type = #tpu.core_type<tc>, window_params = [{transform_indices = @transform_0, window_bounds = array<i64: 2, 8, 4>}, {pipeline_mode = #tpu.pipeline_mode<synchronous>, transform_indices = @transform_1, window_bounds = array<i64: 4, 32>}, {pipeline_mode = #tpu.pipeline_mode<synchronous>, transform_indices = @transform_2, window_bounds = array<i64: 16, 32>}, {pipeline_mode = #tpu.pipeline_mode<synchronous>, transform_indices = @transform_3, window_bounds = array<i64: 1, 32>}, {pipeline_mode = #tpu.pipeline_mode<synchronous>, transform_indices = @transform_4, window_bounds = array<i64: 2, 32, 96>}, {pipeline_mode = #tpu.pipeline_mode<synchronous>, transform_indices = @transform_5, window_bounds = array<i64: 2, 1, 96>}, {pipeline_mode = #tpu.pipeline_mode<synchronous>, transform_indices = @transform_6, window_bounds = array<i64: 2, 32, 32>}, {pipeline_mode = #tpu.pipeline_mode<synchronous>, transform_indices = @transform_7, window_bounds = array<i64: 2, 1, 32>}, {pipeline_mode = #tpu.pipeline_mode<synchronous>, transform_indices = @transform_8, window_bounds = array<i64: 2, 1, 32>}, {pipeline_mode = #tpu.pipeline_mode<synchronous>, transform_indices = @transform_9, window_bounds = array<i64: 2, 1, 32>}, {pipeline_mode = #tpu.pipeline_mode<synchronous>, transform_indices = @transform_10, window_bounds = array<i64: 2, 1, 32>}, {pipeline_mode = #tpu.pipeline_mode<synchronous>, transform_indices = @transform_11, window_bounds = array<i64: 2, 1, 32>}, {pipeline_mode = #tpu.pipeline_mode<synchronous>, transform_indices = @transform_12, window_bounds = array<i64: 2, 32, 128>}, {pipeline_mode = #tpu.pipeline_mode<synchronous>, transform_indices = @transform_13, window_bounds = array<i64: 2, 1, 128>}, {pipeline_mode = #tpu.pipeline_mode<synchronous>, transform_indices = @transform_14, window_bounds = array<i64: 2, 128, 32>}, {pipeline_mode = #tpu.pipeline_mode<synchronous>, transform_indices = @transform_15, window_bounds = array<i64: 2, 1, 32>}, {pipeline_mode = #tpu.pipeline_mode<synchronous>, transform_indices = @transform_16, window_bounds = array<i64: 32, 4>}, {pipeline_mode = #tpu.pipeline_mode<synchronous>, transform_indices = @transform_17, window_bounds = array<i64: 1, 4>}, {transform_indices = @transform_18, window_bounds = array<i64: 2, 4>}]} {
    %c0 = arith.constant 0 : index
    %c0_0 = arith.constant 0 : index
    %c0_1 = arith.constant 0 : index
    %0 = vector.load %arg1[%c0, %c0_0, %c0_1] : memref<2x8x4xf32, #tpu.memory_space<vmem>>, vector<2x8x4xf32>
    %1 = vector.shape_cast %0 : vector<2x8x4xf32> to vector<16x4xf32>
    %2 = arith.truncf %1 : vector<16x4xf32> to vector<16x4xbf16>
    %c0_2 = arith.constant 0 : index
    %c0_3 = arith.constant 0 : index
    %3 = vector.load %arg2[%c0_2, %c0_3] : memref<4x32xbf16, #tpu.memory_space<vmem>>, vector<4x32xbf16>
    %cst = arith.constant dense<0.000000e+00> : vector<16x32xf32>
    %4 = tpu.matmul %2, %3, %cst {dimension_numbers = #tpu.dot_dimension_numbers<[1], [0], [0], [1], [0, 0, 1, 1], [], []>} : vector<16x4xbf16>, vector<4x32xbf16>, vector<16x32xf32> -> vector<16x32xf32>
    %c0_4 = arith.constant 0 : index
    %c0_5 = arith.constant 0 : index
    %5 = vector.load %arg3[%c0_4, %c0_5] : memref<16x32xf32, #tpu.memory_space<vmem>>, vector<16x32xf32>
    %6 = arith.addf %4, %5 : vector<16x32xf32>
    %cst_6 = arith.constant 0.000000e+00 : f32
    %7 = vector.broadcast %cst_6 : f32 to vector<7x32xf32>
    %c0_7 = arith.constant 0 : index
    %c0_8 = arith.constant 0 : index
    %8 = vector.load %arg4[%c0_7, %c0_8] : memref<1x32xf32, #tpu.memory_space<vmem>>, vector<1x32xf32>
    %9 = vector.extract_strided_slice %6 {offsets = [0, 0], sizes = [8, 32], strides = [1, 1]} : vector<16x32xf32> to vector<8x32xf32>
    %10 = tpu.concatenate %8, %9, %7 in 0 : vector<1x32xf32>, vector<8x32xf32>, vector<7x32xf32> -> vector<16x32xf32>
    %c0_9 = arith.constant 0 : index
    %c0_10 = arith.constant 0 : index
    %11 = vector.load %arg4[%c0_9, %c0_10] : memref<1x32xf32, #tpu.memory_space<vmem>>, vector<1x32xf32>
    %12 = vector.extract_strided_slice %6 {offsets = [8, 0], sizes = [8, 32], strides = [1, 1]} : vector<16x32xf32> to vector<8x32xf32>
    %13 = tpu.concatenate %11, %12, %7 in 0 : vector<1x32xf32>, vector<8x32xf32>, vector<7x32xf32> -> vector<16x32xf32>
    %14 = tpu.concatenate %10, %13 in 0 : vector<16x32xf32>, vector<16x32xf32> -> vector<32x32xf32>
    %15 = tpu.iota {dimensions = array<i32: 1>} : vector<1x16xi32>
    %c9_i32 = arith.constant 9 : i32
    %16 = vector.broadcast %c9_i32 : i32 to vector<1x16xi32>
    %17 = arith.cmpi slt, %15, %16 : vector<1x16xi32>
    %18 = arith.truncf %14 : vector<32x32xf32> to vector<32x32xbf16>
    %c0_11 = arith.constant 0 : index
    %c0_12 = arith.constant 0 : index
    %c0_13 = arith.constant 0 : index
    %19 = vector.load %arg5[%c0_11, %c0_12, %c0_13] : memref<2x32x96xbf16, #tpu.memory_space<vmem>>, vector<1x32x96xbf16>
    %20 = vector.shape_cast %19 : vector<1x32x96xbf16> to vector<32x96xbf16>
    %cst_14 = arith.constant dense<0.000000e+00> : vector<32x96xf32>
    %21 = tpu.matmul %18, %20, %cst_14 {dimension_numbers = #tpu.dot_dimension_numbers<[1], [0], [0], [1], [0, 0, 1, 1], [], []>} : vector<32x32xbf16>, vector<32x96xbf16>, vector<32x96xf32> -> vector<32x96xf32>
    %c0_15 = arith.constant 0 : index
    %c0_16 = arith.constant 0 : index
    %c0_17 = arith.constant 0 : index
    %22 = vector.load %arg6[%c0_15, %c0_16, %c0_17] : memref<2x1x96xf32, #tpu.memory_space<vmem>>, vector<1x1x96xf32>
    %23 = vector.shape_cast %22 : vector<1x1x96xf32> to vector<1x96xf32>
    %24 = vector.broadcast %23 : vector<1x96xf32> to vector<32x96xf32>
    %25 = arith.addf %21, %24 : vector<32x96xf32>
    %26 = vector.extract_strided_slice %25 {offsets = [0, 0], sizes = [32, 32], strides = [1, 1]} : vector<32x96xf32> to vector<32x32xf32>
    %27 = vector.extract_strided_slice %26 {offsets = [0, 0], sizes = [32, 8], strides = [1, 1]} : vector<32x32xf32> to vector<32x8xf32>
    %28 = vector.shape_cast %27 : vector<32x8xf32> to vector<2x16x8xf32>
    %29 = vector.extract_strided_slice %26 {offsets = [0, 8], sizes = [32, 8], strides = [1, 1]} : vector<32x32xf32> to vector<32x8xf32>
    %30 = vector.shape_cast %29 : vector<32x8xf32> to vector<2x16x8xf32>
    %31 = vector.extract_strided_slice %26 {offsets = [0, 16], sizes = [32, 8], strides = [1, 1]} : vector<32x32xf32> to vector<32x8xf32>
    %32 = vector.shape_cast %31 : vector<32x8xf32> to vector<2x16x8xf32>
    %33 = vector.extract_strided_slice %26 {offsets = [0, 24], sizes = [32, 8], strides = [1, 1]} : vector<32x32xf32> to vector<32x8xf32>
    %34 = vector.shape_cast %33 : vector<32x8xf32> to vector<2x16x8xf32>
    %35 = tpu.concatenate %28, %30, %32, %34 in 0 : vector<2x16x8xf32>, vector<2x16x8xf32>, vector<2x16x8xf32>, vector<2x16x8xf32> -> vector<8x16x8xf32>
    %36 = arith.truncf %35 : vector<8x16x8xf32> to vector<8x16x8xbf16>
    %37 = vector.extract_strided_slice %25 {offsets = [0, 32], sizes = [32, 32], strides = [1, 1]} : vector<32x96xf32> to vector<32x32xf32>
    %38 = vector.extract_strided_slice %37 {offsets = [0, 0], sizes = [32, 8], strides = [1, 1]} : vector<32x32xf32> to vector<32x8xf32>
    %39 = vector.shape_cast %38 : vector<32x8xf32> to vector<2x16x8xf32>
    %40 = vector.extract_strided_slice %37 {offsets = [0, 8], sizes = [32, 8], strides = [1, 1]} : vector<32x32xf32> to vector<32x8xf32>
    %41 = vector.shape_cast %40 : vector<32x8xf32> to vector<2x16x8xf32>
    %42 = vector.extract_strided_slice %37 {offsets = [0, 16], sizes = [32, 8], strides = [1, 1]} : vector<32x32xf32> to vector<32x8xf32>
    %43 = vector.shape_cast %42 : vector<32x8xf32> to vector<2x16x8xf32>
    %44 = vector.extract_strided_slice %37 {offsets = [0, 24], sizes = [32, 8], strides = [1, 1]} : vector<32x32xf32> to vector<32x8xf32>
    %45 = vector.shape_cast %44 : vector<32x8xf32> to vector<2x16x8xf32>
    %46 = tpu.concatenate %39, %41, %43, %45 in 0 : vector<2x16x8xf32>, vector<2x16x8xf32>, vector<2x16x8xf32>, vector<2x16x8xf32> -> vector<8x16x8xf32>
    %47 = arith.truncf %46 : vector<8x16x8xf32> to vector<8x16x8xbf16>
    %48 = vector.extract_strided_slice %25 {offsets = [0, 64], sizes = [32, 32], strides = [1, 1]} : vector<32x96xf32> to vector<32x32xf32>
    %49 = vector.extract_strided_slice %48 {offsets = [0, 0], sizes = [32, 8], strides = [1, 1]} : vector<32x32xf32> to vector<32x8xf32>
    %50 = vector.shape_cast %49 : vector<32x8xf32> to vector<2x16x8xf32>
    %51 = vector.extract_strided_slice %48 {offsets = [0, 8], sizes = [32, 8], strides = [1, 1]} : vector<32x32xf32> to vector<32x8xf32>
    %52 = vector.shape_cast %51 : vector<32x8xf32> to vector<2x16x8xf32>
    %53 = vector.extract_strided_slice %48 {offsets = [0, 16], sizes = [32, 8], strides = [1, 1]} : vector<32x32xf32> to vector<32x8xf32>
    %54 = vector.shape_cast %53 : vector<32x8xf32> to vector<2x16x8xf32>
    %55 = vector.extract_strided_slice %48 {offsets = [0, 24], sizes = [32, 8], strides = [1, 1]} : vector<32x32xf32> to vector<32x8xf32>
    %56 = vector.shape_cast %55 : vector<32x8xf32> to vector<2x16x8xf32>
    %57 = tpu.concatenate %50, %52, %54, %56 in 0 : vector<2x16x8xf32>, vector<2x16x8xf32>, vector<2x16x8xf32>, vector<2x16x8xf32> -> vector<8x16x8xf32>
    %58 = arith.truncf %57 : vector<8x16x8xf32> to vector<8x16x8xbf16>
    "tpu.trace_start"() <{level = 10 : i32, message = "bqd,bkd->bqk"}> : () -> ()
    %cst_18 = arith.constant dense<0.000000e+00> : vector<8x16x16xf32>
    %59 = tpu.matmul %36, %47, %cst_18 {dimension_numbers = #tpu.dot_dimension_numbers<[2], [2], [1], [1], [0, 0, 0, 1, 1, 1], [0], [0]>} : vector<8x16x8xbf16>, vector<8x16x8xbf16>, vector<8x16x16xf32> -> vector<8x16x16xf32>
    "tpu.trace_stop"() : () -> ()
    %cst_19 = arith.constant 0.353553385 : f32
    %60 = vector.broadcast %cst_19 : f32 to vector<8x16x16xf32>
    %61 = arith.mulf %59, %60 : vector<8x16x16xf32>
    %cst_20 = arith.constant -1.000000e+30 : f32
    %62 = vector.shape_cast %17 : vector<1x16xi1> to vector<1x1x16xi1>
    %63 = vector.broadcast %62 : vector<1x1x16xi1> to vector<8x16x16xi1>
    %64 = vector.broadcast %cst_20 : f32 to vector<8x16x16xf32>
    %65 = arith.select %63, %61, %64 : vector<8x16x16xi1>, vector<8x16x16xf32>
    %cst_21 = arith.constant dense<0xFF800000> : vector<8x16xf32>
    %66 = vector.multi_reduction <maximumf>, %65, %cst_21 [2] : vector<8x16x16xf32> to vector<8x16xf32>
    %67 = vector.shape_cast %66 : vector<8x16xf32> to vector<8x16x1xf32>
    %68 = vector.broadcast %67 : vector<8x16x1xf32> to vector<8x16x16xf32>
    %69 = arith.subf %65, %68 : vector<8x16x16xf32>
    %70 = math.exp %69 : vector<8x16x16xf32>
    %cst_22 = arith.constant dense<0.000000e+00> : vector<8x16xf32>
    %71 = vector.multi_reduction <add>, %70, %cst_22 [2] : vector<8x16x16xf32> to vector<8x16xf32>
    %72 = vector.shape_cast %71 : vector<8x16xf32> to vector<8x16x1xf32>
    %73 = vector.broadcast %72 : vector<8x16x1xf32> to vector<8x16x16xf32>
    %74 = arith.divf %70, %73 : vector<8x16x16xf32>
    %75 = arith.truncf %74 : vector<8x16x16xf32> to vector<8x16x16xbf16>
    "tpu.trace_start"() <{level = 10 : i32, message = "bqk,bkd->bqd"}> : () -> ()
    %cst_23 = arith.constant dense<0.000000e+00> : vector<8x16x8xf32>
    %76 = tpu.matmul %75, %58, %cst_23 {dimension_numbers = #tpu.dot_dimension_numbers<[2], [1], [1], [2], [0, 0, 0, 1, 1, 2], [0], [0]>} : vector<8x16x16xbf16>, vector<8x16x8xbf16>, vector<8x16x8xf32> -> vector<8x16x8xf32>
    "tpu.trace_stop"() : () -> ()
    %77 = vector.extract_strided_slice %76 {offsets = [0, 0, 0], sizes = [2, 16, 8], strides = [1, 1, 1]} : vector<8x16x8xf32> to vector<2x16x8xf32>
    %78 = vector.extract_strided_slice %76 {offsets = [2, 0, 0], sizes = [2, 16, 8], strides = [1, 1, 1]} : vector<8x16x8xf32> to vector<2x16x8xf32>
    %79 = vector.extract_strided_slice %76 {offsets = [4, 0, 0], sizes = [2, 16, 8], strides = [1, 1, 1]} : vector<8x16x8xf32> to vector<2x16x8xf32>
    %80 = vector.extract_strided_slice %76 {offsets = [6, 0, 0], sizes = [2, 16, 8], strides = [1, 1, 1]} : vector<8x16x8xf32> to vector<2x16x8xf32>
    %81 = tpu.concatenate %77, %78, %79, %80 in 2 : vector<2x16x8xf32>, vector<2x16x8xf32>, vector<2x16x8xf32>, vector<2x16x8xf32> -> vector<2x16x32xf32>
    %82 = vector.shape_cast %81 : vector<2x16x32xf32> to vector<32x32xf32>
    %83 = arith.truncf %82 : vector<32x32xf32> to vector<32x32xbf16>
    %c0_24 = arith.constant 0 : index
    %c0_25 = arith.constant 0 : index
    %c0_26 = arith.constant 0 : index
    %84 = vector.load %arg7[%c0_24, %c0_25, %c0_26] : memref<2x32x32xbf16, #tpu.memory_space<vmem>>, vector<1x32x32xbf16>
    %85 = vector.shape_cast %84 : vector<1x32x32xbf16> to vector<32x32xbf16>
    %cst_27 = arith.constant dense<0.000000e+00> : vector<32x32xf32>
    %86 = tpu.matmul %83, %85, %cst_27 {dimension_numbers = #tpu.dot_dimension_numbers<[1], [0], [0], [1], [0, 0, 1, 1], [], []>} : vector<32x32xbf16>, vector<32x32xbf16>, vector<32x32xf32> -> vector<32x32xf32>
    %c0_28 = arith.constant 0 : index
    %c0_29 = arith.constant 0 : index
    %c0_30 = arith.constant 0 : index
    %87 = vector.load %arg8[%c0_28, %c0_29, %c0_30] : memref<2x1x32xf32, #tpu.memory_space<vmem>>, vector<1x1x32xf32>
    %88 = vector.shape_cast %87 : vector<1x1x32xf32> to vector<1x32xf32>
    %89 = vector.broadcast %88 : vector<1x32xf32> to vector<32x32xf32>
    %90 = arith.addf %86, %89 : vector<32x32xf32>
    %91 = arith.addf %14, %90 : vector<32x32xf32>
    %c0_31 = arith.constant 0 : index
    %c0_32 = arith.constant 0 : index
    %c0_33 = arith.constant 0 : index
    %92 = vector.load %arg9[%c0_31, %c0_32, %c0_33] : memref<2x1x32xf32, #tpu.memory_space<vmem>>, vector<1x1x32xf32>
    %93 = vector.shape_cast %92 : vector<1x1x32xf32> to vector<1x32xf32>
    %c0_34 = arith.constant 0 : index
    %c0_35 = arith.constant 0 : index
    %c0_36 = arith.constant 0 : index
    %94 = vector.load %arg10[%c0_34, %c0_35, %c0_36] : memref<2x1x32xf32, #tpu.memory_space<vmem>>, vector<1x1x32xf32>
    %95 = vector.shape_cast %94 : vector<1x1x32xf32> to vector<1x32xf32>
    %cst_37 = arith.constant dense<0.000000e+00> : vector<32xf32>
    %96 = vector.multi_reduction <add>, %91, %cst_37 [1] : vector<32x32xf32> to vector<32xf32>
    %97 = vector.shape_cast %96 : vector<32xf32> to vector<32x1xf32>
    %cst_38 = arith.constant 3.200000e+01 : f32
    %98 = vector.broadcast %cst_38 : f32 to vector<32x1xf32>
    %99 = arith.divf %97, %98 : vector<32x1xf32>
    %100 = vector.broadcast %99 : vector<32x1xf32> to vector<32x32xf32>
    %101 = arith.subf %91, %100 : vector<32x32xf32>
    %102 = arith.mulf %101, %101 : vector<32x32xf32>
    %cst_39 = arith.constant dense<0.000000e+00> : vector<32xf32>
    %103 = vector.multi_reduction <add>, %102, %cst_39 [1] : vector<32x32xf32> to vector<32xf32>
    %104 = vector.shape_cast %103 : vector<32xf32> to vector<32x1xf32>
    %cst_40 = arith.constant 3.200000e+01 : f32
    %105 = vector.broadcast %cst_40 : f32 to vector<32x1xf32>
    %106 = arith.divf %104, %105 : vector<32x1xf32>
    %cst_41 = arith.constant 9.99999974E-6 : f32
    %107 = vector.broadcast %cst_41 : f32 to vector<32x1xf32>
    %108 = arith.addf %106, %107 : vector<32x1xf32>
    %109 = math.rsqrt %108 : vector<32x1xf32>
    %110 = vector.broadcast %109 : vector<32x1xf32> to vector<32x32xf32>
    %111 = arith.mulf %101, %110 : vector<32x32xf32>
    %112 = vector.broadcast %93 : vector<1x32xf32> to vector<32x32xf32>
    %113 = arith.mulf %111, %112 : vector<32x32xf32>
    %114 = vector.broadcast %95 : vector<1x32xf32> to vector<32x32xf32>
    %115 = arith.addf %113, %114 : vector<32x32xf32>
    %116 = arith.truncf %115 : vector<32x32xf32> to vector<32x32xbf16>
    %c0_42 = arith.constant 0 : index
    %c0_43 = arith.constant 0 : index
    %c0_44 = arith.constant 0 : index
    %117 = vector.load %arg13[%c0_42, %c0_43, %c0_44] : memref<2x32x128xbf16, #tpu.memory_space<vmem>>, vector<1x32x128xbf16>
    %118 = vector.shape_cast %117 : vector<1x32x128xbf16> to vector<32x128xbf16>
    %cst_45 = arith.constant dense<0.000000e+00> : vector<32x128xf32>
    %119 = tpu.matmul %116, %118, %cst_45 {dimension_numbers = #tpu.dot_dimension_numbers<[1], [0], [0], [1], [0, 0, 1, 1], [], []>} : vector<32x32xbf16>, vector<32x128xbf16>, vector<32x128xf32> -> vector<32x128xf32>
    %c0_46 = arith.constant 0 : index
    %c0_47 = arith.constant 0 : index
    %c0_48 = arith.constant 0 : index
    %120 = vector.load %arg14[%c0_46, %c0_47, %c0_48] : memref<2x1x128xf32, #tpu.memory_space<vmem>>, vector<1x1x128xf32>
    %121 = vector.shape_cast %120 : vector<1x1x128xf32> to vector<1x128xf32>
    %122 = vector.broadcast %121 : vector<1x128xf32> to vector<32x128xf32>
    %123 = arith.addf %119, %122 : vector<32x128xf32>
    %cst_49 = arith.constant 0.000000e+00 : f32
    %124 = vector.broadcast %cst_49 : f32 to vector<32x128xf32>
    %125 = arith.maximumf %123, %124 : vector<32x128xf32>
    %126 = arith.truncf %125 : vector<32x128xf32> to vector<32x128xbf16>
    %c0_50 = arith.constant 0 : index
    %c0_51 = arith.constant 0 : index
    %c0_52 = arith.constant 0 : index
    %127 = vector.load %arg15[%c0_50, %c0_51, %c0_52] : memref<2x128x32xbf16, #tpu.memory_space<vmem>>, vector<1x128x32xbf16>
    %128 = vector.shape_cast %127 : vector<1x128x32xbf16> to vector<128x32xbf16>
    %cst_53 = arith.constant dense<0.000000e+00> : vector<32x32xf32>
    %129 = tpu.matmul %126, %128, %cst_53 {dimension_numbers = #tpu.dot_dimension_numbers<[1], [0], [0], [1], [0, 0, 1, 1], [], []>} : vector<32x128xbf16>, vector<128x32xbf16>, vector<32x32xf32> -> vector<32x32xf32>
    %c0_54 = arith.constant 0 : index
    %c0_55 = arith.constant 0 : index
    %c0_56 = arith.constant 0 : index
    %130 = vector.load %arg16[%c0_54, %c0_55, %c0_56] : memref<2x1x32xf32, #tpu.memory_space<vmem>>, vector<1x1x32xf32>
    %131 = vector.shape_cast %130 : vector<1x1x32xf32> to vector<1x32xf32>
    %132 = vector.broadcast %131 : vector<1x32xf32> to vector<32x32xf32>
    %133 = arith.addf %129, %132 : vector<32x32xf32>
    %134 = arith.addf %115, %133 : vector<32x32xf32>
    %c0_57 = arith.constant 0 : index
    %c0_58 = arith.constant 0 : index
    %c0_59 = arith.constant 0 : index
    %135 = vector.load %arg11[%c0_57, %c0_58, %c0_59] : memref<2x1x32xf32, #tpu.memory_space<vmem>>, vector<1x1x32xf32>
    %136 = vector.shape_cast %135 : vector<1x1x32xf32> to vector<1x32xf32>
    %c0_60 = arith.constant 0 : index
    %c0_61 = arith.constant 0 : index
    %c0_62 = arith.constant 0 : index
    %137 = vector.load %arg12[%c0_60, %c0_61, %c0_62] : memref<2x1x32xf32, #tpu.memory_space<vmem>>, vector<1x1x32xf32>
    %138 = vector.shape_cast %137 : vector<1x1x32xf32> to vector<1x32xf32>
    %cst_63 = arith.constant dense<0.000000e+00> : vector<32xf32>
    %139 = vector.multi_reduction <add>, %134, %cst_63 [1] : vector<32x32xf32> to vector<32xf32>
    %140 = vector.shape_cast %139 : vector<32xf32> to vector<32x1xf32>
    %cst_64 = arith.constant 3.200000e+01 : f32
    %141 = vector.broadcast %cst_64 : f32 to vector<32x1xf32>
    %142 = arith.divf %140, %141 : vector<32x1xf32>
    %143 = vector.broadcast %142 : vector<32x1xf32> to vector<32x32xf32>
    %144 = arith.subf %134, %143 : vector<32x32xf32>
    %145 = arith.mulf %144, %144 : vector<32x32xf32>
    %cst_65 = arith.constant dense<0.000000e+00> : vector<32xf32>
    %146 = vector.multi_reduction <add>, %145, %cst_65 [1] : vector<32x32xf32> to vector<32xf32>
    %147 = vector.shape_cast %146 : vector<32xf32> to vector<32x1xf32>
    %cst_66 = arith.constant 3.200000e+01 : f32
    %148 = vector.broadcast %cst_66 : f32 to vector<32x1xf32>
    %149 = arith.divf %147, %148 : vector<32x1xf32>
    %cst_67 = arith.constant 9.99999974E-6 : f32
    %150 = vector.broadcast %cst_67 : f32 to vector<32x1xf32>
    %151 = arith.addf %149, %150 : vector<32x1xf32>
    %152 = math.rsqrt %151 : vector<32x1xf32>
    %153 = vector.broadcast %152 : vector<32x1xf32> to vector<32x32xf32>
    %154 = arith.mulf %144, %153 : vector<32x32xf32>
    %155 = vector.broadcast %136 : vector<1x32xf32> to vector<32x32xf32>
    %156 = arith.mulf %154, %155 : vector<32x32xf32>
    %157 = vector.broadcast %138 : vector<1x32xf32> to vector<32x32xf32>
    %158 = arith.addf %156, %157 : vector<32x32xf32>
    %159 = arith.truncf %158 : vector<32x32xf32> to vector<32x32xbf16>
    %c1 = arith.constant 1 : index
    %c0_68 = arith.constant 0 : index
    %c0_69 = arith.constant 0 : index
    %160 = vector.load %arg5[%c1, %c0_68, %c0_69] : memref<2x32x96xbf16, #tpu.memory_space<vmem>>, vector<1x32x96xbf16>
    %161 = vector.shape_cast %160 : vector<1x32x96xbf16> to vector<32x96xbf16>
    %cst_70 = arith.constant dense<0.000000e+00> : vector<32x96xf32>
    %162 = tpu.matmul %159, %161, %cst_70 {dimension_numbers = #tpu.dot_dimension_numbers<[1], [0], [0], [1], [0, 0, 1, 1], [], []>} : vector<32x32xbf16>, vector<32x96xbf16>, vector<32x96xf32> -> vector<32x96xf32>
    %c1_71 = arith.constant 1 : index
    %c0_72 = arith.constant 0 : index
    %c0_73 = arith.constant 0 : index
    %163 = vector.load %arg6[%c1_71, %c0_72, %c0_73] : memref<2x1x96xf32, #tpu.memory_space<vmem>>, vector<1x1x96xf32>
    %164 = vector.shape_cast %163 : vector<1x1x96xf32> to vector<1x96xf32>
    %165 = vector.broadcast %164 : vector<1x96xf32> to vector<32x96xf32>
    %166 = arith.addf %162, %165 : vector<32x96xf32>
    %167 = vector.extract_strided_slice %166 {offsets = [0, 0], sizes = [32, 32], strides = [1, 1]} : vector<32x96xf32> to vector<32x32xf32>
    %168 = vector.extract_strided_slice %167 {offsets = [0, 0], sizes = [32, 8], strides = [1, 1]} : vector<32x32xf32> to vector<32x8xf32>
    %169 = vector.shape_cast %168 : vector<32x8xf32> to vector<2x16x8xf32>
    %170 = vector.extract_strided_slice %167 {offsets = [0, 8], sizes = [32, 8], strides = [1, 1]} : vector<32x32xf32> to vector<32x8xf32>
    %171 = vector.shape_cast %170 : vector<32x8xf32> to vector<2x16x8xf32>
    %172 = vector.extract_strided_slice %167 {offsets = [0, 16], sizes = [32, 8], strides = [1, 1]} : vector<32x32xf32> to vector<32x8xf32>
    %173 = vector.shape_cast %172 : vector<32x8xf32> to vector<2x16x8xf32>
    %174 = vector.extract_strided_slice %167 {offsets = [0, 24], sizes = [32, 8], strides = [1, 1]} : vector<32x32xf32> to vector<32x8xf32>
    %175 = vector.shape_cast %174 : vector<32x8xf32> to vector<2x16x8xf32>
    %176 = tpu.concatenate %169, %171, %173, %175 in 0 : vector<2x16x8xf32>, vector<2x16x8xf32>, vector<2x16x8xf32>, vector<2x16x8xf32> -> vector<8x16x8xf32>
    %177 = arith.truncf %176 : vector<8x16x8xf32> to vector<8x16x8xbf16>
    %178 = vector.extract_strided_slice %166 {offsets = [0, 32], sizes = [32, 32], strides = [1, 1]} : vector<32x96xf32> to vector<32x32xf32>
    %179 = vector.extract_strided_slice %178 {offsets = [0, 0], sizes = [32, 8], strides = [1, 1]} : vector<32x32xf32> to vector<32x8xf32>
    %180 = vector.shape_cast %179 : vector<32x8xf32> to vector<2x16x8xf32>
    %181 = vector.extract_strided_slice %178 {offsets = [0, 8], sizes = [32, 8], strides = [1, 1]} : vector<32x32xf32> to vector<32x8xf32>
    %182 = vector.shape_cast %181 : vector<32x8xf32> to vector<2x16x8xf32>
    %183 = vector.extract_strided_slice %178 {offsets = [0, 16], sizes = [32, 8], strides = [1, 1]} : vector<32x32xf32> to vector<32x8xf32>
    %184 = vector.shape_cast %183 : vector<32x8xf32> to vector<2x16x8xf32>
    %185 = vector.extract_strided_slice %178 {offsets = [0, 24], sizes = [32, 8], strides = [1, 1]} : vector<32x32xf32> to vector<32x8xf32>
    %186 = vector.shape_cast %185 : vector<32x8xf32> to vector<2x16x8xf32>
    %187 = tpu.concatenate %180, %182, %184, %186 in 0 : vector<2x16x8xf32>, vector<2x16x8xf32>, vector<2x16x8xf32>, vector<2x16x8xf32> -> vector<8x16x8xf32>
    %188 = arith.truncf %187 : vector<8x16x8xf32> to vector<8x16x8xbf16>
    %189 = vector.extract_strided_slice %166 {offsets = [0, 64], sizes = [32, 32], strides = [1, 1]} : vector<32x96xf32> to vector<32x32xf32>
    %190 = vector.extract_strided_slice %189 {offsets = [0, 0], sizes = [32, 8], strides = [1, 1]} : vector<32x32xf32> to vector<32x8xf32>
    %191 = vector.shape_cast %190 : vector<32x8xf32> to vector<2x16x8xf32>
    %192 = vector.extract_strided_slice %189 {offsets = [0, 8], sizes = [32, 8], strides = [1, 1]} : vector<32x32xf32> to vector<32x8xf32>
    %193 = vector.shape_cast %192 : vector<32x8xf32> to vector<2x16x8xf32>
    %194 = vector.extract_strided_slice %189 {offsets = [0, 16], sizes = [32, 8], strides = [1, 1]} : vector<32x32xf32> to vector<32x8xf32>
    %195 = vector.shape_cast %194 : vector<32x8xf32> to vector<2x16x8xf32>
    %196 = vector.extract_strided_slice %189 {offsets = [0, 24], sizes = [32, 8], strides = [1, 1]} : vector<32x32xf32> to vector<32x8xf32>
    %197 = vector.shape_cast %196 : vector<32x8xf32> to vector<2x16x8xf32>
    %198 = tpu.concatenate %191, %193, %195, %197 in 0 : vector<2x16x8xf32>, vector<2x16x8xf32>, vector<2x16x8xf32>, vector<2x16x8xf32> -> vector<8x16x8xf32>
    %199 = arith.truncf %198 : vector<8x16x8xf32> to vector<8x16x8xbf16>
    "tpu.trace_start"() <{level = 10 : i32, message = "bqd,bkd->bqk"}> : () -> ()
    %cst_74 = arith.constant dense<0.000000e+00> : vector<8x16x16xf32>
    %200 = tpu.matmul %177, %188, %cst_74 {dimension_numbers = #tpu.dot_dimension_numbers<[2], [2], [1], [1], [0, 0, 0, 1, 1, 1], [0], [0]>} : vector<8x16x8xbf16>, vector<8x16x8xbf16>, vector<8x16x16xf32> -> vector<8x16x16xf32>
    "tpu.trace_stop"() : () -> ()
    %cst_75 = arith.constant 0.353553385 : f32
    %201 = vector.broadcast %cst_75 : f32 to vector<8x16x16xf32>
    %202 = arith.mulf %200, %201 : vector<8x16x16xf32>
    %cst_76 = arith.constant -1.000000e+30 : f32
    %203 = vector.shape_cast %17 : vector<1x16xi1> to vector<1x1x16xi1>
    %204 = vector.broadcast %203 : vector<1x1x16xi1> to vector<8x16x16xi1>
    %205 = vector.broadcast %cst_76 : f32 to vector<8x16x16xf32>
    %206 = arith.select %204, %202, %205 : vector<8x16x16xi1>, vector<8x16x16xf32>
    %cst_77 = arith.constant dense<0xFF800000> : vector<8x16xf32>
    %207 = vector.multi_reduction <maximumf>, %206, %cst_77 [2] : vector<8x16x16xf32> to vector<8x16xf32>
    %208 = vector.shape_cast %207 : vector<8x16xf32> to vector<8x16x1xf32>
    %209 = vector.broadcast %208 : vector<8x16x1xf32> to vector<8x16x16xf32>
    %210 = arith.subf %206, %209 : vector<8x16x16xf32>
    %211 = math.exp %210 : vector<8x16x16xf32>
    %cst_78 = arith.constant dense<0.000000e+00> : vector<8x16xf32>
    %212 = vector.multi_reduction <add>, %211, %cst_78 [2] : vector<8x16x16xf32> to vector<8x16xf32>
    %213 = vector.shape_cast %212 : vector<8x16xf32> to vector<8x16x1xf32>
    %214 = vector.broadcast %213 : vector<8x16x1xf32> to vector<8x16x16xf32>
    %215 = arith.divf %211, %214 : vector<8x16x16xf32>
    %216 = arith.truncf %215 : vector<8x16x16xf32> to vector<8x16x16xbf16>
    "tpu.trace_start"() <{level = 10 : i32, message = "bqk,bkd->bqd"}> : () -> ()
    %cst_79 = arith.constant dense<0.000000e+00> : vector<8x16x8xf32>
    %217 = tpu.matmul %216, %199, %cst_79 {dimension_numbers = #tpu.dot_dimension_numbers<[2], [1], [1], [2], [0, 0, 0, 1, 1, 2], [0], [0]>} : vector<8x16x16xbf16>, vector<8x16x8xbf16>, vector<8x16x8xf32> -> vector<8x16x8xf32>
    "tpu.trace_stop"() : () -> ()
    %218 = vector.extract_strided_slice %217 {offsets = [0, 0, 0], sizes = [2, 16, 8], strides = [1, 1, 1]} : vector<8x16x8xf32> to vector<2x16x8xf32>
    %219 = vector.extract_strided_slice %217 {offsets = [2, 0, 0], sizes = [2, 16, 8], strides = [1, 1, 1]} : vector<8x16x8xf32> to vector<2x16x8xf32>
    %220 = vector.extract_strided_slice %217 {offsets = [4, 0, 0], sizes = [2, 16, 8], strides = [1, 1, 1]} : vector<8x16x8xf32> to vector<2x16x8xf32>
    %221 = vector.extract_strided_slice %217 {offsets = [6, 0, 0], sizes = [2, 16, 8], strides = [1, 1, 1]} : vector<8x16x8xf32> to vector<2x16x8xf32>
    %222 = tpu.concatenate %218, %219, %220, %221 in 2 : vector<2x16x8xf32>, vector<2x16x8xf32>, vector<2x16x8xf32>, vector<2x16x8xf32> -> vector<2x16x32xf32>
    %223 = vector.shape_cast %222 : vector<2x16x32xf32> to vector<32x32xf32>
    %224 = arith.truncf %223 : vector<32x32xf32> to vector<32x32xbf16>
    %c1_80 = arith.constant 1 : index
    %c0_81 = arith.constant 0 : index
    %c0_82 = arith.constant 0 : index
    %225 = vector.load %arg7[%c1_80, %c0_81, %c0_82] : memref<2x32x32xbf16, #tpu.memory_space<vmem>>, vector<1x32x32xbf16>
    %226 = vector.shape_cast %225 : vector<1x32x32xbf16> to vector<32x32xbf16>
    %cst_83 = arith.constant dense<0.000000e+00> : vector<32x32xf32>
    %227 = tpu.matmul %224, %226, %cst_83 {dimension_numbers = #tpu.dot_dimension_numbers<[1], [0], [0], [1], [0, 0, 1, 1], [], []>} : vector<32x32xbf16>, vector<32x32xbf16>, vector<32x32xf32> -> vector<32x32xf32>
    %c1_84 = arith.constant 1 : index
    %c0_85 = arith.constant 0 : index
    %c0_86 = arith.constant 0 : index
    %228 = vector.load %arg8[%c1_84, %c0_85, %c0_86] : memref<2x1x32xf32, #tpu.memory_space<vmem>>, vector<1x1x32xf32>
    %229 = vector.shape_cast %228 : vector<1x1x32xf32> to vector<1x32xf32>
    %230 = vector.broadcast %229 : vector<1x32xf32> to vector<32x32xf32>
    %231 = arith.addf %227, %230 : vector<32x32xf32>
    %232 = arith.addf %158, %231 : vector<32x32xf32>
    %c1_87 = arith.constant 1 : index
    %c0_88 = arith.constant 0 : index
    %c0_89 = arith.constant 0 : index
    %233 = vector.load %arg9[%c1_87, %c0_88, %c0_89] : memref<2x1x32xf32, #tpu.memory_space<vmem>>, vector<1x1x32xf32>
    %234 = vector.shape_cast %233 : vector<1x1x32xf32> to vector<1x32xf32>
    %c1_90 = arith.constant 1 : index
    %c0_91 = arith.constant 0 : index
    %c0_92 = arith.constant 0 : index
    %235 = vector.load %arg10[%c1_90, %c0_91, %c0_92] : memref<2x1x32xf32, #tpu.memory_space<vmem>>, vector<1x1x32xf32>
    %236 = vector.shape_cast %235 : vector<1x1x32xf32> to vector<1x32xf32>
    %cst_93 = arith.constant dense<0.000000e+00> : vector<32xf32>
    %237 = vector.multi_reduction <add>, %232, %cst_93 [1] : vector<32x32xf32> to vector<32xf32>
    %238 = vector.shape_cast %237 : vector<32xf32> to vector<32x1xf32>
    %cst_94 = arith.constant 3.200000e+01 : f32
    %239 = vector.broadcast %cst_94 : f32 to vector<32x1xf32>
    %240 = arith.divf %238, %239 : vector<32x1xf32>
    %241 = vector.broadcast %240 : vector<32x1xf32> to vector<32x32xf32>
    %242 = arith.subf %232, %241 : vector<32x32xf32>
    %243 = arith.mulf %242, %242 : vector<32x32xf32>
    %cst_95 = arith.constant dense<0.000000e+00> : vector<32xf32>
    %244 = vector.multi_reduction <add>, %243, %cst_95 [1] : vector<32x32xf32> to vector<32xf32>
    %245 = vector.shape_cast %244 : vector<32xf32> to vector<32x1xf32>
    %cst_96 = arith.constant 3.200000e+01 : f32
    %246 = vector.broadcast %cst_96 : f32 to vector<32x1xf32>
    %247 = arith.divf %245, %246 : vector<32x1xf32>
    %cst_97 = arith.constant 9.99999974E-6 : f32
    %248 = vector.broadcast %cst_97 : f32 to vector<32x1xf32>
    %249 = arith.addf %247, %248 : vector<32x1xf32>
    %250 = math.rsqrt %249 : vector<32x1xf32>
    %251 = vector.broadcast %250 : vector<32x1xf32> to vector<32x32xf32>
    %252 = arith.mulf %242, %251 : vector<32x32xf32>
    %253 = vector.broadcast %234 : vector<1x32xf32> to vector<32x32xf32>
    %254 = arith.mulf %252, %253 : vector<32x32xf32>
    %255 = vector.broadcast %236 : vector<1x32xf32> to vector<32x32xf32>
    %256 = arith.addf %254, %255 : vector<32x32xf32>
    %257 = arith.truncf %256 : vector<32x32xf32> to vector<32x32xbf16>
    %c1_98 = arith.constant 1 : index
    %c0_99 = arith.constant 0 : index
    %c0_100 = arith.constant 0 : index
    %258 = vector.load %arg13[%c1_98, %c0_99, %c0_100] : memref<2x32x128xbf16, #tpu.memory_space<vmem>>, vector<1x32x128xbf16>
    %259 = vector.shape_cast %258 : vector<1x32x128xbf16> to vector<32x128xbf16>
    %cst_101 = arith.constant dense<0.000000e+00> : vector<32x128xf32>
    %260 = tpu.matmul %257, %259, %cst_101 {dimension_numbers = #tpu.dot_dimension_numbers<[1], [0], [0], [1], [0, 0, 1, 1], [], []>} : vector<32x32xbf16>, vector<32x128xbf16>, vector<32x128xf32> -> vector<32x128xf32>
    %c1_102 = arith.constant 1 : index
    %c0_103 = arith.constant 0 : index
    %c0_104 = arith.constant 0 : index
    %261 = vector.load %arg14[%c1_102, %c0_103, %c0_104] : memref<2x1x128xf32, #tpu.memory_space<vmem>>, vector<1x1x128xf32>
    %262 = vector.shape_cast %261 : vector<1x1x128xf32> to vector<1x128xf32>
    %263 = vector.broadcast %262 : vector<1x128xf32> to vector<32x128xf32>
    %264 = arith.addf %260, %263 : vector<32x128xf32>
    %cst_105 = arith.constant 0.000000e+00 : f32
    %265 = vector.broadcast %cst_105 : f32 to vector<32x128xf32>
    %266 = arith.maximumf %264, %265 : vector<32x128xf32>
    %267 = arith.truncf %266 : vector<32x128xf32> to vector<32x128xbf16>
    %c1_106 = arith.constant 1 : index
    %c0_107 = arith.constant 0 : index
    %c0_108 = arith.constant 0 : index
    %268 = vector.load %arg15[%c1_106, %c0_107, %c0_108] : memref<2x128x32xbf16, #tpu.memory_space<vmem>>, vector<1x128x32xbf16>
    %269 = vector.shape_cast %268 : vector<1x128x32xbf16> to vector<128x32xbf16>
    %cst_109 = arith.constant dense<0.000000e+00> : vector<32x32xf32>
    %270 = tpu.matmul %267, %269, %cst_109 {dimension_numbers = #tpu.dot_dimension_numbers<[1], [0], [0], [1], [0, 0, 1, 1], [], []>} : vector<32x128xbf16>, vector<128x32xbf16>, vector<32x32xf32> -> vector<32x32xf32>
    %c1_110 = arith.constant 1 : index
    %c0_111 = arith.constant 0 : index
    %c0_112 = arith.constant 0 : index
    %271 = vector.load %arg16[%c1_110, %c0_111, %c0_112] : memref<2x1x32xf32, #tpu.memory_space<vmem>>, vector<1x1x32xf32>
    %272 = vector.shape_cast %271 : vector<1x1x32xf32> to vector<1x32xf32>
    %273 = vector.broadcast %272 : vector<1x32xf32> to vector<32x32xf32>
    %274 = arith.addf %270, %273 : vector<32x32xf32>
    %275 = arith.addf %256, %274 : vector<32x32xf32>
    %c1_113 = arith.constant 1 : index
    %c0_114 = arith.constant 0 : index
    %c0_115 = arith.constant 0 : index
    %276 = vector.load %arg11[%c1_113, %c0_114, %c0_115] : memref<2x1x32xf32, #tpu.memory_space<vmem>>, vector<1x1x32xf32>
    %277 = vector.shape_cast %276 : vector<1x1x32xf32> to vector<1x32xf32>
    %c1_116 = arith.constant 1 : index
    %c0_117 = arith.constant 0 : index
    %c0_118 = arith.constant 0 : index
    %278 = vector.load %arg12[%c1_116, %c0_117, %c0_118] : memref<2x1x32xf32, #tpu.memory_space<vmem>>, vector<1x1x32xf32>
    %279 = vector.shape_cast %278 : vector<1x1x32xf32> to vector<1x32xf32>
    %cst_119 = arith.constant dense<0.000000e+00> : vector<32xf32>
    %280 = vector.multi_reduction <add>, %275, %cst_119 [1] : vector<32x32xf32> to vector<32xf32>
    %281 = vector.shape_cast %280 : vector<32xf32> to vector<32x1xf32>
    %cst_120 = arith.constant 3.200000e+01 : f32
    %282 = vector.broadcast %cst_120 : f32 to vector<32x1xf32>
    %283 = arith.divf %281, %282 : vector<32x1xf32>
    %284 = vector.broadcast %283 : vector<32x1xf32> to vector<32x32xf32>
    %285 = arith.subf %275, %284 : vector<32x32xf32>
    %286 = arith.mulf %285, %285 : vector<32x32xf32>
    %cst_121 = arith.constant dense<0.000000e+00> : vector<32xf32>
    %287 = vector.multi_reduction <add>, %286, %cst_121 [1] : vector<32x32xf32> to vector<32xf32>
    %288 = vector.shape_cast %287 : vector<32xf32> to vector<32x1xf32>
    %cst_122 = arith.constant 3.200000e+01 : f32
    %289 = vector.broadcast %cst_122 : f32 to vector<32x1xf32>
    %290 = arith.divf %288, %289 : vector<32x1xf32>
    %cst_123 = arith.constant 9.99999974E-6 : f32
    %291 = vector.broadcast %cst_123 : f32 to vector<32x1xf32>
    %292 = arith.addf %290, %291 : vector<32x1xf32>
    %293 = math.rsqrt %292 : vector<32x1xf32>
    %294 = vector.broadcast %293 : vector<32x1xf32> to vector<32x32xf32>
    %295 = arith.mulf %285, %294 : vector<32x32xf32>
    %296 = vector.broadcast %277 : vector<1x32xf32> to vector<32x32xf32>
    %297 = arith.mulf %295, %296 : vector<32x32xf32>
    %298 = vector.broadcast %279 : vector<1x32xf32> to vector<32x32xf32>
    %299 = arith.addf %297, %298 : vector<32x32xf32>
    %300 = vector.extract_strided_slice %299 {offsets = [0, 0], sizes = [1, 32], strides = [1, 1]} : vector<32x32xf32> to vector<1x32xf32>
    %301 = vector.extract_strided_slice %299 {offsets = [16, 0], sizes = [1, 32], strides = [1, 1]} : vector<32x32xf32> to vector<1x32xf32>
    %302 = tpu.concatenate %300, %301 in 0 : vector<1x32xf32>, vector<1x32xf32> -> vector<2x32xf32>
    %303 = arith.truncf %302 : vector<2x32xf32> to vector<2x32xbf16>
    %c0_124 = arith.constant 0 : index
    %c0_125 = arith.constant 0 : index
    %304 = vector.load %arg17[%c0_124, %c0_125] : memref<32x4xbf16, #tpu.memory_space<vmem>>, vector<32x4xbf16>
    %cst_126 = arith.constant dense<0.000000e+00> : vector<2x4xf32>
    %305 = tpu.matmul %303, %304, %cst_126 {dimension_numbers = #tpu.dot_dimension_numbers<[1], [0], [0], [1], [0, 0, 1, 1], [], []>} : vector<2x32xbf16>, vector<32x4xbf16>, vector<2x4xf32> -> vector<2x4xf32>
    %c0_127 = arith.constant 0 : index
    %c0_128 = arith.constant 0 : index
    %306 = vector.load %arg18[%c0_127, %c0_128] : memref<1x4xf32, #tpu.memory_space<vmem>>, vector<1x4xf32>
    %307 = vector.broadcast %306 : vector<1x4xf32> to vector<2x4xf32>
    %308 = arith.addf %305, %307 : vector<2x4xf32>
    %cst_129 = arith.constant dense<0xFF800000> : vector<2xf32>
    %309 = vector.multi_reduction <maximumf>, %308, %cst_129 [1] : vector<2x4xf32> to vector<2xf32>
    %310 = vector.shape_cast %309 : vector<2xf32> to vector<2x1xf32>
    %311 = vector.broadcast %310 : vector<2x1xf32> to vector<2x4xf32>
    %312 = arith.subf %308, %311 : vector<2x4xf32>
    %313 = math.exp %312 : vector<2x4xf32>
    %cst_130 = arith.constant dense<0.000000e+00> : vector<2xf32>
    %314 = vector.multi_reduction <add>, %313, %cst_130 [1] : vector<2x4xf32> to vector<2xf32>
    %315 = vector.shape_cast %314 : vector<2xf32> to vector<2x1xf32>
    %316 = vector.broadcast %315 : vector<2x1xf32> to vector<2x4xf32>
    %317 = arith.divf %313, %316 : vector<2x4xf32>
    %c0_131 = arith.constant 0 : index
    %c0_132 = arith.constant 0 : index
    %318 = vector.load %arg19[%c0_131, %c0_132] : memref<2x4xf32, #tpu.memory_space<vmem>>, vector<2x4xf32>
    tpu.vector_store %arg19[%c0_131, %c0_132], %317 {strides = array<i32>} : memref<2x4xf32, #tpu.memory_space<vmem>>, vector<2x4xf32>,
    return
  }
  func.func @transform_0(%arg0: i32) -> (i32, i32, i32) {
    %c0_i32 = arith.constant 0 : i32
    %c0_i32_0 = arith.constant 0 : i32
    %c0_i32_1 = arith.constant 0 : i32
    return %arg0, %c0_i32, %c0_i32_0 : i32, i32, i32
  }
  func.func @transform_1(%arg0: i32) -> (i32, i32) {
    %c0_i32 = arith.constant 0 : i32
    %c0_i32_0 = arith.constant 0 : i32
    %c0_i32_1 = arith.constant 0 : i32
    return %c0_i32, %c0_i32_0 : i32, i32
  }
  func.func @transform_2(%arg0: i32) -> (i32, i32) {
    %c0_i32 = arith.constant 0 : i32
    %c0_i32_0 = arith.constant 0 : i32
    %c0_i32_1 = arith.constant 0 : i32
    return %c0_i32, %c0_i32_0 : i32, i32
  }
  func.func @transform_3(%arg0: i32) -> (i32, i32) {
    %c0_i32 = arith.constant 0 : i32
    %c0_i32_0 = arith.constant 0 : i32
    %c0_i32_1 = arith.constant 0 : i32
    return %c0_i32, %c0_i32_0 : i32, i32
  }
  func.func @transform_4(%arg0: i32) -> (i32, i32, i32) {
    %c0_i32 = arith.constant 0 : i32
    %c0_i32_0 = arith.constant 0 : i32
    %c0_i32_1 = arith.constant 0 : i32
    %c0_i32_2 = arith.constant 0 : i32
    return %c0_i32, %c0_i32_0, %c0_i32_1 : i32, i32, i32
  }
  func.func @transform_5(%arg0: i32) -> (i32, i32, i32) {
    %c0_i32 = arith.constant 0 : i32
    %c0_i32_0 = arith.constant 0 : i32
    %c0_i32_1 = arith.constant 0 : i32
    %c0_i32_2 = arith.constant 0 : i32
    return %c0_i32, %c0_i32_0, %c0_i32_1 : i32, i32, i32
  }
  func.func @transform_6(%arg0: i32) -> (i32, i32, i32) {
    %c0_i32 = arith.constant 0 : i32
    %c0_i32_0 = arith.constant 0 : i32
    %c0_i32_1 = arith.constant 0 : i32
    %c0_i32_2 = arith.constant 0 : i32
    return %c0_i32, %c0_i32_0, %c0_i32_1 : i32, i32, i32
  }
  func.func @transform_7(%arg0: i32) -> (i32, i32, i32) {
    %c0_i32 = arith.constant 0 : i32
    %c0_i32_0 = arith.constant 0 : i32
    %c0_i32_1 = arith.constant 0 : i32
    %c0_i32_2 = arith.constant 0 : i32
    return %c0_i32, %c0_i32_0, %c0_i32_1 : i32, i32, i32
  }
  func.func @transform_8(%arg0: i32) -> (i32, i32, i32) {
    %c0_i32 = arith.constant 0 : i32
    %c0_i32_0 = arith.constant 0 : i32
    %c0_i32_1 = arith.constant 0 : i32
    %c0_i32_2 = arith.constant 0 : i32
    return %c0_i32, %c0_i32_0, %c0_i32_1 : i32, i32, i32
  }
  func.func @transform_9(%arg0: i32) -> (i32, i32, i32) {
    %c0_i32 = arith.constant 0 : i32
    %c0_i32_0 = arith.constant 0 : i32
    %c0_i32_1 = arith.constant 0 : i32
    %c0_i32_2 = arith.constant 0 : i32
    return %c0_i32, %c0_i32_0, %c0_i32_1 : i32, i32, i32
  }
  func.func @transform_10(%arg0: i32) -> (i32, i32, i32) {
    %c0_i32 = arith.constant 0 : i32
    %c0_i32_0 = arith.constant 0 : i32
    %c0_i32_1 = arith.constant 0 : i32
    %c0_i32_2 = arith.constant 0 : i32
    return %c0_i32, %c0_i32_0, %c0_i32_1 : i32, i32, i32
  }
  func.func @transform_11(%arg0: i32) -> (i32, i32, i32) {
    %c0_i32 = arith.constant 0 : i32
    %c0_i32_0 = arith.constant 0 : i32
    %c0_i32_1 = arith.constant 0 : i32
    %c0_i32_2 = arith.constant 0 : i32
    return %c0_i32, %c0_i32_0, %c0_i32_1 : i32, i32, i32
  }
  func.func @transform_12(%arg0: i32) -> (i32, i32, i32) {
    %c0_i32 = arith.constant 0 : i32
    %c0_i32_0 = arith.constant 0 : i32
    %c0_i32_1 = arith.constant 0 : i32
    %c0_i32_2 = arith.constant 0 : i32
    return %c0_i32, %c0_i32_0, %c0_i32_1 : i32, i32, i32
  }
  func.func @transform_13(%arg0: i32) -> (i32, i32, i32) {
    %c0_i32 = arith.constant 0 : i32
    %c0_i32_0 = arith.constant 0 : i32
    %c0_i32_1 = arith.constant 0 : i32
    %c0_i32_2 = arith.constant 0 : i32
    return %c0_i32, %c0_i32_0, %c0_i32_1 : i32, i32, i32
  }
  func.func @transform_14(%arg0: i32) -> (i32, i32, i32) {
    %c0_i32 = arith.constant 0 : i32
    %c0_i32_0 = arith.constant 0 : i32
    %c0_i32_1 = arith.constant 0 : i32
    %c0_i32_2 = arith.constant 0 : i32
    return %c0_i32, %c0_i32_0, %c0_i32_1 : i32, i32, i32
  }
  func.func @transform_15(%arg0: i32) -> (i32, i32, i32) {
    %c0_i32 = arith.constant 0 : i32
    %c0_i32_0 = arith.constant 0 : i32
    %c0_i32_1 = arith.constant 0 : i32
    %c0_i32_2 = arith.constant 0 : i32
    return %c0_i32, %c0_i32_0, %c0_i32_1 : i32, i32, i32
  }
  func.func @transform_16(%arg0: i32) -> (i32, i32) {
    %c0_i32 = arith.constant 0 : i32
    %c0_i32_0 = arith.constant 0 : i32
    %c0_i32_1 = arith.constant 0 : i32
    return %c0_i32, %c0_i32_0 : i32, i32
  }
  func.func @transform_17(%arg0: i32) -> (i32, i32) {
    %c0_i32 = arith.constant 0 : i32
    %c0_i32_0 = arith.constant 0 : i32
    %c0_i32_1 = arith.constant 0 : i32
    return %c0_i32, %c0_i32_0 : i32, i32
  }
  func.func @transform_18(%arg0: i32) -> (i32, i32) {
    %c0_i32 = arith.constant 0 : i32
    %c0_i32_0 = arith.constant 0 : i32
    return %arg0, %c0_i32 : i32, i32
  }
}

</mosaic_0001>

<llo_original>
// kernel: tpu_custom_call.1
$region0: #{tpu_custom_call.1}
  #allocation0 [shape = 'u32[]', space=smem, size = 0x4, offset = 0x4, fixed_abs, tag = 'smem constant byte address 0x4 - core index']
  #allocation1 [shape = 'u32[144,128]{1,0:T(1,128)}', space=vmem, size = 0x12000, scoped, tag = 'internal scratch']
  %s0 = inlined_call_operand.vmem [shape: f32[2,8,4], index: 0, kind: input, shape index: {}]
  %s1 = inlined_call_operand.vmem [shape: bf16[4,32], index: 1, kind: input, shape index: {}]
  %s2 = inlined_call_operand.vmem [shape: f32[16,32], index: 2, kind: input, shape index: {}]
  %s3 = inlined_call_operand.vmem [shape: f32[1,32], index: 3, kind: input, shape index: {}]
  %s4 = inlined_call_operand.vmem [shape: bf16[2,32,96], index: 4, kind: input, shape index: {}]
  %s5 = inlined_call_operand.vmem [shape: f32[2,1,96], index: 5, kind: input, shape index: {}]
  %s6 = inlined_call_operand.vmem [shape: bf16[2,32,32], index: 6, kind: input, shape index: {}]
  %s7 = inlined_call_operand.vmem [shape: f32[2,1,32], index: 7, kind: input, shape index: {}]
  %s8 = inlined_call_operand.vmem [shape: f32[2,1,32], index: 8, kind: input, shape index: {}]
  %s9 = inlined_call_operand.vmem [shape: f32[2,1,32], index: 9, kind: input, shape index: {}]
  %s10 = inlined_call_operand.vmem [shape: f32[2,1,32], index: 10, kind: input, shape index: {}]
  %s11 = inlined_call_operand.vmem [shape: f32[2,1,32], index: 11, kind: input, shape index: {}]
  %s12 = inlined_call_operand.vmem [shape: bf16[2,32,128], index: 12, kind: input, shape index: {}]
  %s13 = inlined_call_operand.vmem [shape: f32[2,1,128], index: 13, kind: input, shape index: {}]
  %s14 = inlined_call_operand.vmem [shape: bf16[2,128,32], index: 14, kind: input, shape index: {}]
  %s15 = inlined_call_operand.vmem [shape: f32[2,1,32], index: 15, kind: input, shape index: {}]
  %s16 = inlined_call_operand.vmem [shape: bf16[32,4], index: 16, kind: input, shape index: {}]
  %s17 = inlined_call_operand.vmem [shape: f32[1,4], index: 17, kind: input, shape index: {}]
  %s18 = inlined_call_operand.hbm [shape: f32[2,4], index: 18, kind: output, shape index: {}]
  %s19 = sld [smem:[#allocation0]]
  $region82: #{tpu_custom_call.1} parent=0
    _
  %s21 = ssub.s32 1, %s19
  %s22 = scalar_select 0, %s21, %s19
  $region1: #{tpu_custom_call.1} parent=0
    #allocation2 [shape = 'u8[1024]{0}', space=vmem, size = 0x400, scoped, tag = 'output window, operand 0, single buffered']
    #allocation3 [shape = 's32[1]{0}', space=sflag, size = 0x4, scoped, tag = 'scoped memory for tpu_custom_call.1']
    %23 = vsyncpa [#allocation3], 0
    // Predicated region
    $region2: #{tpu_custom_call.1} parent=1 // pred_check
      _
    $region3: #{tpu_custom_call.1} parent=1 // pred_check_branch
      %25 = sbr.rel (0) target = $region5
    $region4: #{tpu_custom_call.1} parent=1 // pred_region
      _
    $region5: #{tpu_custom_call.1} parent=1 // pred_fallthru
      _
    // Predicated region
    $region6: #{tpu_custom_call.1} parent=1 // pred_check
      _
    $region7: #{tpu_custom_call.1} parent=1 // pred_check_branch
      %27 = sbr.rel (0) target = $region9
    $region8: #{tpu_custom_call.1} parent=1 // pred_region
      _
    $region9: #{tpu_custom_call.1} parent=1 // pred_fallthru
      _
    // Predicated region
    $region10: #{tpu_custom_call.1} parent=1 // pred_check
      _
    $region11: #{tpu_custom_call.1} parent=1 // pred_check_branch
      %29 = sbr.rel (0) target = $region13
    $region12: #{tpu_custom_call.1} parent=1 // pred_region
      _
    $region13: #{tpu_custom_call.1} parent=1 // pred_fallthru
      _
    // Predicated region
    $region14: #{tpu_custom_call.1} parent=1 // pred_check
      _
    $region15: #{tpu_custom_call.1} parent=1 // pred_check_branch
      %31 = sbr.rel (0) target = $region17
    $region16: #{tpu_custom_call.1} parent=1 // pred_region
      _
    $region17: #{tpu_custom_call.1} parent=1 // pred_fallthru
      _
    // Predicated region
    $region18: #{tpu_custom_call.1} parent=1 // pred_check
      _
    $region19: #{tpu_custom_call.1} parent=1 // pred_check_branch
      %33 = sbr.rel (0) target = $region21
    $region20: #{tpu_custom_call.1} parent=1 // pred_region
      _
    $region21: #{tpu_custom_call.1} parent=1 // pred_fallthru
      _
    // Predicated region
    $region22: #{tpu_custom_call.1} parent=1 // pred_check
      _
    $region23: #{tpu_custom_call.1} parent=1 // pred_check_branch
      %35 = sbr.rel (0) target = $region25
    $region24: #{tpu_custom_call.1} parent=1 // pred_region
      _
    $region25: #{tpu_custom_call.1} parent=1 // pred_fallthru
      _
    // Predicated region
    $region26: #{tpu_custom_call.1} parent=1 // pred_check
      _
    $region27: #{tpu_custom_call.1} parent=1 // pred_check_branch
      %37 = sbr.rel (0) target = $region29
    $region28: #{tpu_custom_call.1} parent=1 // pred_region
      _
    $region29: #{tpu_custom_call.1} parent=1 // pred_fallthru
      _
    // Predicated region
    $region30: #{tpu_custom_call.1} parent=1 // pred_check
      _
    $region31: #{tpu_custom_call.1} parent=1 // pred_check_branch
      %39 = sbr.rel (0) target = $region33
    $region32: #{tpu_custom_call.1} parent=1 // pred_region
      _
    $region33: #{tpu_custom_call.1} parent=1 // pred_fallthru
      _
    // Predicated region
    $region34: #{tpu_custom_call.1} parent=1 // pred_check
      _
    $region35: #{tpu_custom_call.1} parent=1 // pred_check_branch
      %41 = sbr.rel (0) target = $region37
    $region36: #{tpu_custom_call.1} parent=1 // pred_region
      _
    $region37: #{tpu_custom_call.1} parent=1 // pred_fallthru
      _
    // Predicated region
    $region38: #{tpu_custom_call.1} parent=1 // pred_check
      _
    $region39: #{tpu_custom_call.1} parent=1 // pred_check_branch
      %43 = sbr.rel (0) target = $region41
    $region40: #{tpu_custom_call.1} parent=1 // pred_region
      _
    $region41: #{tpu_custom_call.1} parent=1 // pred_fallthru
      _
    // Predicated region
    $region42: #{tpu_custom_call.1} parent=1 // pred_check
      _
    $region43: #{tpu_custom_call.1} parent=1 // pred_check_branch
      %45 = sbr.rel (0) target = $region45
    $region44: #{tpu_custom_call.1} parent=1 // pred_region
      _
    $region45: #{tpu_custom_call.1} parent=1 // pred_fallthru
      _
    // Predicated region
    $region46: #{tpu_custom_call.1} parent=1 // pred_check
      _
    $region47: #{tpu_custom_call.1} parent=1 // pred_check_branch
      %47 = sbr.rel (0) target = $region49
    $region48: #{tpu_custom_call.1} parent=1 // pred_region
      _
    $region49: #{tpu_custom_call.1} parent=1 // pred_fallthru
      _
    // Predicated region
    $region50: #{tpu_custom_call.1} parent=1 // pred_check
      _
    $region51: #{tpu_custom_call.1} parent=1 // pred_check_branch
      %49 = sbr.rel (0) target = $region53
    $region52: #{tpu_custom_call.1} parent=1 // pred_region
      _
    $region53: #{tpu_custom_call.1} parent=1 // pred_fallthru
      _
    // Predicated region
    $region54: #{tpu_custom_call.1} parent=1 // pred_check
      _
    $region55: #{tpu_custom_call.1} parent=1 // pred_check_branch
      %51 = sbr.rel (0) target = $region57
    $region56: #{tpu_custom_call.1} parent=1 // pred_region
      _
    $region57: #{tpu_custom_call.1} parent=1 // pred_fallthru
      _
    // Predicated region
    $region58: #{tpu_custom_call.1} parent=1 // pred_check
      _
    $region59: #{tpu_custom_call.1} parent=1 // pred_check_branch
      %53 = sbr.rel (0) target = $region61
    $region60: #{tpu_custom_call.1} parent=1 // pred_region
      _
    $region61: #{tpu_custom_call.1} parent=1 // pred_fallthru
      _
    // Predicated region
    $region62: #{tpu_custom_call.1} parent=1 // pred_check
      _
    $region63: #{tpu_custom_call.1} parent=1 // pred_check_branch
      %55 = sbr.rel (0) target = $region65
    $region64: #{tpu_custom_call.1} parent=1 // pred_region
      _
    $region65: #{tpu_custom_call.1} parent=1 // pred_fallthru
      _
    // Predicated region
    $region66: #{tpu_custom_call.1} parent=1 // pred_check
      _
    $region67: #{tpu_custom_call.1} parent=1 // pred_check_branch
      %57 = sbr.rel (0) target = $region69
    $region68: #{tpu_custom_call.1} parent=1 // pred_region
      _
    $region69: #{tpu_custom_call.1} parent=1 // pred_fallthru
      _
    // Predicated region
    $region70: #{tpu_custom_call.1} parent=1 // pred_check
      _
    $region71: #{tpu_custom_call.1} parent=1 // pred_check_branch
      %59 = sbr.rel (0) target = $region73
    $region72: #{tpu_custom_call.1} parent=1 // pred_region
      _
    $region73: #{tpu_custom_call.1} parent=1 // pred_fallthru
      _
    %v61 = vld [vmem:[%s0] sm:$0xff]
    %v62 = vld [vmem:[%s0 + $0x8] sm:$0xff]
    %v63 = vpack.c.bf16 %v62, %v61
    %v64 = vld [vmem:[%s1] sm:$0x3]
    %v65 = vld [vmem:[%s2] sm:$0xff]
    %v66 = vld [vmem:[%s2 + $0x8] sm:$0xff]
    %vm67 = vcmask 31744
    %v69 = vsel %vm67, %v63, 0
    %vm71 = vcmask 1041408
    %v73 = vsel %vm71, %v64, 0
    %75 = vmatprep.subr.bf16.mxu0 0
    %76 = vmatpush1.bf16.msra.mxu0 %v73
    %77 = vmatprep.subr.bf16.mxu0 0
    %78 = vmatpush1.bf16.msra.mxu0 0
    %79 = vmatprep.subr.bf16.mxu0 0
    %80 = vmatpush1.bf16.msra.mxu0 0
    %81 = vmatprep.subr.bf16.mxu0 0
    %82 = vmatpush1.bf16.msra.mxu0 0
    %83 = vmatprep.subr.bf16.mxu0 0
    %84 = vmatpush1.bf16.msra.mxu0 0
    %85 = vmatprep.subr.bf16.mxu0 0
    %86 = vmatpush1.bf16.msra.mxu0 0
    %87 = vmatprep.subr.bf16.mxu0 0
    %88 = vmatpush1.bf16.msra.mxu0 0
    %89 = vmatprep.subr.bf16.mxu0 0
    %90 = vmatpush1.bf16.msra.mxu0 0
    %91 = vmatprep.subr.bf16.mxu0 0
    %92 = vmatpush1.bf16.msra.mxu0 0
    %93 = vmatprep.subr.bf16.mxu0 0
    %94 = vmatpush1.bf16.msra.mxu0 0
    %95 = vmatprep.subr.bf16.mxu0 0
    %96 = vmatpush1.bf16.msra.mxu0 0
    %97 = vmatprep.subr.bf16.mxu0 0
    %98 = vmatpush1.bf16.msra.mxu0 0
    %99 = vmatprep.subr.bf16.mxu0 0
    %100 = vmatpush1.bf16.msra.mxu0 0
    %101 = vmatprep.subr.bf16.mxu0 0
    %102 = vmatpush1.bf16.msra.mxu0 0
    %103 = vmatprep.subr.bf16.mxu0 0
    %104 = vmatpush1.bf16.msra.mxu0 0
    %105 = vmatprep.subr.bf16.mxu0 0
    %106 = vmatpush1.bf16.msra.mxu0 0
    %107 = vmatprep.mubr.bf16.mxu0 0
    %108 = vmatmul.mubr.bf16.gmra.mrb[0].mxu0 %v69
    %v109 = vpop.f32.mrb[0].mxu0
    %v110 = vadd.f32 %v65, %v109
    %v111 = vpop.f32.mrb[0].mxu0
    %v112 = vpop.f32.mrb[0].mxu0
    %v113 = vadd.f32 %v66, %v112
    %v114 = vpop.f32.mrb[0].mxu0
    %115 = vdwg.mxu0
    %v116 = vld [vmem:[%s3] sm:$0x1]
    %v118 = vrot.slane %v110, 7
    %vm120 = vcmask 1040384
    %v121 = vsel %vm120, %v116, %v118
    %v122 = vsel %vm120, %v118, 0.0
    %v124 = vrot.slane %v113, 7
    %v126 = vsel %vm120, %v116, %v124
    %v127 = vsel %vm120, %v124, 0.0
    %v128 = vlaneseq
    %v129 = vand.u32 %v128, 127
    %vm130 = vcmp.lt.s32.totalorder %v129, 9
    %v131 = vpack.c.bf16 %v122, %v121
    %v132 = vpack.c.bf16 %v127, %v126
    %v133 = vld [vmem:[%s4] sm:$0xf]
    %v134 = vld [vmem:[%s4 + $0x4] sm:$0xf]
    %v135 = vld [vmem:[%s4 + $0x8] sm:$0xf]
    %v136 = vld [vmem:[%s4 + $0xc] sm:$0xf]
    %v137 = vld [vmem:[%s5] sm:$0x1]
    %v139 = vlaneseq
    %v140 = vshrl.u32 %v139, 7
    %v141 = vsub.s32 0, %v140
    %v142 = vrot.slane %v137, %v141
    %v148 = vunpack.c.l.b16 %v133
    %v149 = vunpack.c.l.b16 %v134
    %v150 = vunpack.c.l.b16 %v135
    %v151 = vunpack.c.l.b16 %v136
    %v152 = vpack.c.b16 %v149, %v148
    %v153 = vpack.c.b16 %v151, %v150
    %vm156 = vcmask 261120
    %v158 = vsel %vm156, %v131, 0
    %v161 = vsel %vm156, %v132, 0
    %163 = vmatprep.subr.bf16.mxu0 0
    %164 = vmatpush1.bf16.msra.mxu0 %v152
    %165 = vmatprep.subr.bf16.mxu0 0
    %166 = vmatpush1.bf16.msra.mxu0 %v153
    %167 = vmatprep.subr.bf16.mxu0 0
    %168 = vmatpush1.bf16.msra.mxu0 0
    %169 = vmatprep.subr.bf16.mxu0 0
    %170 = vmatpush1.bf16.msra.mxu0 0
    %171 = vmatprep.subr.bf16.mxu0 0
    %172 = vmatpush1.bf16.msra.mxu0 0
    %173 = vmatprep.subr.bf16.mxu0 0
    %174 = vmatpush1.bf16.msra.mxu0 0
    %175 = vmatprep.subr.bf16.mxu0 0
    %176 = vmatpush1.bf16.msra.mxu0 0
    %177 = vmatprep.subr.bf16.mxu0 0
    %178 = vmatpush1.bf16.msra.mxu0 0
    %179 = vmatprep.subr.bf16.mxu0 0
    %180 = vmatpush1.bf16.msra.mxu0 0
    %181 = vmatprep.subr.bf16.mxu0 0
    %182 = vmatpush1.bf16.msra.mxu0 0
    %183 = vmatprep.subr.bf16.mxu0 0
    %184 = vmatpush1.bf16.msra.mxu0 0
    %185 = vmatprep.subr.bf16.mxu0 0
    %186 = vmatpush1.bf16.msra.mxu0 0
    %187 = vmatprep.subr.bf16.mxu0 0
    %188 = vmatpush1.bf16.msra.mxu0 0
    %189 = vmatprep.subr.bf16.mxu0 0
    %190 = vmatpush1.bf16.msra.mxu0 0
    %191 = vmatprep.subr.bf16.mxu0 0
    %192 = vmatpush1.bf16.msra.mxu0 0
    %193 = vmatprep.subr.bf16.mxu0 0
    %194 = vmatpush1.bf16.msra.mxu0 0
    %195 = vmatprep.mubr.bf16.mxu0 0
    %196 = vmatmul.mubr.bf16.gmra.mrb[0].mxu0 %v158
    %v197 = vpop.f32.mrb[0].mxu0
    %v198 = vadd.f32 %v142, %v197
    %v199 = vpop.f32.mrb[0].mxu0
    %v200 = vpop.f32.mrb[0].mxu0
    %v201 = vadd.f32 %v142, %v200
    %v202 = vpop.f32.mrb[0].mxu0
    %203 = vmatprep.mubr.bf16.mxu0 0
    %204 = vmatmul.mubr.bf16.gmra.mrb[0].mxu0 %v161
    %v205 = vpop.f32.mrb[0].mxu0
    %v206 = vadd.f32 %v142, %v205
    %v207 = vpop.f32.mrb[0].mxu0
    %v208 = vpop.f32.mrb[0].mxu0
    %v209 = vadd.f32 %v142, %v208
    %v210 = vpop.f32.mrb[0].mxu0
    %211 = vdwg.mxu0
    %216 = vrot.lane.b32.xlu0 %v198, 120
    %v217 = vpop.permute.xlu0 %216
    %218 = vrot.lane.b32.xlu0 %v201, 120
    %v219 = vpop.permute.xlu0 %218
    %220 = vrot.lane.b32.xlu0 %v206, 120
    %v221 = vpop.permute.xlu0 %220
    %222 = vrot.lane.b32.xlu0 %v209, 120
    %v223 = vpop.permute.xlu0 %222
    %228 = vrot.lane.b32.xlu0 %v198, 112
    %v229 = vpop.permute.xlu0 %228
    %230 = vrot.lane.b32.xlu0 %v201, 112
    %v231 = vpop.permute.xlu0 %230
    %232 = vrot.lane.b32.xlu0 %v206, 112
    %v233 = vpop.permute.xlu0 %232
    %234 = vrot.lane.b32.xlu0 %v209, 112
    %v235 = vpop.permute.xlu0 %234
    %240 = vrot.lane.b32.xlu0 %v198, 104
    %v241 = vpop.permute.xlu0 %240
    %242 = vrot.lane.b32.xlu0 %v201, 104
    %v243 = vpop.permute.xlu0 %242
    %244 = vrot.lane.b32.xlu0 %v206, 104
    %v245 = vpop.permute.xlu0 %244
    %246 = vrot.lane.b32.xlu0 %v209, 104
    %v247 = vpop.permute.xlu0 %246
    %v252 = vpack.c.bf16 %v201, %v198
    %v253 = vpack.c.bf16 %v209, %v206
    %v254 = vpack.c.bf16 %v219, %v217
    %v255 = vpack.c.bf16 %v223, %v221
    %v256 = vpack.c.bf16 %v231, %v229
    %v257 = vpack.c.bf16 %v235, %v233
    %v258 = vpack.c.bf16 %v243, %v241
    %v259 = vpack.c.bf16 %v247, %v245
    %261 = vrot.lane.b32.xlu0 %v252, 96
    %v262 = vpop.permute.xlu0 %261
    %vm263 = vcmask 64512
    %v265 = vsel %vm263, %v252, 0
    %v268 = vsel %vm263, %v262, 0
    %270 = vmatprep.subr.bf16.mxu0 0
    %271 = vmatpush1.bf16.xpose.msra.mxu0 %v268
    %272 = vmatprep.subr.bf16.mxu0 0
    %273 = vmatpush1.bf16.xpose.msra.mxu0 0
    %274 = vmatprep.subr.bf16.mxu0 0
    %275 = vmatpush1.bf16.xpose.msra.mxu0 0
    %276 = vmatprep.subr.bf16.mxu0 0
    %277 = vmatpush1.bf16.xpose.msra.mxu0 0
    %278 = vmatprep.subr.bf16.mxu0 0
    %279 = vmatpush1.bf16.xpose.msra.mxu0 0
    %280 = vmatprep.subr.bf16.mxu0 0
    %281 = vmatpush1.bf16.xpose.msra.mxu0 0
    %282 = vmatprep.subr.bf16.mxu0 0
    %283 = vmatpush1.bf16.xpose.msra.mxu0 0
    %284 = vmatprep.subr.bf16.mxu0 0
    %285 = vmatpush1.bf16.xpose.msra.mxu0 0
    %286 = vmatprep.subr.bf16.mxu0 0
    %287 = vmatpush1.bf16.xpose.msra.mxu0 0
    %288 = vmatprep.subr.bf16.mxu0 0
    %289 = vmatpush1.bf16.xpose.msra.mxu0 0
    %290 = vmatprep.subr.bf16.mxu0 0
    %291 = vmatpush1.bf16.xpose.msra.mxu0 0
    %292 = vmatprep.subr.bf16.mxu0 0
    %293 = vmatpush1.bf16.xpose.msra.mxu0 0
    %294 = vmatprep.subr.bf16.mxu0 0
    %295 = vmatpush1.bf16.xpose.msra.mxu0 0
    %296 = vmatprep.subr.bf16.mxu0 0
    %297 = vmatpush1.bf16.xpose.msra.mxu0 0
    %298 = vmatprep.subr.bf16.mxu0 0
    %299 = vmatpush1.bf16.xpose.msra.mxu0 0
    %300 = vmatprep.subr.bf16.mxu0 0
    %301 = vmatpush1.bf16.xpose.msra.mxu0 0
    %302 = vmatprep.mubr.bf16.mxu0 0
    %303 = vmatmul.mubr.bf16.gmra.mrb[0].mxu0 %v265
    %v304 = vpop.f32.mrb[0].mxu0
    %v305 = vadd.f32 0.0, %v304
    %v306 = vpop.f32.mrb[0].mxu0
    %v307 = vpop.f32.mrb[0].mxu0
    %v308 = vadd.f32 0.0, %v307
    %v309 = vpop.f32.mrb[0].mxu0
    %310 = vdwg.mxu0
    %312 = vrot.lane.b32.xlu0 %v253, 96
    %v313 = vpop.permute.xlu0 %312
    %v315 = vsel %vm263, %v253, 0
    %v318 = vsel %vm263, %v313, 0
    %320 = vmatprep.subr.bf16.mxu0 0
    %321 = vmatpush1.bf16.xpose.msra.mxu0 %v318
    %322 = vmatprep.subr.bf16.mxu0 0
    %323 = vmatpush1.bf16.xpose.msra.mxu0 0
    %324 = vmatprep.subr.bf16.mxu0 0
    %325 = vmatpush1.bf16.xpose.msra.mxu0 0
    %326 = vmatprep.subr.bf16.mxu0 0
    %327 = vmatpush1.bf16.xpose.msra.mxu0 0
    %328 = vmatprep.subr.bf16.mxu0 0
    %329 = vmatpush1.bf16.xpose.msra.mxu0 0
    %330 = vmatprep.subr.bf16.mxu0 0
    %331 = vmatpush1.bf16.xpose.msra.mxu0 0
    %332 = vmatprep.subr.bf16.mxu0 0
    %333 = vmatpush1.bf16.xpose.msra.mxu0 0
    %334 = vmatprep.subr.bf16.mxu0 0
    %335 = vmatpush1.bf16.xpose.msra.mxu0 0
    %336 = vmatprep.subr.bf16.mxu0 0
    %337 = vmatpush1.bf16.xpose.msra.mxu0 0
    %338 = vmatprep.subr.bf16.mxu0 0
    %339 = vmatpush1.bf16.xpose.msra.mxu0 0
    %340 = vmatprep.subr.bf16.mxu0 0
    %341 = vmatpush1.bf16.xpose.msra.mxu0 0
    %342 = vmatprep.subr.bf16.mxu0 0
    %343 = vmatpush1.bf16.xpose.msra.mxu0 0
    %344 = vmatprep.subr.bf16.mxu0 0
    %345 = vmatpush1.bf16.xpose.msra.mxu0 0
    %346 = vmatprep.subr.bf16.mxu0 0
    %347 = vmatpush1.bf16.xpose.msra.mxu0 0
    %348 = vmatprep.subr.bf16.mxu0 0
    %349 = vmatpush1.bf16.xpose.msra.mxu0 0
    %350 = vmatprep.subr.bf16.mxu0 0
    %351 = vmatpush1.bf16.xpose.msra.mxu0 0
    %352 = vmatprep.mubr.bf16.mxu0 0
    %353 = vmatmul.mubr.bf16.gmra.mrb[0].mxu0 %v315
    %v354 = vpop.f32.mrb[0].mxu0
    %v355 = vadd.f32 0.0, %v354
    %v356 = vpop.f32.mrb[0].mxu0
    %v357 = vpop.f32.mrb[0].mxu0
    %v358 = vadd.f32 0.0, %v357
    %v359 = vpop.f32.mrb[0].mxu0
    %360 = vdwg.mxu0
    %362 = vrot.lane.b32.xlu0 %v254, 96
    %v363 = vpop.permute.xlu0 %362
    %v365 = vsel %vm263, %v254, 0
    %v368 = vsel %vm263, %v363, 0
    %370 = vmatprep.subr.bf16.mxu0 0
    %371 = vmatpush1.bf16.xpose.msra.mxu0 %v368
    %372 = vmatprep.subr.bf16.mxu0 0
    %373 = vmatpush1.bf16.xpose.msra.mxu0 0
    %374 = vmatprep.subr.bf16.mxu0 0
    %375 = vmatpush1.bf16.xpose.msra.mxu0 0
    %376 = vmatprep.subr.bf16.mxu0 0
    %377 = vmatpush1.bf16.xpose.msra.mxu0 0
    %378 = vmatprep.subr.bf16.mxu0 0
    %379 = vmatpush1.bf16.xpose.msra.mxu0 0
    %380 = vmatprep.subr.bf16.mxu0 0
    %381 = vmatpush1.bf16.xpose.msra.mxu0 0
    %382 = vmatprep.subr.bf16.mxu0 0
    %383 = vmatpush1.bf16.xpose.msra.mxu0 0
    %384 = vmatprep.subr.bf16.mxu0 0
    %385 = vmatpush1.bf16.xpose.msra.mxu0 0
    %386 = vmatprep.subr.bf16.mxu0 0
    %387 = vmatpush1.bf16.xpose.msra.mxu0 0
    %388 = vmatprep.subr.bf16.mxu0 0
    %389 = vmatpush1.bf16.xpose.msra.mxu0 0
    %390 = vmatprep.subr.bf16.mxu0 0
    %391 = vmatpush1.bf16.xpose.msra.mxu0 0
    %392 = vmatprep.subr.bf16.mxu0 0
    %393 = vmatpush1.bf16.xpose.msra.mxu0 0
    %394 = vmatprep.subr.bf16.mxu0 0
    %395 = vmatpush1.bf16.xpose.msra.mxu0 0
    %396 = vmatprep.subr.bf16.mxu0 0
    %397 = vmatpush1.bf16.xpose.msra.mxu0 0
    %398 = vmatprep.subr.bf16.mxu0 0
    %399 = vmatpush1.bf16.xpose.msra.mxu0 0
    %400 = vmatprep.subr.bf16.mxu0 0
    %401 = vmatpush1.bf16.xpose.msra.mxu0 0
    %402 = vmatprep.mubr.bf16.mxu0 0
    %403 = vmatmul.mubr.bf16.gmra.mrb[0].mxu0 %v365
    %v404 = vpop.f32.mrb[0].mxu0
    %v405 = vadd.f32 0.0, %v404
    %v406 = vpop.f32.mrb[0].mxu0
    %v407 = vpop.f32.mrb[0].mxu0
    %v408 = vadd.f32 0.0, %v407
    %v409 = vpop.f32.mrb[0].mxu0
    %410 = vdwg.mxu0
    %412 = vrot.lane.b32.xlu0 %v255, 96
    %v413 = vpop.permute.xlu0 %412
    %v415 = vsel %vm263, %v255, 0
    %v418 = vsel %vm263, %v413, 0
    %420 = vmatprep.subr.bf16.mxu0 0
    %421 = vmatpush1.bf16.xpose.msra.mxu0 %v418
    %422 = vmatprep.subr.bf16.mxu0 0
    %423 = vmatpush1.bf16.xpose.msra.mxu0 0
    %424 = vmatprep.subr.bf16.mxu0 0
    %425 = vmatpush1.bf16.xpose.msra.mxu0 0
    %426 = vmatprep.subr.bf16.mxu0 0
    %427 = vmatpush1.bf16.xpose.msra.mxu0 0
    %428 = vmatprep.subr.bf16.mxu0 0
    %429 = vmatpush1.bf16.xpose.msra.mxu0 0
    %430 = vmatprep.subr.bf16.mxu0 0
    %431 = vmatpush1.bf16.xpose.msra.mxu0 0
    %432 = vmatprep.subr.bf16.mxu0 0
    %433 = vmatpush1.bf16.xpose.msra.mxu0 0
    %434 = vmatprep.subr.bf16.mxu0 0
    %435 = vmatpush1.bf16.xpose.msra.mxu0 0
    %436 = vmatprep.subr.bf16.mxu0 0
    %437 = vmatpush1.bf16.xpose.msra.mxu0 0
    %438 = vmatprep.subr.bf16.mxu0 0
    %439 = vmatpush1.bf16.xpose.msra.mxu0 0
    %440 = vmatprep.subr.bf16.mxu0 0
    %441 = vmatpush1.bf16.xpose.msra.mxu0 0
    %442 = vmatprep.subr.bf16.mxu0 0
    %443 = vmatpush1.bf16.xpose.msra.mxu0 0
    %444 = vmatprep.subr.bf16.mxu0 0
    %445 = vmatpush1.bf16.xpose.msra.mxu0 0
    %446 = vmatprep.subr.bf16.mxu0 0
    %447 = vmatpush1.bf16.xpose.msra.mxu0 0
    %448 = vmatprep.subr.bf16.mxu0 0
    %449 = vmatpush1.bf16.xpose.msra.mxu0 0
    %450 = vmatprep.subr.bf16.mxu0 0
    %451 = vmatpush1.bf16.xpose.msra.mxu0 0
    %452 = vmatprep.mubr.bf16.mxu0 0
    %453 = vmatmul.mubr.bf16.gmra.mrb[0].mxu0 %v415
    %v454 = vpop.f32.mrb[0].mxu0
    %v455 = vadd.f32 0.0, %v454
    %v456 = vpop.f32.mrb[0].mxu0
    %v457 = vpop.f32.mrb[0].mxu0
    %v458 = vadd.f32 0.0, %v457
    %v459 = vpop.f32.mrb[0].mxu0
    %460 = vdwg.mxu0
    %462 = vrot.lane.b32.xlu0 %v256, 96
    %v463 = vpop.permute.xlu0 %462
    %v465 = vsel %vm263, %v256, 0
    %v468 = vsel %vm263, %v463, 0
    %470 = vmatprep.subr.bf16.mxu0 0
    %471 = vmatpush1.bf16.xpose.msra.mxu0 %v468
    %472 = vmatprep.subr.bf16.mxu0 0
    %473 = vmatpush1.bf16.xpose.msra.mxu0 0
    %474 = vmatprep.subr.bf16.mxu0 0
    %475 = vmatpush1.bf16.xpose.msra.mxu0 0
    %476 = vmatprep.subr.bf16.mxu0 0
    %477 = vmatpush1.bf16.xpose.msra.mxu0 0
    %478 = vmatprep.subr.bf16.mxu0 0
    %479 = vmatpush1.bf16.xpose.msra.mxu0 0
    %480 = vmatprep.subr.bf16.mxu0 0
    %481 = vmatpush1.bf16.xpose.msra.mxu0 0
    %482 = vmatprep.subr.bf16.mxu0 0
    %483 = vmatpush1.bf16.xpose.msra.mxu0 0
    %484 = vmatprep.subr.bf16.mxu0 0
    %485 = vmatpush1.bf16.xpose.msra.mxu0 0
    %486 = vmatprep.subr.bf16.mxu0 0
    %487 = vmatpush1.bf16.xpose.msra.mxu0 0
    %488 = vmatprep.subr.bf16.mxu0 0
    %489 = vmatpush1.bf16.xpose.msra.mxu0 0
    %490 = vmatprep.subr.bf16.mxu0 0
    %491 = vmatpush1.bf16.xpose.msra.mxu0 0
    %492 = vmatprep.subr.bf16.mxu0 0
    %493 = vmatpush1.bf16.xpose.msra.mxu0 0
    %494 = vmatprep.subr.bf16.mxu0 0
    %495 = vmatpush1.bf16.xpose.msra.mxu0 0
    %496 = vmatprep.subr.bf16.mxu0 0
    %497 = vmatpush1.bf16.xpose.msra.mxu0 0
    %498 = vmatprep.subr.bf16.mxu0 0
    %499 = vmatpush1.bf16.xpose.msra.mxu0 0
    %500 = vmatprep.subr.bf16.mxu0 0
    %501 = vmatpush1.bf16.xpose.msra.mxu0 0
    %502 = vmatprep.mubr.bf16.mxu0 0
    %503 = vmatmul.mubr.bf16.gmra.mrb[0].mxu0 %v465
    %v504 = vpop.f32.mrb[0].mxu0
    %v505 = vadd.f32 0.0, %v504
    %v506 = vpop.f32.mrb[0].mxu0
    %v507 = vpop.f32.mrb[0].mxu0
    %v508 = vadd.f32 0.0, %v507
    %v509 = vpop.f32.mrb[0].mxu0
    %510 = vdwg.mxu0
    %512 = vrot.lane.b32.xlu0 %v257, 96
    %v513 = vpop.permute.xlu0 %512
    %v515 = vsel %vm263, %v257, 0
    %v518 = vsel %vm263, %v513, 0
    %520 = vmatprep.subr.bf16.mxu0 0
    %521 = vmatpush1.bf16.xpose.msra.mxu0 %v518
    %522 = vmatprep.subr.bf16.mxu0 0
    %523 = vmatpush1.bf16.xpose.msra.mxu0 0
    %524 = vmatprep.subr.bf16.mxu0 0
    %525 = vmatpush1.bf16.xpose.msra.mxu0 0
    %526 = vmatprep.subr.bf16.mxu0 0
    %527 = vmatpush1.bf16.xpose.msra.mxu0 0
    %528 = vmatprep.subr.bf16.mxu0 0
    %529 = vmatpush1.bf16.xpose.msra.mxu0 0
    %530 = vmatprep.subr.bf16.mxu0 0
    %531 = vmatpush1.bf16.xpose.msra.mxu0 0
    %532 = vmatprep.subr.bf16.mxu0 0
    %533 = vmatpush1.bf16.xpose.msra.mxu0 0
    %534 = vmatprep.subr.bf16.mxu0 0
    %535 = vmatpush1.bf16.xpose.msra.mxu0 0
    %536 = vmatprep.subr.bf16.mxu0 0
    %537 = vmatpush1.bf16.xpose.msra.mxu0 0
    %538 = vmatprep.subr.bf16.mxu0 0
    %539 = vmatpush1.bf16.xpose.msra.mxu0 0
    %540 = vmatprep.subr.bf16.mxu0 0
    %541 = vmatpush1.bf16.xpose.msra.mxu0 0
    %542 = vmatprep.subr.bf16.mxu0 0
    %543 = vmatpush1.bf16.xpose.msra.mxu0 0
    %544 = vmatprep.subr.bf16.mxu0 0
    %545 = vmatpush1.bf16.xpose.msra.mxu0 0
    %546 = vmatprep.subr.bf16.mxu0 0
    %547 = vmatpush1.bf16.xpose.msra.mxu0 0
    %548 = vmatprep.subr.bf16.mxu0 0
    %549 = vmatpush1.bf16.xpose.msra.mxu0 0
    %550 = vmatprep.subr.bf16.mxu0 0
    %551 = vmatpush1.bf16.xpose.msra.mxu0 0
    %552 = vmatprep.mubr.bf16.mxu0 0
    %553 = vmatmul.mubr.bf16.gmra.mrb[0].mxu0 %v515
    %v554 = vpop.f32.mrb[0].mxu0
    %v555 = vadd.f32 0.0, %v554
    %v556 = vpop.f32.mrb[0].mxu0
    %v557 = vpop.f32.mrb[0].mxu0
    %v558 = vadd.f32 0.0, %v557
    %v559 = vpop.f32.mrb[0].mxu0
    %560 = vdwg.mxu0
    %562 = vrot.lane.b32.xlu0 %v258, 96
    %v563 = vpop.permute.xlu0 %562
    %v565 = vsel %vm263, %v258, 0
    %v568 = vsel %vm263, %v563, 0
    %570 = vmatprep.subr.bf16.mxu0 0
    %571 = vmatpush1.bf16.xpose.msra.mxu0 %v568
    %572 = vmatprep.subr.bf16.mxu0 0
    %573 = vmatpush1.bf16.xpose.msra.mxu0 0
    %574 = vmatprep.subr.bf16.mxu0 0
    %575 = vmatpush1.bf16.xpose.msra.mxu0 0
    %576 = vmatprep.subr.bf16.mxu0 0
    %577 = vmatpush1.bf16.xpose.msra.mxu0 0
    %578 = vmatprep.subr.bf16.mxu0 0
    %579 = vmatpush1.bf16.xpose.msra.mxu0 0
    %580 = vmatprep.subr.bf16.mxu0 0
    %581 = vmatpush1.bf16.xpose.msra.mxu0 0
    %582 = vmatprep.subr.bf16.mxu0 0
    %583 = vmatpush1.bf16.xpose.msra.mxu0 0
    %584 = vmatprep.subr.bf16.mxu0 0
    %585 = vmatpush1.bf16.xpose.msra.mxu0 0
    %586 = vmatprep.subr.bf16.mxu0 0
    %587 = vmatpush1.bf16.xpose.msra.mxu0 0
    %588 = vmatprep.subr.bf16.mxu0 0
    %589 = vmatpush1.bf16.xpose.msra.mxu0 0
    %590 = vmatprep.subr.bf16.mxu0 0
    %591 = vmatpush1.bf16.xpose.msra.mxu0 0
    %592 = vmatprep.subr.bf16.mxu0 0
    %593 = vmatpush1.bf16.xpose.msra.mxu0 0
    %594 = vmatprep.subr.bf16.mxu0 0
    %595 = vmatpush1.bf16.xpose.msra.mxu0 0
    %596 = vmatprep.subr.bf16.mxu0 0
    %597 = vmatpush1.bf16.xpose.msra.mxu0 0
    %598 = vmatprep.subr.bf16.mxu0 0
    %599 = vmatpush1.bf16.xpose.msra.mxu0 0
    %600 = vmatprep.subr.bf16.mxu0 0
    %601 = vmatpush1.bf16.xpose.msra.mxu0 0
    %602 = vmatprep.mubr.bf16.mxu0 0
    %603 = vmatmul.mubr.bf16.gmra.mrb[0].mxu0 %v565
    %v604 = vpop.f32.mrb[0].mxu0
    %v605 = vadd.f32 0.0, %v604
    %v606 = vpop.f32.mrb[0].mxu0
    %v607 = vpop.f32.mrb[0].mxu0
    %v608 = vadd.f32 0.0, %v607
    %v609 = vpop.f32.mrb[0].mxu0
    %610 = vdwg.mxu0
    %612 = vrot.lane.b32.xlu0 %v259, 96
    %v613 = vpop.permute.xlu0 %612
    %v615 = vsel %vm263, %v259, 0
    %v618 = vsel %vm263, %v613, 0
    %620 = vmatprep.subr.bf16.mxu0 0
    %621 = vmatpush1.bf16.xpose.msra.mxu0 %v618
    %622 = vmatprep.subr.bf16.mxu0 0
    %623 = vmatpush1.bf16.xpose.msra.mxu0 0
    %624 = vmatprep.subr.bf16.mxu0 0
    %625 = vmatpush1.bf16.xpose.msra.mxu0 0
    %626 = vmatprep.subr.bf16.mxu0 0
    %627 = vmatpush1.bf16.xpose.msra.mxu0 0
    %628 = vmatprep.subr.bf16.mxu0 0
    %629 = vmatpush1.bf16.xpose.msra.mxu0 0
    %630 = vmatprep.subr.bf16.mxu0 0
    %631 = vmatpush1.bf16.xpose.msra.mxu0 0
    %632 = vmatprep.subr.bf16.mxu0 0
    %633 = vmatpush1.bf16.xpose.msra.mxu0 0
    %634 = vmatprep.subr.bf16.mxu0 0
    %635 = vmatpush1.bf16.xpose.msra.mxu0 0
    %636 = vmatprep.subr.bf16.mxu0 0
    %637 = vmatpush1.bf16.xpose.msra.mxu0 0
    %638 = vmatprep.subr.bf16.mxu0 0
    %639 = vmatpush1.bf16.xpose.msra.mxu0 0
    %640 = vmatprep.subr.bf16.mxu0 0
    %641 = vmatpush1.bf16.xpose.msra.mxu0 0
    %642 = vmatprep.subr.bf16.mxu0 0
    %643 = vmatpush1.bf16.xpose.msra.mxu0 0
    %644 = vmatprep.subr.bf16.mxu0 0
    %645 = vmatpush1.bf16.xpose.msra.mxu0 0
    %646 = vmatprep.subr.bf16.mxu0 0
    %647 = vmatpush1.bf16.xpose.msra.mxu0 0
    %648 = vmatprep.subr.bf16.mxu0 0
    %649 = vmatpush1.bf16.xpose.msra.mxu0 0
    %650 = vmatprep.subr.bf16.mxu0 0
    %651 = vmatpush1.bf16.xpose.msra.mxu0 0
    %652 = vmatprep.mubr.bf16.mxu0 0
    %653 = vmatmul.mubr.bf16.gmra.mrb[0].mxu0 %v615
    %v654 = vpop.f32.mrb[0].mxu0
    %v655 = vadd.f32 0.0, %v654
    %v656 = vpop.f32.mrb[0].mxu0
    %v657 = vpop.f32.mrb[0].mxu0
    %v658 = vadd.f32 0.0, %v657
    %v659 = vpop.f32.mrb[0].mxu0
    %660 = vdwg.mxu0
    %v661 = vmul.f32 %v305, 0.35355338
    %v662 = vmul.f32 %v308, 0.35355338
    %v663 = vmul.f32 %v355, 0.35355338
    %v664 = vmul.f32 %v358, 0.35355338
    %v665 = vmul.f32 %v405, 0.35355338
    %v666 = vmul.f32 %v408, 0.35355338
    %v667 = vmul.f32 %v455, 0.35355338
    %v668 = vmul.f32 %v458, 0.35355338
    %v669 = vmul.f32 %v505, 0.35355338
    %v670 = vmul.f32 %v508, 0.35355338
    %v671 = vmul.f32 %v555, 0.35355338
    %v672 = vmul.f32 %v558, 0.35355338
    %v673 = vmul.f32 %v605, 0.35355338
    %v674 = vmul.f32 %v608, 0.35355338
    %v675 = vmul.f32 %v655, 0.35355338
    %v676 = vmul.f32 %v658, 0.35355338
    %v677 = vsel %vm130, 1, 0
    %vm678 = vcmp.eq.s32.totalorder %v677, 1
    %v679 = vsel %vm678, %v661, -1e+30
    %v680 = vsel %vm678, %v662, -1e+30
    %v681 = vsel %vm678, %v663, -1e+30
    %v682 = vsel %vm678, %v664, -1e+30
    %v683 = vsel %vm678, %v665, -1e+30
    %v684 = vsel %vm678, %v666, -1e+30
    %v685 = vsel %vm678, %v667, -1e+30
    %v686 = vsel %vm678, %v668, -1e+30
    %v687 = vsel %vm678, %v669, -1e+30
    %v688 = vsel %vm678, %v670, -1e+30
    %v689 = vsel %vm678, %v671, -1e+30
    %v690 = vsel %vm678, %v672, -1e+30
    %v691 = vsel %vm678, %v673, -1e+30
    %v692 = vsel %vm678, %v674, -1e+30
    %v693 = vsel %vm678, %v675, -1e+30
    %v694 = vsel %vm678, %v676, -1e+30
    %vm695 = vcmask 130048
    %v696 = vsel %vm695, %v679, -inf
    %697 = vmax.xlane.f32.xlu0 %v696
    %v698 = vpop.xlane.xlu0 %697
    %v699 = vsel %vm695, %v680, -inf
    %700 = vmax.xlane.f32.xlu0 %v699
    %v701 = vpop.xlane.xlu0 %700
    %v702 = vsel %vm695, %v681, -inf
    %703 = vmax.xlane.f32.xlu0 %v702
    %v704 = vpop.xlane.xlu0 %703
    %v705 = vsel %vm695, %v682, -inf
    %706 = vmax.xlane.f32.xlu0 %v705
    %v707 = vpop.xlane.xlu0 %706
    %v708 = vsel %vm695, %v683, -inf
    %709 = vmax.xlane.f32.xlu0 %v708
    %v710 = vpop.xlane.xlu0 %709
    %v711 = vsel %vm695, %v684, -inf
    %712 = vmax.xlane.f32.xlu0 %v711
    %v713 = vpop.xlane.xlu0 %712
    %v714 = vsel %vm695, %v685, -inf
    %715 = vmax.xlane.f32.xlu0 %v714
    %v716 = vpop.xlane.xlu0 %715
    %v717 = vsel %vm695, %v686, -inf
    %718 = vmax.xlane.f32.xlu0 %v717
    %v719 = vpop.xlane.xlu0 %718
    %v720 = vsel %vm695, %v687, -inf
    %721 = vmax.xlane.f32.xlu0 %v720
    %v722 = vpop.xlane.xlu0 %721
    %v723 = vsel %vm695, %v688, -inf
    %724 = vmax.xlane.f32.xlu0 %v723
    %v725 = vpop.xlane.xlu0 %724
    %v726 = vsel %vm695, %v689, -inf
    %727 = vmax.xlane.f32.xlu0 %v726
    %v728 = vpop.xlane.xlu0 %727
    %v729 = vsel %vm695, %v690, -inf
    %730 = vmax.xlane.f32.xlu0 %v729
    %v731 = vpop.xlane.xlu0 %730
    %v732 = vsel %vm695, %v691, -inf
    %733 = vmax.xlane.f32.xlu0 %v732
    %v734 = vpop.xlane.xlu0 %733
    %v735 = vsel %vm695, %v692, -inf
    %736 = vmax.xlane.f32.xlu0 %v735
    %v737 = vpop.xlane.xlu0 %736
    %v738 = vsel %vm695, %v693, -inf
    %739 = vmax.xlane.f32.xlu0 %v738
    %v740 = vpop.xlane.xlu0 %739
    %v741 = vsel %vm695, %v694, -inf
    %742 = vmax.xlane.f32.xlu0 %v741
    %v743 = vpop.xlane.xlu0 %742
    %v744 = vsub.f32 %v679, %v698
    %v745 = vsub.f32 %v680, %v701
    %v746 = vsub.f32 %v681, %v704
    %v747 = vsub.f32 %v682, %v707
    %v748 = vsub.f32 %v683, %v710
    %v749 = vsub.f32 %v684, %v713
    %v750 = vsub.f32 %v685, %v716
    %v751 = vsub.f32 %v686, %v719
    %v752 = vsub.f32 %v687, %v722
    %v753 = vsub.f32 %v688, %v725
    %v754 = vsub.f32 %v689, %v728
    %v755 = vsub.f32 %v690, %v731
    %v756 = vsub.f32 %v691, %v734
    %v757 = vsub.f32 %v692, %v737
    %v758 = vsub.f32 %v693, %v740
    %v759 = vsub.f32 %v694, %v743
    %v760 = vmul.f32 %v744, 1.442695
    %v761 = vpow.pop %v760
    %v762 = vmul.f32 %v745, 1.442695
    %v763 = vpow.pop %v762
    %v764 = vmul.f32 %v746, 1.442695
    %v765 = vpow.pop %v764
    %v766 = vmul.f32 %v747, 1.442695
    %v767 = vpow.pop %v766
    %v768 = vmul.f32 %v748, 1.442695
    %v769 = vpow.pop %v768
    %v770 = vmul.f32 %v749, 1.442695
    %v771 = vpow.pop %v770
    %v772 = vmul.f32 %v750, 1.442695
    %v773 = vpow.pop %v772
    %v774 = vmul.f32 %v751, 1.442695
    %v775 = vpow.pop %v774
    %v776 = vmul.f32 %v752, 1.442695
    %v777 = vpow.pop %v776
    %v778 = vmul.f32 %v753, 1.442695
    %v779 = vpow.pop %v778
    %v780 = vmul.f32 %v754, 1.442695
    %v781 = vpow.pop %v780
    %v782 = vmul.f32 %v755, 1.442695
    %v783 = vpow.pop %v782
    %v784 = vmul.f32 %v756, 1.442695
    %v785 = vpow.pop %v784
    %v786 = vmul.f32 %v757, 1.442695
    %v787 = vpow.pop %v786
    %v788 = vmul.f32 %v758, 1.442695
    %v789 = vpow.pop %v788
    %v790 = vmul.f32 %v759, 1.442695
    %v791 = vpow.pop %v790
    %v792 = vsel %vm695, %v761, 0.0
    %793 = vadd.xlane.f32.xlu0 %v792
    %v794 = vpop.xlane.xlu0 %793
    %v795 = vsel %vm695, %v763, 0.0
    %796 = vadd.xlane.f32.xlu0 %v795
    %v797 = vpop.xlane.xlu0 %796
    %v798 = vsel %vm695, %v765, 0.0
    %799 = vadd.xlane.f32.xlu0 %v798
    %v800 = vpop.xlane.xlu0 %799
    %v801 = vsel %vm695, %v767, 0.0
    %802 = vadd.xlane.f32.xlu0 %v801
    %v803 = vpop.xlane.xlu0 %802
    %v804 = vsel %vm695, %v769, 0.0
    %805 = vadd.xlane.f32.xlu0 %v804
    %v806 = vpop.xlane.xlu0 %805
    %v807 = vsel %vm695, %v771, 0.0
    %808 = vadd.xlane.f32.xlu0 %v807
    %v809 = vpop.xlane.xlu0 %808
    %v810 = vsel %vm695, %v773, 0.0
    %811 = vadd.xlane.f32.xlu0 %v810
    %v812 = vpop.xlane.xlu0 %811
    %v813 = vsel %vm695, %v775, 0.0
    %814 = vadd.xlane.f32.xlu0 %v813
    %v815 = vpop.xlane.xlu0 %814
    %v816 = vsel %vm695, %v777, 0.0
    %817 = vadd.xlane.f32.xlu0 %v816
    %v818 = vpop.xlane.xlu0 %817
    %v819 = vsel %vm695, %v779, 0.0
    %820 = vadd.xlane.f32.xlu0 %v819
    %v821 = vpop.xlane.xlu0 %820
    %v822 = vsel %vm695, %v781, 0.0
    %823 = vadd.xlane.f32.xlu0 %v822
    %v824 = vpop.xlane.xlu0 %823
    %v825 = vsel %vm695, %v783, 0.0
    %826 = vadd.xlane.f32.xlu0 %v825
    %v827 = vpop.xlane.xlu0 %826
    %v828 = vsel %vm695, %v785, 0.0
    %829 = vadd.xlane.f32.xlu0 %v828
    %v830 = vpop.xlane.xlu0 %829
    %v831 = vsel %vm695, %v787, 0.0
    %832 = vadd.xlane.f32.xlu0 %v831
    %v833 = vpop.xlane.xlu0 %832
    %v834 = vsel %vm695, %v789, 0.0
    %835 = vadd.xlane.f32.xlu0 %v834
    %v836 = vpop.xlane.xlu0 %835
    %v837 = vsel %vm695, %v791, 0.0
    %838 = vadd.xlane.f32.xlu0 %v837
    %v839 = vpop.xlane.xlu0 %838
    %v840 = vrcp.pop %v794
    %v841 = vmul.f32 %v761, %v840
    %v842 = vrcp.pop %v797
    %v843 = vmul.f32 %v763, %v842
    %v844 = vrcp.pop %v800
    %v845 = vmul.f32 %v765, %v844
    %v846 = vrcp.pop %v803
    %v847 = vmul.f32 %v767, %v846
    %v848 = vrcp.pop %v806
    %v849 = vmul.f32 %v769, %v848
    %v850 = vrcp.pop %v809
    %v851 = vmul.f32 %v771, %v850
    %v852 = vrcp.pop %v812
    %v853 = vmul.f32 %v773, %v852
    %v854 = vrcp.pop %v815
    %v855 = vmul.f32 %v775, %v854
    %v856 = vrcp.pop %v818
    %v857 = vmul.f32 %v777, %v856
    %v858 = vrcp.pop %v821
    %v859 = vmul.f32 %v779, %v858
    %v860 = vrcp.pop %v824
    %v861 = vmul.f32 %v781, %v860
    %v862 = vrcp.pop %v827
    %v863 = vmul.f32 %v783, %v862
    %v864 = vrcp.pop %v830
    %v865 = vmul.f32 %v785, %v864
    %v866 = vrcp.pop %v833
    %v867 = vmul.f32 %v787, %v866
    %v868 = vrcp.pop %v836
    %v869 = vmul.f32 %v789, %v868
    %v870 = vrcp.pop %v839
    %v871 = vmul.f32 %v791, %v870
    %v872 = vpack.c.bf16 %v843, %v841
    %v873 = vpack.c.bf16 %v847, %v845
    %v874 = vpack.c.bf16 %v851, %v849
    %v875 = vpack.c.bf16 %v855, %v853
    %v876 = vpack.c.bf16 %v859, %v857
    %v877 = vpack.c.bf16 %v863, %v861
    %v878 = vpack.c.bf16 %v867, %v865
    %v879 = vpack.c.bf16 %v871, %v869
    %880 = vrot.lane.b32.xlu0 %v252, 64
    %v881 = vpop.permute.xlu0 %880
    %v884 = vsel %vm695, %v872, 0
    %886 = vmatprep.subr.bf16.mxu0 0
    %887 = vmatpush1.bf16.msra.mxu0 %v881
    %888 = vmatprep.subr.bf16.mxu0 0
    %889 = vmatpush1.bf16.msra.mxu0 0
    %890 = vmatprep.subr.bf16.mxu0 0
    %891 = vmatpush1.bf16.msra.mxu0 0
    %892 = vmatprep.subr.bf16.mxu0 0
    %893 = vmatpush1.bf16.msra.mxu0 0
    %894 = vmatprep.subr.bf16.mxu0 0
    %895 = vmatpush1.bf16.msra.mxu0 0
    %896 = vmatprep.subr.bf16.mxu0 0
    %897 = vmatpush1.bf16.msra.mxu0 0
    %898 = vmatprep.subr.bf16.mxu0 0
    %899 = vmatpush1.bf16.msra.mxu0 0
    %900 = vmatprep.subr.bf16.mxu0 0
    %901 = vmatpush1.bf16.msra.mxu0 0
    %902 = vmatprep.subr.bf16.mxu0 0
    %903 = vmatpush1.bf16.msra.mxu0 0
    %904 = vmatprep.subr.bf16.mxu0 0
    %905 = vmatpush1.bf16.msra.mxu0 0
    %906 = vmatprep.subr.bf16.mxu0 0
    %907 = vmatpush1.bf16.msra.mxu0 0
    %908 = vmatprep.subr.bf16.mxu0 0
    %909 = vmatpush1.bf16.msra.mxu0 0
    %910 = vmatprep.subr.bf16.mxu0 0
    %911 = vmatpush1.bf16.msra.mxu0 0
    %912 = vmatprep.subr.bf16.mxu0 0
    %913 = vmatpush1.bf16.msra.mxu0 0
    %914 = vmatprep.subr.bf16.mxu0 0
    %915 = vmatpush1.bf16.msra.mxu0 0
    %916 = vmatprep.subr.bf16.mxu0 0
    %917 = vmatpush1.bf16.msra.mxu0 0
    %918 = vmatprep.mubr.bf16.mxu0 0
    %919 = vmatmul.mubr.bf16.gmra.mrb[0].mxu0 %v884
    %v920 = vpop.f32.mrb[0].mxu0
    %v921 = vadd.f32 0.0, %v920
    %v922 = vpop.f32.mrb[0].mxu0
    %v923 = vpop.f32.mrb[0].mxu0
    %v924 = vadd.f32 0.0, %v923
    %v925 = vpop.f32.mrb[0].mxu0
    %926 = vdwg.mxu0
    %927 = vrot.lane.b32.xlu0 %v253, 64
    %v928 = vpop.permute.xlu0 %927
    %v931 = vsel %vm695, %v873, 0
    %933 = vmatprep.subr.bf16.mxu0 0
    %934 = vmatpush1.bf16.msra.mxu0 %v928
    %935 = vmatprep.subr.bf16.mxu0 0
    %936 = vmatpush1.bf16.msra.mxu0 0
    %937 = vmatprep.subr.bf16.mxu0 0
    %938 = vmatpush1.bf16.msra.mxu0 0
    %939 = vmatprep.subr.bf16.mxu0 0
    %940 = vmatpush1.bf16.msra.mxu0 0
    %941 = vmatprep.subr.bf16.mxu0 0
    %942 = vmatpush1.bf16.msra.mxu0 0
    %943 = vmatprep.subr.bf16.mxu0 0
    %944 = vmatpush1.bf16.msra.mxu0 0
    %945 = vmatprep.subr.bf16.mxu0 0
    %946 = vmatpush1.bf16.msra.mxu0 0
    %947 = vmatprep.subr.bf16.mxu0 0
    %948 = vmatpush1.bf16.msra.mxu0 0
    %949 = vmatprep.subr.bf16.mxu0 0
    %950 = vmatpush1.bf16.msra.mxu0 0
    %951 = vmatprep.subr.bf16.mxu0 0
    %952 = vmatpush1.bf16.msra.mxu0 0
    %953 = vmatprep.subr.bf16.mxu0 0
    %954 = vmatpush1.bf16.msra.mxu0 0
    %955 = vmatprep.subr.bf16.mxu0 0
    %956 = vmatpush1.bf16.msra.mxu0 0
    %957 = vmatprep.subr.bf16.mxu0 0
    %958 = vmatpush1.bf16.msra.mxu0 0
    %959 = vmatprep.subr.bf16.mxu0 0
    %960 = vmatpush1.bf16.msra.mxu0 0
    %961 = vmatprep.subr.bf16.mxu0 0
    %962 = vmatpush1.bf16.msra.mxu0 0
    %963 = vmatprep.subr.bf16.mxu0 0
    %964 = vmatpush1.bf16.msra.mxu0 0
    %965 = vmatprep.mubr.bf16.mxu0 0
    %966 = vmatmul.mubr.bf16.gmra.mrb[0].mxu0 %v931
    %v967 = vpop.f32.mrb[0].mxu0
    %v968 = vadd.f32 0.0, %v967
    %v969 = vpop.f32.mrb[0].mxu0
    %v970 = vpop.f32.mrb[0].mxu0
    %v971 = vadd.f32 0.0, %v970
    %v972 = vpop.f32.mrb[0].mxu0
    %973 = vdwg.mxu0
    %974 = vrot.lane.b32.xlu0 %v254, 64
    %v975 = vpop.permute.xlu0 %974
    %v978 = vsel %vm695, %v874, 0
    %980 = vmatprep.subr.bf16.mxu0 0
    %981 = vmatpush1.bf16.msra.mxu0 %v975
    %982 = vmatprep.subr.bf16.mxu0 0
    %983 = vmatpush1.bf16.msra.mxu0 0
    %984 = vmatprep.subr.bf16.mxu0 0
    %985 = vmatpush1.bf16.msra.mxu0 0
    %986 = vmatprep.subr.bf16.mxu0 0
    %987 = vmatpush1.bf16.msra.mxu0 0
    %988 = vmatprep.subr.bf16.mxu0 0
    %989 = vmatpush1.bf16.msra.mxu0 0
    %990 = vmatprep.subr.bf16.mxu0 0
    %991 = vmatpush1.bf16.msra.mxu0 0
    %992 = vmatprep.subr.bf16.mxu0 0
    %993 = vmatpush1.bf16.msra.mxu0 0
    %994 = vmatprep.subr.bf16.mxu0 0
    %995 = vmatpush1.bf16.msra.mxu0 0
    %996 = vmatprep.subr.bf16.mxu0 0
    %997 = vmatpush1.bf16.msra.mxu0 0
    %998 = vmatprep.subr.bf16.mxu0 0
    %999 = vmatpush1.bf16.msra.mxu0 0
    %1000 = vmatprep.subr.bf16.mxu0 0
    %1001 = vmatpush1.bf16.msra.mxu0 0
    %1002 = vmatprep.subr.bf16.mxu0 0
    %1003 = vmatpush1.bf16.msra.mxu0 0
    %1004 = vmatprep.subr.bf16.mxu0 0
    %1005 = vmatpush1.bf16.msra.mxu0 0
    %1006 = vmatprep.subr.bf16.mxu0 0
    %1007 = vmatpush1.bf16.msra.mxu0 0
    %1008 = vmatprep.subr.bf16.mxu0 0
    %1009 = vmatpush1.bf16.msra.mxu0 0
    %1010 = vmatprep.subr.bf16.mxu0 0
    %1011 = vmatpush1.bf16.msra.mxu0 0
    %1012 = vmatprep.mubr.bf16.mxu0 0
    %1013 = vmatmul.mubr.bf16.gmra.mrb[0].mxu0 %v978
    %v1014 = vpop.f32.mrb[0].mxu0
    %v1015 = vadd.f32 0.0, %v1014
    %v1016 = vpop.f32.mrb[0].mxu0
    %v1017 = vpop.f32.mrb[0].mxu0
    %v1018 = vadd.f32 0.0, %v1017
    %v1019 = vpop.f32.mrb[0].mxu0
    %1020 = vdwg.mxu0
    %1021 = vrot.lane.b32.xlu0 %v255, 64
    %v1022 = vpop.permute.xlu0 %1021
    %v1025 = vsel %vm695, %v875, 0
    %1027 = vmatprep.subr.bf16.mxu0 0
    %1028 = vmatpush1.bf16.msra.mxu0 %v1022
    %1029 = vmatprep.subr.bf16.mxu0 0
    %1030 = vmatpush1.bf16.msra.mxu0 0
    %1031 = vmatprep.subr.bf16.mxu0 0
    %1032 = vmatpush1.bf16.msra.mxu0 0
    %1033 = vmatprep.subr.bf16.mxu0 0
    %1034 = vmatpush1.bf16.msra.mxu0 0
    %1035 = vmatprep.subr.bf16.mxu0 0
    %1036 = vmatpush1.bf16.msra.mxu0 0
    %1037 = vmatprep.subr.bf16.mxu0 0
    %1038 = vmatpush1.bf16.msra.mxu0 0
    %1039 = vmatprep.subr.bf16.mxu0 0
    %1040 = vmatpush1.bf16.msra.mxu0 0
    %1041 = vmatprep.subr.bf16.mxu0 0
    %1042 = vmatpush1.bf16.msra.mxu0 0
    %1043 = vmatprep.subr.bf16.mxu0 0
    %1044 = vmatpush1.bf16.msra.mxu0 0
    %1045 = vmatprep.subr.bf16.mxu0 0
    %1046 = vmatpush1.bf16.msra.mxu0 0
    %1047 = vmatprep.subr.bf16.mxu0 0
    %1048 = vmatpush1.bf16.msra.mxu0 0
    %1049 = vmatprep.subr.bf16.mxu0 0
    %1050 = vmatpush1.bf16.msra.mxu0 0
    %1051 = vmatprep.subr.bf16.mxu0 0
    %1052 = vmatpush1.bf16.msra.mxu0 0
    %1053 = vmatprep.subr.bf16.mxu0 0
    %1054 = vmatpush1.bf16.msra.mxu0 0
    %1055 = vmatprep.subr.bf16.mxu0 0
    %1056 = vmatpush1.bf16.msra.mxu0 0
    %1057 = vmatprep.subr.bf16.mxu0 0
    %1058 = vmatpush1.bf16.msra.mxu0 0
    %1059 = vmatprep.mubr.bf16.mxu0 0
    %1060 = vmatmul.mubr.bf16.gmra.mrb[0].mxu0 %v1025
    %v1061 = vpop.f32.mrb[0].mxu0
    %v1062 = vadd.f32 0.0, %v1061
    %v1063 = vpop.f32.mrb[0].mxu0
    %v1064 = vpop.f32.mrb[0].mxu0
    %v1065 = vadd.f32 0.0, %v1064
    %v1066 = vpop.f32.mrb[0].mxu0
    %1067 = vdwg.mxu0
    %1068 = vrot.lane.b32.xlu0 %v256, 64
    %v1069 = vpop.permute.xlu0 %1068
    %v1072 = vsel %vm695, %v876, 0
    %1074 = vmatprep.subr.bf16.mxu0 0
    %1075 = vmatpush1.bf16.msra.mxu0 %v1069
    %1076 = vmatprep.subr.bf16.mxu0 0
    %1077 = vmatpush1.bf16.msra.mxu0 0
    %1078 = vmatprep.subr.bf16.mxu0 0
    %1079 = vmatpush1.bf16.msra.mxu0 0
    %1080 = vmatprep.subr.bf16.mxu0 0
    %1081 = vmatpush1.bf16.msra.mxu0 0
    %1082 = vmatprep.subr.bf16.mxu0 0
    %1083 = vmatpush1.bf16.msra.mxu0 0
    %1084 = vmatprep.subr.bf16.mxu0 0
    %1085 = vmatpush1.bf16.msra.mxu0 0
    %1086 = vmatprep.subr.bf16.mxu0 0
    %1087 = vmatpush1.bf16.msra.mxu0 0
    %1088 = vmatprep.subr.bf16.mxu0 0
    %1089 = vmatpush1.bf16.msra.mxu0 0
    %1090 = vmatprep.subr.bf16.mxu0 0
    %1091 = vmatpush1.bf16.msra.mxu0 0
    %1092 = vmatprep.subr.bf16.mxu0 0
    %1093 = vmatpush1.bf16.msra.mxu0 0
    %1094 = vmatprep.subr.bf16.mxu0 0
    %1095 = vmatpush1.bf16.msra.mxu0 0
    %1096 = vmatprep.subr.bf16.mxu0 0
    %1097 = vmatpush1.bf16.msra.mxu0 0
    %1098 = vmatprep.subr.bf16.mxu0 0
    %1099 = vmatpush1.bf16.msra.mxu0 0
    %1100 = vmatprep.subr.bf16.mxu0 0
    %1101 = vmatpush1.bf16.msra.mxu0 0
    %1102 = vmatprep.subr.bf16.mxu0 0
    %1103 = vmatpush1.bf16.msra.mxu0 0
    %1104 = vmatprep.subr.bf16.mxu0 0
    %1105 = vmatpush1.bf16.msra.mxu0 0
    %1106 = vmatprep.mubr.bf16.mxu0 0
    %1107 = vmatmul.mubr.bf16.gmra.mrb[0].mxu0 %v1072
    %v1108 = vpop.f32.mrb[0].mxu0
    %v1109 = vadd.f32 0.0, %v1108
    %v1110 = vpop.f32.mrb[0].mxu0
    %v1111 = vpop.f32.mrb[0].mxu0
    %v1112 = vadd.f32 0.0, %v1111
    %v1113 = vpop.f32.mrb[0].mxu0
    %1114 = vdwg.mxu0
    %1115 = vrot.lane.b32.xlu0 %v257, 64
    %v1116 = vpop.permute.xlu0 %1115
    %v1119 = vsel %vm695, %v877, 0
    %1121 = vmatprep.subr.bf16.mxu0 0
    %1122 = vmatpush1.bf16.msra.mxu0 %v1116
    %1123 = vmatprep.subr.bf16.mxu0 0
    %1124 = vmatpush1.bf16.msra.mxu0 0
    %1125 = vmatprep.subr.bf16.mxu0 0
    %1126 = vmatpush1.bf16.msra.mxu0 0
    %1127 = vmatprep.subr.bf16.mxu0 0
    %1128 = vmatpush1.bf16.msra.mxu0 0
    %1129 = vmatprep.subr.bf16.mxu0 0
    %1130 = vmatpush1.bf16.msra.mxu0 0
    %1131 = vmatprep.subr.bf16.mxu0 0
    %1132 = vmatpush1.bf16.msra.mxu0 0
    %1133 = vmatprep.subr.bf16.mxu0 0
    %1134 = vmatpush1.bf16.msra.mxu0 0
    %1135 = vmatprep.subr.bf16.mxu0 0
    %1136 = vmatpush1.bf16.msra.mxu0 0
    %1137 = vmatprep.subr.bf16.mxu0 0
    %1138 = vmatpush1.bf16.msra.mxu0 0
    %1139 = vmatprep.subr.bf16.mxu0 0
    %1140 = vmatpush1.bf16.msra.mxu0 0
    %1141 = vmatprep.subr.bf16.mxu0 0
    %1142 = vmatpush1.bf16.msra.mxu0 0
    %1143 = vmatprep.subr.bf16.mxu0 0
    %1144 = vmatpush1.bf16.msra.mxu0 0
    %1145 = vmatprep.subr.bf16.mxu0 0
    %1146 = vmatpush1.bf16.msra.mxu0 0
    %1147 = vmatprep.subr.bf16.mxu0 0
    %1148 = vmatpush1.bf16.msra.mxu0 0
    %1149 = vmatprep.subr.bf16.mxu0 0
    %1150 = vmatpush1.bf16.msra.mxu0 0
    %1151 = vmatprep.subr.bf16.mxu0 0
    %1152 = vmatpush1.bf16.msra.mxu0 0
    %1153 = vmatprep.mubr.bf16.mxu0 0
    %1154 = vmatmul.mubr.bf16.gmra.mrb[0].mxu0 %v1119
    %v1155 = vpop.f32.mrb[0].mxu0
    %v1156 = vadd.f32 0.0, %v1155
    %v1157 = vpop.f32.mrb[0].mxu0
    %v1158 = vpop.f32.mrb[0].mxu0
    %v1159 = vadd.f32 0.0, %v1158
    %v1160 = vpop.f32.mrb[0].mxu0
    %1161 = vdwg.mxu0
    %1162 = vrot.lane.b32.xlu0 %v258, 64
    %v1163 = vpop.permute.xlu0 %1162
    %v1166 = vsel %vm695, %v878, 0
    %1168 = vmatprep.subr.bf16.mxu0 0
    %1169 = vmatpush1.bf16.msra.mxu0 %v1163
    %1170 = vmatprep.subr.bf16.mxu0 0
    %1171 = vmatpush1.bf16.msra.mxu0 0
    %1172 = vmatprep.subr.bf16.mxu0 0
    %1173 = vmatpush1.bf16.msra.mxu0 0
    %1174 = vmatprep.subr.bf16.mxu0 0
    %1175 = vmatpush1.bf16.msra.mxu0 0
    %1176 = vmatprep.subr.bf16.mxu0 0
    %1177 = vmatpush1.bf16.msra.mxu0 0
    %1178 = vmatprep.subr.bf16.mxu0 0
    %1179 = vmatpush1.bf16.msra.mxu0 0
    %1180 = vmatprep.subr.bf16.mxu0 0
    %1181 = vmatpush1.bf16.msra.mxu0 0
    %1182 = vmatprep.subr.bf16.mxu0 0
    %1183 = vmatpush1.bf16.msra.mxu0 0
    %1184 = vmatprep.subr.bf16.mxu0 0
    %1185 = vmatpush1.bf16.msra.mxu0 0
    %1186 = vmatprep.subr.bf16.mxu0 0
    %1187 = vmatpush1.bf16.msra.mxu0 0
    %1188 = vmatprep.subr.bf16.mxu0 0
    %1189 = vmatpush1.bf16.msra.mxu0 0
    %1190 = vmatprep.subr.bf16.mxu0 0
    %1191 = vmatpush1.bf16.msra.mxu0 0
    %1192 = vmatprep.subr.bf16.mxu0 0
    %1193 = vmatpush1.bf16.msra.mxu0 0
    %1194 = vmatprep.subr.bf16.mxu0 0
    %1195 = vmatpush1.bf16.msra.mxu0 0
    %1196 = vmatprep.subr.bf16.mxu0 0
    %1197 = vmatpush1.bf16.msra.mxu0 0
    %1198 = vmatprep.subr.bf16.mxu0 0
    %1199 = vmatpush1.bf16.msra.mxu0 0
    %1200 = vmatprep.mubr.bf16.mxu0 0
    %1201 = vmatmul.mubr.bf16.gmra.mrb[0].mxu0 %v1166
    %v1202 = vpop.f32.mrb[0].mxu0
    %v1203 = vadd.f32 0.0, %v1202
    %v1204 = vpop.f32.mrb[0].mxu0
    %v1205 = vpop.f32.mrb[0].mxu0
    %v1206 = vadd.f32 0.0, %v1205
    %v1207 = vpop.f32.mrb[0].mxu0
    %1208 = vdwg.mxu0
    %1209 = vrot.lane.b32.xlu0 %v259, 64
    %v1210 = vpop.permute.xlu0 %1209
    %v1213 = vsel %vm695, %v879, 0
    %1215 = vmatprep.subr.bf16.mxu0 0
    %1216 = vmatpush1.bf16.msra.mxu0 %v1210
    %1217 = vmatprep.subr.bf16.mxu0 0
    %1218 = vmatpush1.bf16.msra.mxu0 0
    %1219 = vmatprep.subr.bf16.mxu0 0
    %1220 = vmatpush1.bf16.msra.mxu0 0
    %1221 = vmatprep.subr.bf16.mxu0 0
    %1222 = vmatpush1.bf16.msra.mxu0 0
    %1223 = vmatprep.subr.bf16.mxu0 0
    %1224 = vmatpush1.bf16.msra.mxu0 0
    %1225 = vmatprep.subr.bf16.mxu0 0
    %1226 = vmatpush1.bf16.msra.mxu0 0
    %1227 = vmatprep.subr.bf16.mxu0 0
    %1228 = vmatpush1.bf16.msra.mxu0 0
    %1229 = vmatprep.subr.bf16.mxu0 0
    %1230 = vmatpush1.bf16.msra.mxu0 0
    %1231 = vmatprep.subr.bf16.mxu0 0
    %1232 = vmatpush1.bf16.msra.mxu0 0
    %1233 = vmatprep.subr.bf16.mxu0 0
    %1234 = vmatpush1.bf16.msra.mxu0 0
    %1235 = vmatprep.subr.bf16.mxu0 0
    %1236 = vmatpush1.bf16.msra.mxu0 0
    %1237 = vmatprep.subr.bf16.mxu0 0
    %1238 = vmatpush1.bf16.msra.mxu0 0
    %1239 = vmatprep.subr.bf16.mxu0 0
    %1240 = vmatpush1.bf16.msra.mxu0 0
    %1241 = vmatprep.subr.bf16.mxu0 0
    %1242 = vmatpush1.bf16.msra.mxu0 0
    %1243 = vmatprep.subr.bf16.mxu0 0
    %1244 = vmatpush1.bf16.msra.mxu0 0
    %1245 = vmatprep.subr.bf16.mxu0 0
    %1246 = vmatpush1.bf16.msra.mxu0 0
    %1247 = vmatprep.mubr.bf16.mxu0 0
    %1248 = vmatmul.mubr.bf16.gmra.mrb[0].mxu0 %v1213
    %v1249 = vpop.f32.mrb[0].mxu0
    %v1250 = vadd.f32 0.0, %v1249
    %v1251 = vpop.f32.mrb[0].mxu0
    %v1252 = vpop.f32.mrb[0].mxu0
    %v1253 = vadd.f32 0.0, %v1252
    %v1254 = vpop.f32.mrb[0].mxu0
    %1255 = vdwg.mxu0
    %1260 = vrot.lane.b32.xlu0 %v1015, 8
    %v1261 = vpop.permute.xlu0 %1260
    %1262 = vrot.lane.b32.xlu0 %v1018, 8
    %v1263 = vpop.permute.xlu0 %1262
    %1264 = vrot.lane.b32.xlu0 %v1062, 8
    %v1265 = vpop.permute.xlu0 %1264
    %1266 = vrot.lane.b32.xlu0 %v1065, 8
    %v1267 = vpop.permute.xlu0 %1266
    %1276 = vrot.lane.b32.xlu0 %v1109, 16
    %v1277 = vpop.permute.xlu0 %1276
    %1278 = vrot.lane.b32.xlu0 %v1112, 16
    %v1279 = vpop.permute.xlu0 %1278
    %1280 = vrot.lane.b32.xlu0 %v1156, 16
    %v1281 = vpop.permute.xlu0 %1280
    %1282 = vrot.lane.b32.xlu0 %v1159, 16
    %v1283 = vpop.permute.xlu0 %1282
    %1292 = vrot.lane.b32.xlu0 %v1203, 24
    %v1293 = vpop.permute.xlu0 %1292
    %1294 = vrot.lane.b32.xlu0 %v1206, 24
    %v1295 = vpop.permute.xlu0 %1294
    %1296 = vrot.lane.b32.xlu0 %v1250, 24
    %v1297 = vpop.permute.xlu0 %1296
    %1298 = vrot.lane.b32.xlu0 %v1253, 24
    %v1299 = vpop.permute.xlu0 %1298
    %v1304 = vsel %vm263, %v921, %v1261
    %v1305 = vsel %vm263, %v924, %v1263
    %v1306 = vsel %vm263, %v968, %v1265
    %v1307 = vsel %vm263, %v971, %v1267
    %v1308 = vsel %vm695, %v1304, %v1277
    %v1309 = vsel %vm695, %v1305, %v1279
    %v1310 = vsel %vm695, %v1306, %v1281
    %v1311 = vsel %vm695, %v1307, %v1283
    %vm1312 = vcmask 195584
    %v1313 = vsel %vm1312, %v1308, %v1293
    %v1314 = vsel %vm1312, %v1309, %v1295
    %v1315 = vsel %vm1312, %v1310, %v1297
    %v1316 = vsel %vm1312, %v1311, %v1299
    %v1317 = vpack.c.bf16 %v1314, %v1313
    %v1318 = vpack.c.bf16 %v1316, %v1315
    %v1319 = vld [vmem:[%s6] sm:$0xf]
    %v1320 = vld [vmem:[%s6 + $0x4] sm:$0xf]
    %v1321 = vld [vmem:[%s6 + $0x8] sm:$0xf]
    %v1322 = vld [vmem:[%s6 + $0xc] sm:$0xf]
    %v1323 = vld [vmem:[%s7] sm:$0x1]
    %v1325 = vlaneseq
    %v1326 = vshrl.u32 %v1325, 7
    %v1327 = vsub.s32 0, %v1326
    %v1328 = vrot.slane %v1323, %v1327
    %v1334 = vunpack.c.l.b16 %v1319
    %v1335 = vunpack.c.l.b16 %v1320
    %v1336 = vunpack.c.l.b16 %v1321
    %v1337 = vunpack.c.l.b16 %v1322
    %v1338 = vpack.c.b16 %v1335, %v1334
    %v1339 = vpack.c.b16 %v1337, %v1336
    %v1343 = vsel %vm156, %v1317, 0
    %v1346 = vsel %vm156, %v1318, 0
    %1348 = vmatprep.subr.bf16.mxu0 0
    %1349 = vmatpush1.bf16.msra.mxu0 %v1338
    %1350 = vmatprep.subr.bf16.mxu0 0
    %1351 = vmatpush1.bf16.msra.mxu0 %v1339
    %1352 = vmatprep.subr.bf16.mxu0 0
    %1353 = vmatpush1.bf16.msra.mxu0 0
    %1354 = vmatprep.subr.bf16.mxu0 0
    %1355 = vmatpush1.bf16.msra.mxu0 0
    %1356 = vmatprep.subr.bf16.mxu0 0
    %1357 = vmatpush1.bf16.msra.mxu0 0
    %1358 = vmatprep.subr.bf16.mxu0 0
    %1359 = vmatpush1.bf16.msra.mxu0 0
    %1360 = vmatprep.subr.bf16.mxu0 0
    %1361 = vmatpush1.bf16.msra.mxu0 0
    %1362 = vmatprep.subr.bf16.mxu0 0
    %1363 = vmatpush1.bf16.msra.mxu0 0
    %1364 = vmatprep.subr.bf16.mxu0 0
    %1365 = vmatpush1.bf16.msra.mxu0 0
    %1366 = vmatprep.subr.bf16.mxu0 0
    %1367 = vmatpush1.bf16.msra.mxu0 0
    %1368 = vmatprep.subr.bf16.mxu0 0
    %1369 = vmatpush1.bf16.msra.mxu0 0
    %1370 = vmatprep.subr.bf16.mxu0 0
    %1371 = vmatpush1.bf16.msra.mxu0 0
    %1372 = vmatprep.subr.bf16.mxu0 0
    %1373 = vmatpush1.bf16.msra.mxu0 0
    %1374 = vmatprep.subr.bf16.mxu0 0
    %1375 = vmatpush1.bf16.msra.mxu0 0
    %1376 = vmatprep.subr.bf16.mxu0 0
    %1377 = vmatpush1.bf16.msra.mxu0 0
    %1378 = vmatprep.subr.bf16.mxu0 0
    %1379 = vmatpush1.bf16.msra.mxu0 0
    %1380 = vmatprep.mubr.bf16.mxu0 0
    %1381 = vmatmul.mubr.bf16.gmra.mrb[0].mxu0 %v1343
    %v1382 = vpop.f32.mrb[0].mxu0
    %v1383 = vadd.f32 %v1328, %v1382
    %v1384 = vpop.f32.mrb[0].mxu0
    %v1385 = vpop.f32.mrb[0].mxu0
    %v1386 = vadd.f32 %v1328, %v1385
    %v1387 = vpop.f32.mrb[0].mxu0
    %1388 = vmatprep.mubr.bf16.mxu0 0
    %1389 = vmatmul.mubr.bf16.gmra.mrb[0].mxu0 %v1346
    %v1390 = vpop.f32.mrb[0].mxu0
    %v1391 = vadd.f32 %v1328, %v1390
    %v1392 = vpop.f32.mrb[0].mxu0
    %v1393 = vpop.f32.mrb[0].mxu0
    %v1394 = vadd.f32 %v1328, %v1393
    %v1395 = vpop.f32.mrb[0].mxu0
    %1396 = vdwg.mxu0
    %v1397 = vadd.f32 %v121, %v1383
    %v1398 = vadd.f32 %v122, %v1386
    %v1399 = vadd.f32 %v126, %v1391
    %v1400 = vadd.f32 %v127, %v1394
    %v1401 = vld [vmem:[%s8] sm:$0x1]
    %v1402 = vld [vmem:[%s9] sm:$0x1]
    %v1403 = vsel %vm156, %v1397, 0.0
    %1404 = vadd.xlane.f32.xlu0 %v1403
    %v1405 = vpop.xlane.xlu0 %1404
    %v1406 = vsel %vm156, %v1398, 0.0
    %1407 = vadd.xlane.f32.xlu0 %v1406
    %v1408 = vpop.xlane.xlu0 %1407
    %v1409 = vsel %vm156, %v1399, 0.0
    %1410 = vadd.xlane.f32.xlu0 %v1409
    %v1411 = vpop.xlane.xlu0 %1410
    %v1412 = vsel %vm156, %v1400, 0.0
    %1413 = vadd.xlane.f32.xlu0 %v1412
    %v1414 = vpop.xlane.xlu0 %1413
    %v1415 = vrcp.pop 32.0
    %v1416 = vmul.f32 %v1405, %v1415
    %v1417 = vmul.f32 %v1408, %v1415
    %v1418 = vmul.f32 %v1411, %v1415
    %v1419 = vmul.f32 %v1414, %v1415
    %v1420 = vsub.f32 %v1397, %v1416
    %v1421 = vsub.f32 %v1398, %v1417
    %v1422 = vsub.f32 %v1399, %v1418
    %v1423 = vsub.f32 %v1400, %v1419
    %v1424 = vmul.f32 %v1420, %v1420
    %v1425 = vmul.f32 %v1421, %v1421
    %v1426 = vmul.f32 %v1422, %v1422
    %v1427 = vmul.f32 %v1423, %v1423
    %v1428 = vsel %vm156, %v1424, 0.0
    %1429 = vadd.xlane.f32.xlu0 %v1428
    %v1430 = vpop.xlane.xlu0 %1429
    %v1431 = vsel %vm156, %v1425, 0.0
    %1432 = vadd.xlane.f32.xlu0 %v1431
    %v1433 = vpop.xlane.xlu0 %1432
    %v1434 = vsel %vm156, %v1426, 0.0
    %1435 = vadd.xlane.f32.xlu0 %v1434
    %v1436 = vpop.xlane.xlu0 %1435
    %v1437 = vsel %vm156, %v1427, 0.0
    %1438 = vadd.xlane.f32.xlu0 %v1437
    %v1439 = vpop.xlane.xlu0 %1438
    %v1440 = vmul.f32 %v1430, %v1415
    %v1441 = vmul.f32 %v1433, %v1415
    %v1442 = vmul.f32 %v1436, %v1415
    %v1443 = vmul.f32 %v1439, %v1415
    %v1444 = vadd.f32 %v1440, 1e-05
    %v1445 = vadd.f32 %v1441, 1e-05
    %v1446 = vadd.f32 %v1442, 1e-05
    %v1447 = vadd.f32 %v1443, 1e-05
    %v1448 = vrsqrt.pop %v1444
    %v1449 = vrsqrt.pop %v1445
    %v1450 = vrsqrt.pop %v1446
    %v1451 = vrsqrt.pop %v1447
    %v1452 = vmul.f32 %v1420, %v1448
    %v1453 = vmul.f32 %v1421, %v1449
    %v1454 = vmul.f32 %v1422, %v1450
    %v1455 = vmul.f32 %v1423, %v1451
    %v1457 = vlaneseq
    %v1458 = vshrl.u32 %v1457, 7
    %v1459 = vsub.s32 0, %v1458
    %v1460 = vrot.slane %v1401, %v1459
    %v1462 = vmul.f32 %v1452, %v1460
    %v1463 = vmul.f32 %v1453, %v1460
    %v1464 = vmul.f32 %v1454, %v1460
    %v1465 = vmul.f32 %v1455, %v1460
    %v1467 = vlaneseq
    %v1468 = vshrl.u32 %v1467, 7
    %v1469 = vsub.s32 0, %v1468
    %v1470 = vrot.slane %v1402, %v1469
    %v1472 = vadd.f32 %v1462, %v1470
    %v1473 = vadd.f32 %v1463, %v1470
    %v1474 = vadd.f32 %v1464, %v1470
    %v1475 = vadd.f32 %v1465, %v1470
    %v1476 = vpack.c.bf16 %v1473, %v1472
    %v1477 = vpack.c.bf16 %v1475, %v1474
    %v1478 = vld [vmem:[%s12] sm:$0xf]
    %v1479 = vld [vmem:[%s12 + $0x4] sm:$0xf]
    %v1480 = vld [vmem:[%s12 + $0x8] sm:$0xf]
    %v1481 = vld [vmem:[%s12 + $0xc] sm:$0xf]
    %v1482 = vld [vmem:[%s13] sm:$0x1]
    %v1484 = vlaneseq
    %v1485 = vshrl.u32 %v1484, 7
    %v1486 = vsub.s32 0, %v1485
    %v1487 = vrot.slane %v1482, %v1486
    %v1493 = vunpack.c.l.b16 %v1478
    %v1494 = vunpack.c.l.b16 %v1479
    %v1495 = vunpack.c.l.b16 %v1480
    %v1496 = vunpack.c.l.b16 %v1481
    %v1497 = vpack.c.b16 %v1494, %v1493
    %v1498 = vpack.c.b16 %v1496, %v1495
    %v1502 = vsel %vm156, %v1476, 0
    %v1505 = vsel %vm156, %v1477, 0
    %1507 = vmatprep.subr.bf16.mxu0 0
    %1508 = vmatpush1.bf16.msra.mxu0 %v1497
    %1509 = vmatprep.subr.bf16.mxu0 0
    %1510 = vmatpush1.bf16.msra.mxu0 %v1498
    %1511 = vmatprep.subr.bf16.mxu0 0
    %1512 = vmatpush1.bf16.msra.mxu0 0
    %1513 = vmatprep.subr.bf16.mxu0 0
    %1514 = vmatpush1.bf16.msra.mxu0 0
    %1515 = vmatprep.subr.bf16.mxu0 0
    %1516 = vmatpush1.bf16.msra.mxu0 0
    %1517 = vmatprep.subr.bf16.mxu0 0
    %1518 = vmatpush1.bf16.msra.mxu0 0
    %1519 = vmatprep.subr.bf16.mxu0 0
    %1520 = vmatpush1.bf16.msra.mxu0 0
    %1521 = vmatprep.subr.bf16.mxu0 0
    %1522 = vmatpush1.bf16.msra.mxu0 0
    %1523 = vmatprep.subr.bf16.mxu0 0
    %1524 = vmatpush1.bf16.msra.mxu0 0
    %1525 = vmatprep.subr.bf16.mxu0 0
    %1526 = vmatpush1.bf16.msra.mxu0 0
    %1527 = vmatprep.subr.bf16.mxu0 0
    %1528 = vmatpush1.bf16.msra.mxu0 0
    %1529 = vmatprep.subr.bf16.mxu0 0
    %1530 = vmatpush1.bf16.msra.mxu0 0
    %1531 = vmatprep.subr.bf16.mxu0 0
    %1532 = vmatpush1.bf16.msra.mxu0 0
    %1533 = vmatprep.subr.bf16.mxu0 0
    %1534 = vmatpush1.bf16.msra.mxu0 0
    %1535 = vmatprep.subr.bf16.mxu0 0
    %1536 = vmatpush1.bf16.msra.mxu0 0
    %1537 = vmatprep.subr.bf16.mxu0 0
    %1538 = vmatpush1.bf16.msra.mxu0 0
    %1539 = vmatprep.mubr.bf16.mxu0 0
    %1540 = vmatmul.mubr.bf16.gmra.mrb[0].mxu0 %v1502
    %v1541 = vpop.f32.mrb[0].mxu0
    %v1542 = vadd.f32 %v1487, %v1541
    %v1543 = vpop.f32.mrb[0].mxu0
    %v1544 = vpop.f32.mrb[0].mxu0
    %v1545 = vadd.f32 %v1487, %v1544
    %v1546 = vpop.f32.mrb[0].mxu0
    %1547 = vmatprep.mubr.bf16.mxu0 0
    %1548 = vmatmul.mubr.bf16.gmra.mrb[0].mxu0 %v1505
    %v1549 = vpop.f32.mrb[0].mxu0
    %v1550 = vadd.f32 %v1487, %v1549
    %v1551 = vpop.f32.mrb[0].mxu0
    %v1552 = vpop.f32.mrb[0].mxu0
    %v1553 = vadd.f32 %v1487, %v1552
    %v1554 = vpop.f32.mrb[0].mxu0
    %1555 = vdwg.mxu0
    %v1556 = vmax.f32 %v1542, 0.0
    %v1557 = vmax.f32 %v1545, 0.0
    %v1558 = vmax.f32 %v1550, 0.0
    %v1559 = vmax.f32 %v1553, 0.0
    %v1560 = vpack.c.bf16 %v1557, %v1556
    %v1561 = vpack.c.bf16 %v1559, %v1558
    %v1562 = vld [vmem:[%s14] sm:$0xf]
    %v1563 = vld [vmem:[%s14 + $0x4] sm:$0xf]
    %v1564 = vld [vmem:[%s14 + $0x8] sm:$0xf]
    %v1565 = vld [vmem:[%s14 + $0xc] sm:$0xf]
    %v1566 = vld [vmem:[%s14 + $0x10] sm:$0xf]
    %v1567 = vld [vmem:[%s14 + $0x14] sm:$0xf]
    %v1568 = vld [vmem:[%s14 + $0x18] sm:$0xf]
    %v1569 = vld [vmem:[%s14 + $0x1c] sm:$0xf]
    %v1570 = vld [vmem:[%s14 + $0x20] sm:$0xf]
    %v1571 = vld [vmem:[%s14 + $0x24] sm:$0xf]
    %v1572 = vld [vmem:[%s14 + $0x28] sm:$0xf]
    %v1573 = vld [vmem:[%s14 + $0x2c] sm:$0xf]
    %v1574 = vld [vmem:[%s14 + $0x30] sm:$0xf]
    %v1575 = vld [vmem:[%s14 + $0x34] sm:$0xf]
    %v1576 = vld [vmem:[%s14 + $0x38] sm:$0xf]
    %v1577 = vld [vmem:[%s14 + $0x3c] sm:$0xf]
    %v1578 = vld [vmem:[%s15] sm:$0x1]
    %v1580 = vlaneseq
    %v1581 = vshrl.u32 %v1580, 7
    %v1582 = vsub.s32 0, %v1581
    %v1583 = vrot.slane %v1578, %v1582
    %v1601 = vunpack.c.l.b16 %v1562
    %v1602 = vunpack.c.l.b16 %v1563
    %v1603 = vunpack.c.l.b16 %v1564
    %v1604 = vunpack.c.l.b16 %v1565
    %v1605 = vunpack.c.l.b16 %v1566
    %v1606 = vunpack.c.l.b16 %v1567
    %v1607 = vunpack.c.l.b16 %v1568
    %v1608 = vunpack.c.l.b16 %v1569
    %v1609 = vunpack.c.l.b16 %v1570
    %v1610 = vunpack.c.l.b16 %v1571
    %v1611 = vunpack.c.l.b16 %v1572
    %v1612 = vunpack.c.l.b16 %v1573
    %v1613 = vunpack.c.l.b16 %v1574
    %v1614 = vunpack.c.l.b16 %v1575
    %v1615 = vunpack.c.l.b16 %v1576
    %v1616 = vunpack.c.l.b16 %v1577
    %v1617 = vpack.c.b16 %v1602, %v1601
    %v1618 = vpack.c.b16 %v1604, %v1603
    %v1619 = vpack.c.b16 %v1606, %v1605
    %v1620 = vpack.c.b16 %v1608, %v1607
    %v1621 = vpack.c.b16 %v1610, %v1609
    %v1622 = vpack.c.b16 %v1612, %v1611
    %v1623 = vpack.c.b16 %v1614, %v1613
    %v1624 = vpack.c.b16 %v1616, %v1615
    %1633 = vmatprep.subr.bf16.mxu0 0
    %1634 = vmatpush1.bf16.msra.mxu0 %v1617
    %1635 = vmatprep.subr.bf16.mxu0 0
    %1636 = vmatpush1.bf16.msra.mxu0 %v1618
    %1637 = vmatprep.subr.bf16.mxu0 0
    %1638 = vmatpush1.bf16.msra.mxu0 %v1619
    %1639 = vmatprep.subr.bf16.mxu0 0
    %1640 = vmatpush1.bf16.msra.mxu0 %v1620
    %1641 = vmatprep.subr.bf16.mxu0 0
    %1642 = vmatpush1.bf16.msra.mxu0 %v1621
    %1643 = vmatprep.subr.bf16.mxu0 0
    %1644 = vmatpush1.bf16.msra.mxu0 %v1622
    %1645 = vmatprep.subr.bf16.mxu0 0
    %1646 = vmatpush1.bf16.msra.mxu0 %v1623
    %1647 = vmatprep.subr.bf16.mxu0 0
    %1648 = vmatpush1.bf16.msra.mxu0 %v1624
    %1649 = vmatprep.subr.bf16.mxu0 0
    %1650 = vmatpush1.bf16.msra.mxu0 0
    %1651 = vmatprep.subr.bf16.mxu0 0
    %1652 = vmatpush1.bf16.msra.mxu0 0
    %1653 = vmatprep.subr.bf16.mxu0 0
    %1654 = vmatpush1.bf16.msra.mxu0 0
    %1655 = vmatprep.subr.bf16.mxu0 0
    %1656 = vmatpush1.bf16.msra.mxu0 0
    %1657 = vmatprep.subr.bf16.mxu0 0
    %1658 = vmatpush1.bf16.msra.mxu0 0
    %1659 = vmatprep.subr.bf16.mxu0 0
    %1660 = vmatpush1.bf16.msra.mxu0 0
    %1661 = vmatprep.subr.bf16.mxu0 0
    %1662 = vmatpush1.bf16.msra.mxu0 0
    %1663 = vmatprep.subr.bf16.mxu0 0
    %1664 = vmatpush1.bf16.msra.mxu0 0
    %1665 = vmatprep.mubr.bf16.mxu0 0
    %1666 = vmatmul.mubr.bf16.gmra.mrb[0].mxu0 %v1560
    %v1667 = vpop.f32.mrb[0].mxu0
    %v1668 = vadd.f32 %v1583, %v1667
    %v1669 = vpop.f32.mrb[0].mxu0
    %v1670 = vpop.f32.mrb[0].mxu0
    %v1671 = vadd.f32 %v1583, %v1670
    %v1672 = vpop.f32.mrb[0].mxu0
    %1673 = vmatprep.mubr.bf16.mxu0 0
    %1674 = vmatmul.mubr.bf16.gmra.mrb[0].mxu0 %v1561
    %v1675 = vpop.f32.mrb[0].mxu0
    %v1676 = vadd.f32 %v1583, %v1675
    %v1677 = vpop.f32.mrb[0].mxu0
    %v1678 = vpop.f32.mrb[0].mxu0
    %v1679 = vadd.f32 %v1583, %v1678
    %v1680 = vpop.f32.mrb[0].mxu0
    %1681 = vdwg.mxu0
    %v1682 = vadd.f32 %v1472, %v1668
    %v1683 = vadd.f32 %v1473, %v1671
    %v1684 = vadd.f32 %v1474, %v1676
    %v1685 = vadd.f32 %v1475, %v1679
    %v1686 = vld [vmem:[%s10] sm:$0x1]
    %v1687 = vld [vmem:[%s11] sm:$0x1]
    %v1688 = vsel %vm156, %v1682, 0.0
    %1689 = vadd.xlane.f32.xlu0 %v1688
    %v1690 = vpop.xlane.xlu0 %1689
    %v1691 = vsel %vm156, %v1683, 0.0
    %1692 = vadd.xlane.f32.xlu0 %v1691
    %v1693 = vpop.xlane.xlu0 %1692
    %v1694 = vsel %vm156, %v1684, 0.0
    %1695 = vadd.xlane.f32.xlu0 %v1694
    %v1696 = vpop.xlane.xlu0 %1695
    %v1697 = vsel %vm156, %v1685, 0.0
    %1698 = vadd.xlane.f32.xlu0 %v1697
    %v1699 = vpop.xlane.xlu0 %1698
    %v1700 = vmul.f32 %v1690, %v1415
    %v1701 = vmul.f32 %v1693, %v1415
    %v1702 = vmul.f32 %v1696, %v1415
    %v1703 = vmul.f32 %v1699, %v1415
    %v1704 = vsub.f32 %v1682, %v1700
    %v1705 = vsub.f32 %v1683, %v1701
    %v1706 = vsub.f32 %v1684, %v1702
    %v1707 = vsub.f32 %v1685, %v1703
    %v1708 = vmul.f32 %v1704, %v1704
    %v1709 = vmul.f32 %v1705, %v1705
    %v1710 = vmul.f32 %v1706, %v1706
    %v1711 = vmul.f32 %v1707, %v1707
    %v1712 = vsel %vm156, %v1708, 0.0
    %1713 = vadd.xlane.f32.xlu0 %v1712
    %v1714 = vpop.xlane.xlu0 %1713
    %v1715 = vsel %vm156, %v1709, 0.0
    %1716 = vadd.xlane.f32.xlu0 %v1715
    %v1717 = vpop.xlane.xlu0 %1716
    %v1718 = vsel %vm156, %v1710, 0.0
    %1719 = vadd.xlane.f32.xlu0 %v1718
    %v1720 = vpop.xlane.xlu0 %1719
    %v1721 = vsel %vm156, %v1711, 0.0
    %1722 = vadd.xlane.f32.xlu0 %v1721
    %v1723 = vpop.xlane.xlu0 %1722
    %v1724 = vmul.f32 %v1714, %v1415
    %v1725 = vmul.f32 %v1717, %v1415
    %v1726 = vmul.f32 %v1720, %v1415
    %v1727 = vmul.f32 %v1723, %v1415
    %v1728 = vadd.f32 %v1724, 1e-05
    %v1729 = vadd.f32 %v1725, 1e-05
    %v1730 = vadd.f32 %v1726, 1e-05
    %v1731 = vadd.f32 %v1727, 1e-05
    %v1732 = vrsqrt.pop %v1728
    %v1733 = vrsqrt.pop %v1729
    %v1734 = vrsqrt.pop %v1730
    %v1735 = vrsqrt.pop %v1731
    %v1736 = vmul.f32 %v1704, %v1732
    %v1737 = vmul.f32 %v1705, %v1733
    %v1738 = vmul.f32 %v1706, %v1734
    %v1739 = vmul.f32 %v1707, %v1735
    %v1741 = vlaneseq
    %v1742 = vshrl.u32 %v1741, 7
    %v1743 = vsub.s32 0, %v1742
    %v1744 = vrot.slane %v1686, %v1743
    %v1746 = vmul.f32 %v1736, %v1744
    %v1747 = vmul.f32 %v1737, %v1744
    %v1748 = vmul.f32 %v1738, %v1744
    %v1749 = vmul.f32 %v1739, %v1744
    %v1751 = vlaneseq
    %v1752 = vshrl.u32 %v1751, 7
    %v1753 = vsub.s32 0, %v1752
    %v1754 = vrot.slane %v1687, %v1753
    %v1756 = vadd.f32 %v1746, %v1754
    %v1757 = vadd.f32 %v1747, %v1754
    %v1758 = vadd.f32 %v1748, %v1754
    %v1759 = vadd.f32 %v1749, %v1754
    %v1760 = vpack.c.bf16 %v1757, %v1756
    %v1761 = vpack.c.bf16 %v1759, %v1758
    %s1762 = scalar_lea.vmem %s4, 16
    %v1763 = vld [vmem:[%s1762] sm:$0xf]
    %v1764 = vld [vmem:[%s1762 + $0x4] sm:$0xf]
    %v1765 = vld [vmem:[%s1762 + $0x8] sm:$0xf]
    %v1766 = vld [vmem:[%s1762 + $0xc] sm:$0xf]
    %s1767 = scalar_lea.vmem %s5, 1
    %v1768 = vld [vmem:[%s1767] sm:$0x1]
    %v1770 = vlaneseq
    %v1771 = vshrl.u32 %v1770, 7
    %v1772 = vsub.s32 0, %v1771
    %v1773 = vrot.slane %v1768, %v1772
    %v1779 = vunpack.c.l.b16 %v1763
    %v1780 = vunpack.c.l.b16 %v1764
    %v1781 = vunpack.c.l.b16 %v1765
    %v1782 = vunpack.c.l.b16 %v1766
    %v1783 = vpack.c.b16 %v1780, %v1779
    %v1784 = vpack.c.b16 %v1782, %v1781
    %v1788 = vsel %vm156, %v1760, 0
    %v1791 = vsel %vm156, %v1761, 0
    %1793 = vmatprep.subr.bf16.mxu0 0
    %1794 = vmatpush1.bf16.msra.mxu0 %v1783
    %1795 = vmatprep.subr.bf16.mxu0 0
    %1796 = vmatpush1.bf16.msra.mxu0 %v1784
    %1797 = vmatprep.subr.bf16.mxu0 0
    %1798 = vmatpush1.bf16.msra.mxu0 0
    %1799 = vmatprep.subr.bf16.mxu0 0
    %1800 = vmatpush1.bf16.msra.mxu0 0
    %1801 = vmatprep.subr.bf16.mxu0 0
    %1802 = vmatpush1.bf16.msra.mxu0 0
    %1803 = vmatprep.subr.bf16.mxu0 0
    %1804 = vmatpush1.bf16.msra.mxu0 0
    %1805 = vmatprep.subr.bf16.mxu0 0
    %1806 = vmatpush1.bf16.msra.mxu0 0
    %1807 = vmatprep.subr.bf16.mxu0 0
    %1808 = vmatpush1.bf16.msra.mxu0 0
    %1809 = vmatprep.subr.bf16.mxu0 0
    %1810 = vmatpush1.bf16.msra.mxu0 0
    %1811 = vmatprep.subr.bf16.mxu0 0
    %1812 = vmatpush1.bf16.msra.mxu0 0
    %1813 = vmatprep.subr.bf16.mxu0 0
    %1814 = vmatpush1.bf16.msra.mxu0 0
    %1815 = vmatprep.subr.bf16.mxu0 0
    %1816 = vmatpush1.bf16.msra.mxu0 0
    %1817 = vmatprep.subr.bf16.mxu0 0
    %1818 = vmatpush1.bf16.msra.mxu0 0
    %1819 = vmatprep.subr.bf16.mxu0 0
    %1820 = vmatpush1.bf16.msra.mxu0 0
    %1821 = vmatprep.subr.bf16.mxu0 0
    %1822 = vmatpush1.bf16.msra.mxu0 0
    %1823 = vmatprep.subr.bf16.mxu0 0
    %1824 = vmatpush1.bf16.msra.mxu0 0
    %1825 = vmatprep.mubr.bf16.mxu0 0
    %1826 = vmatmul.mubr.bf16.gmra.mrb[0].mxu0 %v1788
    %v1827 = vpop.f32.mrb[0].mxu0
    %v1828 = vadd.f32 %v1773, %v1827
    %v1829 = vpop.f32.mrb[0].mxu0
    %v1830 = vpop.f32.mrb[0].mxu0
    %v1831 = vadd.f32 %v1773, %v1830
    %v1832 = vpop.f32.mrb[0].mxu0
    %1833 = vmatprep.mubr.bf16.mxu0 0
    %1834 = vmatmul.mubr.bf16.gmra.mrb[0].mxu0 %v1791
    %v1835 = vpop.f32.mrb[0].mxu0
    %v1836 = vadd.f32 %v1773, %v1835
    %v1837 = vpop.f32.mrb[0].mxu0
    %v1838 = vpop.f32.mrb[0].mxu0
    %v1839 = vadd.f32 %v1773, %v1838
    %v1840 = vpop.f32.mrb[0].mxu0
    %1841 = vdwg.mxu0
    %1846 = vrot.lane.b32.xlu0 %v1828, 120
    %v1847 = vpop.permute.xlu0 %1846
    %1848 = vrot.lane.b32.xlu0 %v1831, 120
    %v1849 = vpop.permute.xlu0 %1848
    %1850 = vrot.lane.b32.xlu0 %v1836, 120
    %v1851 = vpop.permute.xlu0 %1850
    %1852 = vrot.lane.b32.xlu0 %v1839, 120
    %v1853 = vpop.permute.xlu0 %1852
    %1858 = vrot.lane.b32.xlu0 %v1828, 112
    %v1859 = vpop.permute.xlu0 %1858
    %1860 = vrot.lane.b32.xlu0 %v1831, 112
    %v1861 = vpop.permute.xlu0 %1860
    %1862 = vrot.lane.b32.xlu0 %v1836, 112
    %v1863 = vpop.permute.xlu0 %1862
    %1864 = vrot.lane.b32.xlu0 %v1839, 112
    %v1865 = vpop.permute.xlu0 %1864
    %1870 = vrot.lane.b32.xlu0 %v1828, 104
    %v1871 = vpop.permute.xlu0 %1870
    %1872 = vrot.lane.b32.xlu0 %v1831, 104
    %v1873 = vpop.permute.xlu0 %1872
    %1874 = vrot.lane.b32.xlu0 %v1836, 104
    %v1875 = vpop.permute.xlu0 %1874
    %1876 = vrot.lane.b32.xlu0 %v1839, 104
    %v1877 = vpop.permute.xlu0 %1876
    %v1882 = vpack.c.bf16 %v1831, %v1828
    %v1883 = vpack.c.bf16 %v1839, %v1836
    %v1884 = vpack.c.bf16 %v1849, %v1847
    %v1885 = vpack.c.bf16 %v1853, %v1851
    %v1886 = vpack.c.bf16 %v1861, %v1859
    %v1887 = vpack.c.bf16 %v1865, %v1863
    %v1888 = vpack.c.bf16 %v1873, %v1871
    %v1889 = vpack.c.bf16 %v1877, %v1875
    %1891 = vrot.lane.b32.xlu0 %v1882, 96
    %v1892 = vpop.permute.xlu0 %1891
    %v1894 = vsel %vm263, %v1882, 0
    %v1897 = vsel %vm263, %v1892, 0
    %1899 = vmatprep.subr.bf16.mxu0 0
    %1900 = vmatpush1.bf16.xpose.msra.mxu0 %v1897
    %1901 = vmatprep.subr.bf16.mxu0 0
    %1902 = vmatpush1.bf16.xpose.msra.mxu0 0
    %1903 = vmatprep.subr.bf16.mxu0 0
    %1904 = vmatpush1.bf16.xpose.msra.mxu0 0
    %1905 = vmatprep.subr.bf16.mxu0 0
    %1906 = vmatpush1.bf16.xpose.msra.mxu0 0
    %1907 = vmatprep.subr.bf16.mxu0 0
    %1908 = vmatpush1.bf16.xpose.msra.mxu0 0
    %1909 = vmatprep.subr.bf16.mxu0 0
    %1910 = vmatpush1.bf16.xpose.msra.mxu0 0
    %1911 = vmatprep.subr.bf16.mxu0 0
    %1912 = vmatpush1.bf16.xpose.msra.mxu0 0
    %1913 = vmatprep.subr.bf16.mxu0 0
    %1914 = vmatpush1.bf16.xpose.msra.mxu0 0
    %1915 = vmatprep.subr.bf16.mxu0 0
    %1916 = vmatpush1.bf16.xpose.msra.mxu0 0
    %1917 = vmatprep.subr.bf16.mxu0 0
    %1918 = vmatpush1.bf16.xpose.msra.mxu0 0
    %1919 = vmatprep.subr.bf16.mxu0 0
    %1920 = vmatpush1.bf16.xpose.msra.mxu0 0
    %1921 = vmatprep.subr.bf16.mxu0 0
    %1922 = vmatpush1.bf16.xpose.msra.mxu0 0
    %1923 = vmatprep.subr.bf16.mxu0 0
    %1924 = vmatpush1.bf16.xpose.msra.mxu0 0
    %1925 = vmatprep.subr.bf16.mxu0 0
    %1926 = vmatpush1.bf16.xpose.msra.mxu0 0
    %1927 = vmatprep.subr.bf16.mxu0 0
    %1928 = vmatpush1.bf16.xpose.msra.mxu0 0
    %1929 = vmatprep.subr.bf16.mxu0 0
    %1930 = vmatpush1.bf16.xpose.msra.mxu0 0
    %1931 = vmatprep.mubr.bf16.mxu0 0
    %1932 = vmatmul.mubr.bf16.gmra.mrb[0].mxu0 %v1894
    %v1933 = vpop.f32.mrb[0].mxu0
    %v1934 = vadd.f32 0.0, %v1933
    %v1935 = vpop.f32.mrb[0].mxu0
    %v1936 = vpop.f32.mrb[0].mxu0
    %v1937 = vadd.f32 0.0, %v1936
    %v1938 = vpop.f32.mrb[0].mxu0
    %1939 = vdwg.mxu0
    %1941 = vrot.lane.b32.xlu0 %v1883, 96
    %v1942 = vpop.permute.xlu0 %1941
    %v1944 = vsel %vm263, %v1883, 0
    %v1947 = vsel %vm263, %v1942, 0
    %1949 = vmatprep.subr.bf16.mxu0 0
    %1950 = vmatpush1.bf16.xpose.msra.mxu0 %v1947
    %1951 = vmatprep.subr.bf16.mxu0 0
    %1952 = vmatpush1.bf16.xpose.msra.mxu0 0
    %1953 = vmatprep.subr.bf16.mxu0 0
    %1954 = vmatpush1.bf16.xpose.msra.mxu0 0
    %1955 = vmatprep.subr.bf16.mxu0 0
    %1956 = vmatpush1.bf16.xpose.msra.mxu0 0
    %1957 = vmatprep.subr.bf16.mxu0 0
    %1958 = vmatpush1.bf16.xpose.msra.mxu0 0
    %1959 = vmatprep.subr.bf16.mxu0 0
    %1960 = vmatpush1.bf16.xpose.msra.mxu0 0
    %1961 = vmatprep.subr.bf16.mxu0 0
    %1962 = vmatpush1.bf16.xpose.msra.mxu0 0
    %1963 = vmatprep.subr.bf16.mxu0 0
    %1964 = vmatpush1.bf16.xpose.msra.mxu0 0
    %1965 = vmatprep.subr.bf16.mxu0 0
    %1966 = vmatpush1.bf16.xpose.msra.mxu0 0
    %1967 = vmatprep.subr.bf16.mxu0 0
    %1968 = vmatpush1.bf16.xpose.msra.mxu0 0
    %1969 = vmatprep.subr.bf16.mxu0 0
    %1970 = vmatpush1.bf16.xpose.msra.mxu0 0
    %1971 = vmatprep.subr.bf16.mxu0 0
    %1972 = vmatpush1.bf16.xpose.msra.mxu0 0
    %1973 = vmatprep.subr.bf16.mxu0 0
    %1974 = vmatpush1.bf16.xpose.msra.mxu0 0
    %1975 = vmatprep.subr.bf16.mxu0 0
    %1976 = vmatpush1.bf16.xpose.msra.mxu0 0
    %1977 = vmatprep.subr.bf16.mxu0 0
    %1978 = vmatpush1.bf16.xpose.msra.mxu0 0
    %1979 = vmatprep.subr.bf16.mxu0 0
    %1980 = vmatpush1.bf16.xpose.msra.mxu0 0
    %1981 = vmatprep.mubr.bf16.mxu0 0
    %1982 = vmatmul.mubr.bf16.gmra.mrb[0].mxu0 %v1944
    %v1983 = vpop.f32.mrb[0].mxu0
    %v1984 = vadd.f32 0.0, %v1983
    %v1985 = vpop.f32.mrb[0].mxu0
    %v1986 = vpop.f32.mrb[0].mxu0
    %v1987 = vadd.f32 0.0, %v1986
    %v1988 = vpop.f32.mrb[0].mxu0
    %1989 = vdwg.mxu0
    %1991 = vrot.lane.b32.xlu0 %v1884, 96
    %v1992 = vpop.permute.xlu0 %1991
    %v1994 = vsel %vm263, %v1884, 0
    %v1997 = vsel %vm263, %v1992, 0
    %1999 = vmatprep.subr.bf16.mxu0 0
    %2000 = vmatpush1.bf16.xpose.msra.mxu0 %v1997
    %2001 = vmatprep.subr.bf16.mxu0 0
    %2002 = vmatpush1.bf16.xpose.msra.mxu0 0
    %2003 = vmatprep.subr.bf16.mxu0 0
    %2004 = vmatpush1.bf16.xpose.msra.mxu0 0
    %2005 = vmatprep.subr.bf16.mxu0 0
    %2006 = vmatpush1.bf16.xpose.msra.mxu0 0
    %2007 = vmatprep.subr.bf16.mxu0 0
    %2008 = vmatpush1.bf16.xpose.msra.mxu0 0
    %2009 = vmatprep.subr.bf16.mxu0 0
    %2010 = vmatpush1.bf16.xpose.msra.mxu0 0
    %2011 = vmatprep.subr.bf16.mxu0 0
    %2012 = vmatpush1.bf16.xpose.msra.mxu0 0
    %2013 = vmatprep.subr.bf16.mxu0 0
    %2014 = vmatpush1.bf16.xpose.msra.mxu0 0
    %2015 = vmatprep.subr.bf16.mxu0 0
    %2016 = vmatpush1.bf16.xpose.msra.mxu0 0
    %2017 = vmatprep.subr.bf16.mxu0 0
    %2018 = vmatpush1.bf16.xpose.msra.mxu0 0
    %2019 = vmatprep.subr.bf16.mxu0 0
    %2020 = vmatpush1.bf16.xpose.msra.mxu0 0
    %2021 = vmatprep.subr.bf16.mxu0 0
    %2022 = vmatpush1.bf16.xpose.msra.mxu0 0
    %2023 = vmatprep.subr.bf16.mxu0 0
    %2024 = vmatpush1.bf16.xpose.msra.mxu0 0
    %2025 = vmatprep.subr.bf16.mxu0 0
    %2026 = vmatpush1.bf16.xpose.msra.mxu0 0
    %2027 = vmatprep.subr.bf16.mxu0 0
    %2028 = vmatpush1.bf16.xpose.msra.mxu0 0
    %2029 = vmatprep.subr.bf16.mxu0 0
    %2030 = vmatpush1.bf16.xpose.msra.mxu0 0
    %2031 = vmatprep.mubr.bf16.mxu0 0
    %2032 = vmatmul.mubr.bf16.gmra.mrb[0].mxu0 %v1994
    %v2033 = vpop.f32.mrb[0].mxu0
    %v2034 = vadd.f32 0.0, %v2033
    %v2035 = vpop.f32.mrb[0].mxu0
    %v2036 = vpop.f32.mrb[0].mxu0
    %v2037 = vadd.f32 0.0, %v2036
    %v2038 = vpop.f32.mrb[0].mxu0
    %2039 = vdwg.mxu0
    %2041 = vrot.lane.b32.xlu0 %v1885, 96
    %v2042 = vpop.permute.xlu0 %2041
    %v2044 = vsel %vm263, %v1885, 0
    %v2047 = vsel %vm263, %v2042, 0
    %2049 = vmatprep.subr.bf16.mxu0 0
    %2050 = vmatpush1.bf16.xpose.msra.mxu0 %v2047
    %2051 = vmatprep.subr.bf16.mxu0 0
    %2052 = vmatpush1.bf16.xpose.msra.mxu0 0
    %2053 = vmatprep.subr.bf16.mxu0 0
    %2054 = vmatpush1.bf16.xpose.msra.mxu0 0
    %2055 = vmatprep.subr.bf16.mxu0 0
    %2056 = vmatpush1.bf16.xpose.msra.mxu0 0
    %2057 = vmatprep.subr.bf16.mxu0 0
    %2058 = vmatpush1.bf16.xpose.msra.mxu0 0
    %2059 = vmatprep.subr.bf16.mxu0 0
    %2060 = vmatpush1.bf16.xpose.msra.mxu0 0
    %2061 = vmatprep.subr.bf16.mxu0 0
    %2062 = vmatpush1.bf16.xpose.msra.mxu0 0
    %2063 = vmatprep.subr.bf16.mxu0 0
    %2064 = vmatpush1.bf16.xpose.msra.mxu0 0
    %2065 = vmatprep.subr.bf16.mxu0 0
    %2066 = vmatpush1.bf16.xpose.msra.mxu0 0
    %2067 = vmatprep.subr.bf16.mxu0 0
    %2068 = vmatpush1.bf16.xpose.msra.mxu0 0
    %2069 = vmatprep.subr.bf16.mxu0 0
    %2070 = vmatpush1.bf16.xpose.msra.mxu0 0
    %2071 = vmatprep.subr.bf16.mxu0 0
    %2072 = vmatpush1.bf16.xpose.msra.mxu0 0
    %2073 = vmatprep.subr.bf16.mxu0 0
    %2074 = vmatpush1.bf16.xpose.msra.mxu0 0
    %2075 = vmatprep.subr.bf16.mxu0 0
    %2076 = vmatpush1.bf16.xpose.msra.mxu0 0
    %2077 = vmatprep.subr.bf16.mxu0 0
    %2078 = vmatpush1.bf16.xpose.msra.mxu0 0
    %2079 = vmatprep.subr.bf16.mxu0 0
    %2080 = vmatpush1.bf16.xpose.msra.mxu0 0
    %2081 = vmatprep.mubr.bf16.mxu0 0
    %2082 = vmatmul.mubr.bf16.gmra.mrb[0].mxu0 %v2044
    %v2083 = vpop.f32.mrb[0].mxu0
    %v2084 = vadd.f32 0.0, %v2083
    %v2085 = vpop.f32.mrb[0].mxu0
    %v2086 = vpop.f32.mrb[0].mxu0
    %v2087 = vadd.f32 0.0, %v2086
    %v2088 = vpop.f32.mrb[0].mxu0
    %2089 = vdwg.mxu0
    %2091 = vrot.lane.b32.xlu0 %v1886, 96
    %v2092 = vpop.permute.xlu0 %2091
    %v2094 = vsel %vm263, %v1886, 0
    %v2097 = vsel %vm263, %v2092, 0
    %2099 = vmatprep.subr.bf16.mxu0 0
    %2100 = vmatpush1.bf16.xpose.msra.mxu0 %v2097
    %2101 = vmatprep.subr.bf16.mxu0 0
    %2102 = vmatpush1.bf16.xpose.msra.mxu0 0
    %2103 = vmatprep.subr.bf16.mxu0 0
    %2104 = vmatpush1.bf16.xpose.msra.mxu0 0
    %2105 = vmatprep.subr.bf16.mxu0 0
    %2106 = vmatpush1.bf16.xpose.msra.mxu0 0
    %2107 = vmatprep.subr.bf16.mxu0 0
    %2108 = vmatpush1.bf16.xpose.msra.mxu0 0
    %2109 = vmatprep.subr.bf16.mxu0 0
    %2110 = vmatpush1.bf16.xpose.msra.mxu0 0
    %2111 = vmatprep.subr.bf16.mxu0 0
    %2112 = vmatpush1.bf16.xpose.msra.mxu0 0
    %2113 = vmatprep.subr.bf16.mxu0 0
    %2114 = vmatpush1.bf16.xpose.msra.mxu0 0
    %2115 = vmatprep.subr.bf16.mxu0 0
    %2116 = vmatpush1.bf16.xpose.msra.mxu0 0
    %2117 = vmatprep.subr.bf16.mxu0 0
    %2118 = vmatpush1.bf16.xpose.msra.mxu0 0
    %2119 = vmatprep.subr.bf16.mxu0 0
    %2120 = vmatpush1.bf16.xpose.msra.mxu0 0
    %2121 = vmatprep.subr.bf16.mxu0 0
    %2122 = vmatpush1.bf16.xpose.msra.mxu0 0
    %2123 = vmatprep.subr.bf16.mxu0 0
    %2124 = vmatpush1.bf16.xpose.msra.mxu0 0
    %2125 = vmatprep.subr.bf16.mxu0 0
    %2126 = vmatpush1.bf16.xpose.msra.mxu0 0
    %2127 = vmatprep.subr.bf16.mxu0 0
    %2128 = vmatpush1.bf16.xpose.msra.mxu0 0
    %2129 = vmatprep.subr.bf16.mxu0 0
    %2130 = vmatpush1.bf16.xpose.msra.mxu0 0
    %2131 = vmatprep.mubr.bf16.mxu0 0
    %2132 = vmatmul.mubr.bf16.gmra.mrb[0].mxu0 %v2094
    %v2133 = vpop.f32.mrb[0].mxu0
    %v2134 = vadd.f32 0.0, %v2133
    %v2135 = vpop.f32.mrb[0].mxu0
    %v2136 = vpop.f32.mrb[0].mxu0
    %v2137 = vadd.f32 0.0, %v2136
    %v2138 = vpop.f32.mrb[0].mxu0
    %2139 = vdwg.mxu0
    %2141 = vrot.lane.b32.xlu0 %v1887, 96
    %v2142 = vpop.permute.xlu0 %2141
    %v2144 = vsel %vm263, %v1887, 0
    %v2147 = vsel %vm263, %v2142, 0
    %2149 = vmatprep.subr.bf16.mxu0 0
    %2150 = vmatpush1.bf16.xpose.msra.mxu0 %v2147
    %2151 = vmatprep.subr.bf16.mxu0 0
    %2152 = vmatpush1.bf16.xpose.msra.mxu0 0
    %2153 = vmatprep.subr.bf16.mxu0 0
    %2154 = vmatpush1.bf16.xpose.msra.mxu0 0
    %2155 = vmatprep.subr.bf16.mxu0 0
    %2156 = vmatpush1.bf16.xpose.msra.mxu0 0
    %2157 = vmatprep.subr.bf16.mxu0 0
    %2158 = vmatpush1.bf16.xpose.msra.mxu0 0
    %2159 = vmatprep.subr.bf16.mxu0 0
    %2160 = vmatpush1.bf16.xpose.msra.mxu0 0
    %2161 = vmatprep.subr.bf16.mxu0 0
    %2162 = vmatpush1.bf16.xpose.msra.mxu0 0
    %2163 = vmatprep.subr.bf16.mxu0 0
    %2164 = vmatpush1.bf16.xpose.msra.mxu0 0
    %2165 = vmatprep.subr.bf16.mxu0 0
    %2166 = vmatpush1.bf16.xpose.msra.mxu0 0
    %2167 = vmatprep.subr.bf16.mxu0 0
    %2168 = vmatpush1.bf16.xpose.msra.mxu0 0
    %2169 = vmatprep.subr.bf16.mxu0 0
    %2170 = vmatpush1.bf16.xpose.msra.mxu0 0
    %2171 = vmatprep.subr.bf16.mxu0 0
    %2172 = vmatpush1.bf16.xpose.msra.mxu0 0
    %2173 = vmatprep.subr.bf16.mxu0 0
    %2174 = vmatpush1.bf16.xpose.msra.mxu0 0
    %2175 = vmatprep.subr.bf16.mxu0 0
    %2176 = vmatpush1.bf16.xpose.msra.mxu0 0
    %2177 = vmatprep.subr.bf16.mxu0 0
    %2178 = vmatpush1.bf16.xpose.msra.mxu0 0
    %2179 = vmatprep.subr.bf16.mxu0 0
    %2180 = vmatpush1.bf16.xpose.msra.mxu0 0
    %2181 = vmatprep.mubr.bf16.mxu0 0
    %2182 = vmatmul.mubr.bf16.gmra.mrb[0].mxu0 %v2144
    %v2183 = vpop.f32.mrb[0].mxu0
    %v2184 = vadd.f32 0.0, %v2183
    %v2185 = vpop.f32.mrb[0].mxu0
    %v2186 = vpop.f32.mrb[0].mxu0
    %v2187 = vadd.f32 0.0, %v2186
    %v2188 = vpop.f32.mrb[0].mxu0
    %2189 = vdwg.mxu0
    %2191 = vrot.lane.b32.xlu0 %v1888, 96
    %v2192 = vpop.permute.xlu0 %2191
    %v2194 = vsel %vm263, %v1888, 0
    %v2197 = vsel %vm263, %v2192, 0
    %2199 = vmatprep.subr.bf16.mxu0 0
    %2200 = vmatpush1.bf16.xpose.msra.mxu0 %v2197
    %2201 = vmatprep.subr.bf16.mxu0 0
    %2202 = vmatpush1.bf16.xpose.msra.mxu0 0
    %2203 = vmatprep.subr.bf16.mxu0 0
    %2204 = vmatpush1.bf16.xpose.msra.mxu0 0
    %2205 = vmatprep.subr.bf16.mxu0 0
    %2206 = vmatpush1.bf16.xpose.msra.mxu0 0
    %2207 = vmatprep.subr.bf16.mxu0 0
    %2208 = vmatpush1.bf16.xpose.msra.mxu0 0
    %2209 = vmatprep.subr.bf16.mxu0 0
    %2210 = vmatpush1.bf16.xpose.msra.mxu0 0
    %2211 = vmatprep.subr.bf16.mxu0 0
    %2212 = vmatpush1.bf16.xpose.msra.mxu0 0
    %2213 = vmatprep.subr.bf16.mxu0 0
    %2214 = vmatpush1.bf16.xpose.msra.mxu0 0
    %2215 = vmatprep.subr.bf16.mxu0 0
    %2216 = vmatpush1.bf16.xpose.msra.mxu0 0
    %2217 = vmatprep.subr.bf16.mxu0 0
    %2218 = vmatpush1.bf16.xpose.msra.mxu0 0
    %2219 = vmatprep.subr.bf16.mxu0 0
    %2220 = vmatpush1.bf16.xpose.msra.mxu0 0
    %2221 = vmatprep.subr.bf16.mxu0 0
    %2222 = vmatpush1.bf16.xpose.msra.mxu0 0
    %2223 = vmatprep.subr.bf16.mxu0 0
    %2224 = vmatpush1.bf16.xpose.msra.mxu0 0
    %2225 = vmatprep.subr.bf16.mxu0 0
    %2226 = vmatpush1.bf16.xpose.msra.mxu0 0
    %2227 = vmatprep.subr.bf16.mxu0 0
    %2228 = vmatpush1.bf16.xpose.msra.mxu0 0
    %2229 = vmatprep.subr.bf16.mxu0 0
    %2230 = vmatpush1.bf16.xpose.msra.mxu0 0
    %2231 = vmatprep.mubr.bf16.mxu0 0
    %2232 = vmatmul.mubr.bf16.gmra.mrb[0].mxu0 %v2194
    %v2233 = vpop.f32.mrb[0].mxu0
    %v2234 = vadd.f32 0.0, %v2233
    %v2235 = vpop.f32.mrb[0].mxu0
    %v2236 = vpop.f32.mrb[0].mxu0
    %v2237 = vadd.f32 0.0, %v2236
    %v2238 = vpop.f32.mrb[0].mxu0
    %2239 = vdwg.mxu0
    %2241 = vrot.lane.b32.xlu0 %v1889, 96
    %v2242 = vpop.permute.xlu0 %2241
    %v2244 = vsel %vm263, %v1889, 0
    %v2247 = vsel %vm263, %v2242, 0
    %2249 = vmatprep.subr.bf16.mxu0 0
    %2250 = vmatpush1.bf16.xpose.msra.mxu0 %v2247
    %2251 = vmatprep.subr.bf16.mxu0 0
    %2252 = vmatpush1.bf16.xpose.msra.mxu0 0
    %2253 = vmatprep.subr.bf16.mxu0 0
    %2254 = vmatpush1.bf16.xpose.msra.mxu0 0
    %2255 = vmatprep.subr.bf16.mxu0 0
    %2256 = vmatpush1.bf16.xpose.msra.mxu0 0
    %2257 = vmatprep.subr.bf16.mxu0 0
    %2258 = vmatpush1.bf16.xpose.msra.mxu0 0
    %2259 = vmatprep.subr.bf16.mxu0 0
    %2260 = vmatpush1.bf16.xpose.msra.mxu0 0
    %2261 = vmatprep.subr.bf16.mxu0 0
    %2262 = vmatpush1.bf16.xpose.msra.mxu0 0
    %2263 = vmatprep.subr.bf16.mxu0 0
    %2264 = vmatpush1.bf16.xpose.msra.mxu0 0
    %2265 = vmatprep.subr.bf16.mxu0 0
    %2266 = vmatpush1.bf16.xpose.msra.mxu0 0
    %2267 = vmatprep.subr.bf16.mxu0 0
    %2268 = vmatpush1.bf16.xpose.msra.mxu0 0
    %2269 = vmatprep.subr.bf16.mxu0 0
    %2270 = vmatpush1.bf16.xpose.msra.mxu0 0
    %2271 = vmatprep.subr.bf16.mxu0 0
    %2272 = vmatpush1.bf16.xpose.msra.mxu0 0
    %2273 = vmatprep.subr.bf16.mxu0 0
    %2274 = vmatpush1.bf16.xpose.msra.mxu0 0
    %2275 = vmatprep.subr.bf16.mxu0 0
    %2276 = vmatpush1.bf16.xpose.msra.mxu0 0
    %2277 = vmatprep.subr.bf16.mxu0 0
    %2278 = vmatpush1.bf16.xpose.msra.mxu0 0
    %2279 = vmatprep.subr.bf16.mxu0 0
    %2280 = vmatpush1.bf16.xpose.msra.mxu0 0
    %2281 = vmatprep.mubr.bf16.mxu0 0
    %2282 = vmatmul.mubr.bf16.gmra.mrb[0].mxu0 %v2244
    %v2283 = vpop.f32.mrb[0].mxu0
    %v2284 = vadd.f32 0.0, %v2283
    %v2285 = vpop.f32.mrb[0].mxu0
    %v2286 = vpop.f32.mrb[0].mxu0
    %v2287 = vadd.f32 0.0, %v2286
    %v2288 = vpop.f32.mrb[0].mxu0
    %2289 = vdwg.mxu0
    %v2290 = vmul.f32 %v1934, 0.35355338
    %v2291 = vmul.f32 %v1937, 0.35355338
    %v2292 = vmul.f32 %v1984, 0.35355338
    %v2293 = vmul.f32 %v1987, 0.35355338
    %v2294 = vmul.f32 %v2034, 0.35355338
    %v2295 = vmul.f32 %v2037, 0.35355338
    %v2296 = vmul.f32 %v2084, 0.35355338
    %v2297 = vmul.f32 %v2087, 0.35355338
    %v2298 = vmul.f32 %v2134, 0.35355338
    %v2299 = vmul.f32 %v2137, 0.35355338
    %v2300 = vmul.f32 %v2184, 0.35355338
    %v2301 = vmul.f32 %v2187, 0.35355338
    %v2302 = vmul.f32 %v2234, 0.35355338
    %v2303 = vmul.f32 %v2237, 0.35355338
    %v2304 = vmul.f32 %v2284, 0.35355338
    %v2305 = vmul.f32 %v2287, 0.35355338
    %v2306 = vsel %vm678, %v2290, -1e+30
    %v2307 = vsel %vm678, %v2291, -1e+30
    %v2308 = vsel %vm678, %v2292, -1e+30
    %v2309 = vsel %vm678, %v2293, -1e+30
    %v2310 = vsel %vm678, %v2294, -1e+30
    %v2311 = vsel %vm678, %v2295, -1e+30
    %v2312 = vsel %vm678, %v2296, -1e+30
    %v2313 = vsel %vm678, %v2297, -1e+30
    %v2314 = vsel %vm678, %v2298, -1e+30
    %v2315 = vsel %vm678, %v2299, -1e+30
    %v2316 = vsel %vm678, %v2300, -1e+30
    %v2317 = vsel %vm678, %v2301, -1e+30
    %v2318 = vsel %vm678, %v2302, -1e+30
    %v2319 = vsel %vm678, %v2303, -1e+30
    %v2320 = vsel %vm678, %v2304, -1e+30
    %v2321 = vsel %vm678, %v2305, -1e+30
    %v2322 = vsel %vm695, %v2306, -inf
    %2323 = vmax.xlane.f32.xlu0 %v2322
    %v2324 = vpop.xlane.xlu0 %2323
    %v2325 = vsel %vm695, %v2307, -inf
    %2326 = vmax.xlane.f32.xlu0 %v2325
    %v2327 = vpop.xlane.xlu0 %2326
    %v2328 = vsel %vm695, %v2308, -inf
    %2329 = vmax.xlane.f32.xlu0 %v2328
    %v2330 = vpop.xlane.xlu0 %2329
    %v2331 = vsel %vm695, %v2309, -inf
    %2332 = vmax.xlane.f32.xlu0 %v2331
    %v2333 = vpop.xlane.xlu0 %2332
    %v2334 = vsel %vm695, %v2310, -inf
    %2335 = vmax.xlane.f32.xlu0 %v2334
    %v2336 = vpop.xlane.xlu0 %2335
    %v2337 = vsel %vm695, %v2311, -inf
    %2338 = vmax.xlane.f32.xlu0 %v2337
    %v2339 = vpop.xlane.xlu0 %2338
    %v2340 = vsel %vm695, %v2312, -inf
    %2341 = vmax.xlane.f32.xlu0 %v2340
    %v2342 = vpop.xlane.xlu0 %2341
    %v2343 = vsel %vm695, %v2313, -inf
    %2344 = vmax.xlane.f32.xlu0 %v2343
    %v2345 = vpop.xlane.xlu0 %2344
    %v2346 = vsel %vm695, %v2314, -inf
    %2347 = vmax.xlane.f32.xlu0 %v2346
    %v2348 = vpop.xlane.xlu0 %2347
    %v2349 = vsel %vm695, %v2315, -inf
    %2350 = vmax.xlane.f32.xlu0 %v2349
    %v2351 = vpop.xlane.xlu0 %2350
    %v2352 = vsel %vm695, %v2316, -inf
    %2353 = vmax.xlane.f32.xlu0 %v2352
    %v2354 = vpop.xlane.xlu0 %2353
    %v2355 = vsel %vm695, %v2317, -inf
    %2356 = vmax.xlane.f32.xlu0 %v2355
    %v2357 = vpop.xlane.xlu0 %2356
    %v2358 = vsel %vm695, %v2318, -inf
    %2359 = vmax.xlane.f32.xlu0 %v2358
    %v2360 = vpop.xlane.xlu0 %2359
    %v2361 = vsel %vm695, %v2319, -inf
    %2362 = vmax.xlane.f32.xlu0 %v2361
    %v2363 = vpop.xlane.xlu0 %2362
    %v2364 = vsel %vm695, %v2320, -inf
    %2365 = vmax.xlane.f32.xlu0 %v2364
    %v2366 = vpop.xlane.xlu0 %2365
    %v2367 = vsel %vm695, %v2321, -inf
    %2368 = vmax.xlane.f32.xlu0 %v2367
    %v2369 = vpop.xlane.xlu0 %2368
    %v2370 = vsub.f32 %v2306, %v2324
    %v2371 = vsub.f32 %v2307, %v2327
    %v2372 = vsub.f32 %v2308, %v2330
    %v2373 = vsub.f32 %v2309, %v2333
    %v2374 = vsub.f32 %v2310, %v2336
    %v2375 = vsub.f32 %v2311, %v2339
    %v2376 = vsub.f32 %v2312, %v2342
    %v2377 = vsub.f32 %v2313, %v2345
    %v2378 = vsub.f32 %v2314, %v2348
    %v2379 = vsub.f32 %v2315, %v2351
    %v2380 = vsub.f32 %v2316, %v2354
    %v2381 = vsub.f32 %v2317, %v2357
    %v2382 = vsub.f32 %v2318, %v2360
    %v2383 = vsub.f32 %v2319, %v2363
    %v2384 = vsub.f32 %v2320, %v2366
    %v2385 = vsub.f32 %v2321, %v2369
    %v2386 = vmul.f32 %v2370, 1.442695
    %v2387 = vpow.pop %v2386
    %v2388 = vmul.f32 %v2371, 1.442695
    %v2389 = vpow.pop %v2388
    %v2390 = vmul.f32 %v2372, 1.442695
    %v2391 = vpow.pop %v2390
    %v2392 = vmul.f32 %v2373, 1.442695
    %v2393 = vpow.pop %v2392
    %v2394 = vmul.f32 %v2374, 1.442695
    %v2395 = vpow.pop %v2394
    %v2396 = vmul.f32 %v2375, 1.442695
    %v2397 = vpow.pop %v2396
    %v2398 = vmul.f32 %v2376, 1.442695
    %v2399 = vpow.pop %v2398
    %v2400 = vmul.f32 %v2377, 1.442695
    %v2401 = vpow.pop %v2400
    %v2402 = vmul.f32 %v2378, 1.442695
    %v2403 = vpow.pop %v2402
    %v2404 = vmul.f32 %v2379, 1.442695
    %v2405 = vpow.pop %v2404
    %v2406 = vmul.f32 %v2380, 1.442695
    %v2407 = vpow.pop %v2406
    %v2408 = vmul.f32 %v2381, 1.442695
    %v2409 = vpow.pop %v2408
    %v2410 = vmul.f32 %v2382, 1.442695
    %v2411 = vpow.pop %v2410
    %v2412 = vmul.f32 %v2383, 1.442695
    %v2413 = vpow.pop %v2412
    %v2414 = vmul.f32 %v2384, 1.442695
    %v2415 = vpow.pop %v2414
    %v2416 = vmul.f32 %v2385, 1.442695
    %v2417 = vpow.pop %v2416
    %v2418 = vsel %vm695, %v2387, 0.0
    %2419 = vadd.xlane.f32.xlu0 %v2418
    %v2420 = vpop.xlane.xlu0 %2419
    %v2421 = vsel %vm695, %v2389, 0.0
    %2422 = vadd.xlane.f32.xlu0 %v2421
    %v2423 = vpop.xlane.xlu0 %2422
    %v2424 = vsel %vm695, %v2391, 0.0
    %2425 = vadd.xlane.f32.xlu0 %v2424
    %v2426 = vpop.xlane.xlu0 %2425
    %v2427 = vsel %vm695, %v2393, 0.0
    %2428 = vadd.xlane.f32.xlu0 %v2427
    %v2429 = vpop.xlane.xlu0 %2428
    %v2430 = vsel %vm695, %v2395, 0.0
    %2431 = vadd.xlane.f32.xlu0 %v2430
    %v2432 = vpop.xlane.xlu0 %2431
    %v2433 = vsel %vm695, %v2397, 0.0
    %2434 = vadd.xlane.f32.xlu0 %v2433
    %v2435 = vpop.xlane.xlu0 %2434
    %v2436 = vsel %vm695, %v2399, 0.0
    %2437 = vadd.xlane.f32.xlu0 %v2436
    %v2438 = vpop.xlane.xlu0 %2437
    %v2439 = vsel %vm695, %v2401, 0.0
    %2440 = vadd.xlane.f32.xlu0 %v2439
    %v2441 = vpop.xlane.xlu0 %2440
    %v2442 = vsel %vm695, %v2403, 0.0
    %2443 = vadd.xlane.f32.xlu0 %v2442
    %v2444 = vpop.xlane.xlu0 %2443
    %v2445 = vsel %vm695, %v2405, 0.0
    %2446 = vadd.xlane.f32.xlu0 %v2445
    %v2447 = vpop.xlane.xlu0 %2446
    %v2448 = vsel %vm695, %v2407, 0.0
    %2449 = vadd.xlane.f32.xlu0 %v2448
    %v2450 = vpop.xlane.xlu0 %2449
    %v2451 = vsel %vm695, %v2409, 0.0
    %2452 = vadd.xlane.f32.xlu0 %v2451
    %v2453 = vpop.xlane.xlu0 %2452
    %v2454 = vsel %vm695, %v2411, 0.0
    %2455 = vadd.xlane.f32.xlu0 %v2454
    %v2456 = vpop.xlane.xlu0 %2455
    %v2457 = vsel %vm695, %v2413, 0.0
    %2458 = vadd.xlane.f32.xlu0 %v2457
    %v2459 = vpop.xlane.xlu0 %2458
    %v2460 = vsel %vm695, %v2415, 0.0
    %2461 = vadd.xlane.f32.xlu0 %v2460
    %v2462 = vpop.xlane.xlu0 %2461
    %v2463 = vsel %vm695, %v2417, 0.0
    %2464 = vadd.xlane.f32.xlu0 %v2463
    %v2465 = vpop.xlane.xlu0 %2464
    %v2466 = vrcp.pop %v2420
    %v2467 = vmul.f32 %v2387, %v2466
    %v2468 = vrcp.pop %v2423
    %v2469 = vmul.f32 %v2389, %v2468
    %v2470 = vrcp.pop %v2426
    %v2471 = vmul.f32 %v2391, %v2470
    %v2472 = vrcp.pop %v2429
    %v2473 = vmul.f32 %v2393, %v2472
    %v2474 = vrcp.pop %v2432
    %v2475 = vmul.f32 %v2395, %v2474
    %v2476 = vrcp.pop %v2435
    %v2477 = vmul.f32 %v2397, %v2476
    %v2478 = vrcp.pop %v2438
    %v2479 = vmul.f32 %v2399, %v2478
    %v2480 = vrcp.pop %v2441
    %v2481 = vmul.f32 %v2401, %v2480
    %v2482 = vrcp.pop %v2444
    %v2483 = vmul.f32 %v2403, %v2482
    %v2484 = vrcp.pop %v2447
    %v2485 = vmul.f32 %v2405, %v2484
    %v2486 = vrcp.pop %v2450
    %v2487 = vmul.f32 %v2407, %v2486
    %v2488 = vrcp.pop %v2453
    %v2489 = vmul.f32 %v2409, %v2488
    %v2490 = vrcp.pop %v2456
    %v2491 = vmul.f32 %v2411, %v2490
    %v2492 = vrcp.pop %v2459
    %v2493 = vmul.f32 %v2413, %v2492
    %v2494 = vrcp.pop %v2462
    %v2495 = vmul.f32 %v2415, %v2494
    %v2496 = vrcp.pop %v2465
    %v2497 = vmul.f32 %v2417, %v2496
    %v2498 = vpack.c.bf16 %v2469, %v2467
    %v2499 = vpack.c.bf16 %v2473, %v2471
    %v2500 = vpack.c.bf16 %v2477, %v2475
    %v2501 = vpack.c.bf16 %v2481, %v2479
    %v2502 = vpack.c.bf16 %v2485, %v2483
    %v2503 = vpack.c.bf16 %v2489, %v2487
    %v2504 = vpack.c.bf16 %v2493, %v2491
    %v2505 = vpack.c.bf16 %v2497, %v2495
    %2506 = vrot.lane.b32.xlu0 %v1882, 64
    %v2507 = vpop.permute.xlu0 %2506
    %v2510 = vsel %vm695, %v2498, 0
    %2512 = vmatprep.subr.bf16.mxu0 0
    %2513 = vmatpush1.bf16.msra.mxu0 %v2507
    %2514 = vmatprep.subr.bf16.mxu0 0
    %2515 = vmatpush1.bf16.msra.mxu0 0
    %2516 = vmatprep.subr.bf16.mxu0 0
    %2517 = vmatpush1.bf16.msra.mxu0 0
    %2518 = vmatprep.subr.bf16.mxu0 0
    %2519 = vmatpush1.bf16.msra.mxu0 0
    %2520 = vmatprep.subr.bf16.mxu0 0
    %2521 = vmatpush1.bf16.msra.mxu0 0
    %2522 = vmatprep.subr.bf16.mxu0 0
    %2523 = vmatpush1.bf16.msra.mxu0 0
    %2524 = vmatprep.subr.bf16.mxu0 0
    %2525 = vmatpush1.bf16.msra.mxu0 0
    %2526 = vmatprep.subr.bf16.mxu0 0
    %2527 = vmatpush1.bf16.msra.mxu0 0
    %2528 = vmatprep.subr.bf16.mxu0 0
    %2529 = vmatpush1.bf16.msra.mxu0 0
    %2530 = vmatprep.subr.bf16.mxu0 0
    %2531 = vmatpush1.bf16.msra.mxu0 0
    %2532 = vmatprep.subr.bf16.mxu0 0
    %2533 = vmatpush1.bf16.msra.mxu0 0
    %2534 = vmatprep.subr.bf16.mxu0 0
    %2535 = vmatpush1.bf16.msra.mxu0 0
    %2536 = vmatprep.subr.bf16.mxu0 0
    %2537 = vmatpush1.bf16.msra.mxu0 0
    %2538 = vmatprep.subr.bf16.mxu0 0
    %2539 = vmatpush1.bf16.msra.mxu0 0
    %2540 = vmatprep.subr.bf16.mxu0 0
    %2541 = vmatpush1.bf16.msra.mxu0 0
    %2542 = vmatprep.subr.bf16.mxu0 0
    %2543 = vmatpush1.bf16.msra.mxu0 0
    %2544 = vmatprep.mubr.bf16.mxu0 0
    %2545 = vmatmul.mubr.bf16.gmra.mrb[0].mxu0 %v2510
    %v2546 = vpop.f32.mrb[0].mxu0
    %v2547 = vadd.f32 0.0, %v2546
    %v2548 = vpop.f32.mrb[0].mxu0
    %v2549 = vpop.f32.mrb[0].mxu0
    %v2550 = vadd.f32 0.0, %v2549
    %v2551 = vpop.f32.mrb[0].mxu0
    %2552 = vdwg.mxu0
    %2553 = vrot.lane.b32.xlu0 %v1883, 64
    %v2554 = vpop.permute.xlu0 %2553
    %v2557 = vsel %vm695, %v2499, 0
    %2559 = vmatprep.subr.bf16.mxu0 0
    %2560 = vmatpush1.bf16.msra.mxu0 %v2554
    %2561 = vmatprep.subr.bf16.mxu0 0
    %2562 = vmatpush1.bf16.msra.mxu0 0
    %2563 = vmatprep.subr.bf16.mxu0 0
    %2564 = vmatpush1.bf16.msra.mxu0 0
    %2565 = vmatprep.subr.bf16.mxu0 0
    %2566 = vmatpush1.bf16.msra.mxu0 0
    %2567 = vmatprep.subr.bf16.mxu0 0
    %2568 = vmatpush1.bf16.msra.mxu0 0
    %2569 = vmatprep.subr.bf16.mxu0 0
    %2570 = vmatpush1.bf16.msra.mxu0 0
    %2571 = vmatprep.subr.bf16.mxu0 0
    %2572 = vmatpush1.bf16.msra.mxu0 0
    %2573 = vmatprep.subr.bf16.mxu0 0
    %2574 = vmatpush1.bf16.msra.mxu0 0
    %2575 = vmatprep.subr.bf16.mxu0 0
    %2576 = vmatpush1.bf16.msra.mxu0 0
    %2577 = vmatprep.subr.bf16.mxu0 0
    %2578 = vmatpush1.bf16.msra.mxu0 0
    %2579 = vmatprep.subr.bf16.mxu0 0
    %2580 = vmatpush1.bf16.msra.mxu0 0
    %2581 = vmatprep.subr.bf16.mxu0 0
    %2582 = vmatpush1.bf16.msra.mxu0 0
    %2583 = vmatprep.subr.bf16.mxu0 0
    %2584 = vmatpush1.bf16.msra.mxu0 0
    %2585 = vmatprep.subr.bf16.mxu0 0
    %2586 = vmatpush1.bf16.msra.mxu0 0
    %2587 = vmatprep.subr.bf16.mxu0 0
    %2588 = vmatpush1.bf16.msra.mxu0 0
    %2589 = vmatprep.subr.bf16.mxu0 0
    %2590 = vmatpush1.bf16.msra.mxu0 0
    %2591 = vmatprep.mubr.bf16.mxu0 0
    %2592 = vmatmul.mubr.bf16.gmra.mrb[0].mxu0 %v2557
    %v2593 = vpop.f32.mrb[0].mxu0
    %v2594 = vadd.f32 0.0, %v2593
    %v2595 = vpop.f32.mrb[0].mxu0
    %v2596 = vpop.f32.mrb[0].mxu0
    %v2597 = vadd.f32 0.0, %v2596
    %v2598 = vpop.f32.mrb[0].mxu0
    %2599 = vdwg.mxu0
    %2600 = vrot.lane.b32.xlu0 %v1884, 64
    %v2601 = vpop.permute.xlu0 %2600
    %v2604 = vsel %vm695, %v2500, 0
    %2606 = vmatprep.subr.bf16.mxu0 0
    %2607 = vmatpush1.bf16.msra.mxu0 %v2601
    %2608 = vmatprep.subr.bf16.mxu0 0
    %2609 = vmatpush1.bf16.msra.mxu0 0
    %2610 = vmatprep.subr.bf16.mxu0 0
    %2611 = vmatpush1.bf16.msra.mxu0 0
    %2612 = vmatprep.subr.bf16.mxu0 0
    %2613 = vmatpush1.bf16.msra.mxu0 0
    %2614 = vmatprep.subr.bf16.mxu0 0
    %2615 = vmatpush1.bf16.msra.mxu0 0
    %2616 = vmatprep.subr.bf16.mxu0 0
    %2617 = vmatpush1.bf16.msra.mxu0 0
    %2618 = vmatprep.subr.bf16.mxu0 0
    %2619 = vmatpush1.bf16.msra.mxu0 0
    %2620 = vmatprep.subr.bf16.mxu0 0
    %2621 = vmatpush1.bf16.msra.mxu0 0
    %2622 = vmatprep.subr.bf16.mxu0 0
    %2623 = vmatpush1.bf16.msra.mxu0 0
    %2624 = vmatprep.subr.bf16.mxu0 0
    %2625 = vmatpush1.bf16.msra.mxu0 0
    %2626 = vmatprep.subr.bf16.mxu0 0
    %2627 = vmatpush1.bf16.msra.mxu0 0
    %2628 = vmatprep.subr.bf16.mxu0 0
    %2629 = vmatpush1.bf16.msra.mxu0 0
    %2630 = vmatprep.subr.bf16.mxu0 0
    %2631 = vmatpush1.bf16.msra.mxu0 0
    %2632 = vmatprep.subr.bf16.mxu0 0
    %2633 = vmatpush1.bf16.msra.mxu0 0
    %2634 = vmatprep.subr.bf16.mxu0 0
    %2635 = vmatpush1.bf16.msra.mxu0 0
    %2636 = vmatprep.subr.bf16.mxu0 0
    %2637 = vmatpush1.bf16.msra.mxu0 0
    %2638 = vmatprep.mubr.bf16.mxu0 0
    %2639 = vmatmul.mubr.bf16.gmra.mrb[0].mxu0 %v2604
    %v2640 = vpop.f32.mrb[0].mxu0
    %v2641 = vadd.f32 0.0, %v2640
    %v2642 = vpop.f32.mrb[0].mxu0
    %v2643 = vpop.f32.mrb[0].mxu0
    %v2644 = vadd.f32 0.0, %v2643
    %v2645 = vpop.f32.mrb[0].mxu0
    %2646 = vdwg.mxu0
    %2647 = vrot.lane.b32.xlu0 %v1885, 64
    %v2648 = vpop.permute.xlu0 %2647
    %v2651 = vsel %vm695, %v2501, 0
    %2653 = vmatprep.subr.bf16.mxu0 0
    %2654 = vmatpush1.bf16.msra.mxu0 %v2648
    %2655 = vmatprep.subr.bf16.mxu0 0
    %2656 = vmatpush1.bf16.msra.mxu0 0
    %2657 = vmatprep.subr.bf16.mxu0 0
    %2658 = vmatpush1.bf16.msra.mxu0 0
    %2659 = vmatprep.subr.bf16.mxu0 0
    %2660 = vmatpush1.bf16.msra.mxu0 0
    %2661 = vmatprep.subr.bf16.mxu0 0
    %2662 = vmatpush1.bf16.msra.mxu0 0
    %2663 = vmatprep.subr.bf16.mxu0 0
    %2664 = vmatpush1.bf16.msra.mxu0 0
    %2665 = vmatprep.subr.bf16.mxu0 0
    %2666 = vmatpush1.bf16.msra.mxu0 0
    %2667 = vmatprep.subr.bf16.mxu0 0
    %2668 = vmatpush1.bf16.msra.mxu0 0
    %2669 = vmatprep.subr.bf16.mxu0 0
    %2670 = vmatpush1.bf16.msra.mxu0 0
    %2671 = vmatprep.subr.bf16.mxu0 0
    %2672 = vmatpush1.bf16.msra.mxu0 0
    %2673 = vmatprep.subr.bf16.mxu0 0
    %2674 = vmatpush1.bf16.msra.mxu0 0
    %2675 = vmatprep.subr.bf16.mxu0 0
    %2676 = vmatpush1.bf16.msra.mxu0 0
    %2677 = vmatprep.subr.bf16.mxu0 0
    %2678 = vmatpush1.bf16.msra.mxu0 0
    %2679 = vmatprep.subr.bf16.mxu0 0
    %2680 = vmatpush1.bf16.msra.mxu0 0
    %2681 = vmatprep.subr.bf16.mxu0 0
    %2682 = vmatpush1.bf16.msra.mxu0 0
    %2683 = vmatprep.subr.bf16.mxu0 0
    %2684 = vmatpush1.bf16.msra.mxu0 0
    %2685 = vmatprep.mubr.bf16.mxu0 0
    %2686 = vmatmul.mubr.bf16.gmra.mrb[0].mxu0 %v2651
    %v2687 = vpop.f32.mrb[0].mxu0
    %v2688 = vadd.f32 0.0, %v2687
    %v2689 = vpop.f32.mrb[0].mxu0
    %v2690 = vpop.f32.mrb[0].mxu0
    %v2691 = vadd.f32 0.0, %v2690
    %v2692 = vpop.f32.mrb[0].mxu0
    %2693 = vdwg.mxu0
    %2694 = vrot.lane.b32.xlu0 %v1886, 64
    %v2695 = vpop.permute.xlu0 %2694
    %v2698 = vsel %vm695, %v2502, 0
    %2700 = vmatprep.subr.bf16.mxu0 0
    %2701 = vmatpush1.bf16.msra.mxu0 %v2695
    %2702 = vmatprep.subr.bf16.mxu0 0
    %2703 = vmatpush1.bf16.msra.mxu0 0
    %2704 = vmatprep.subr.bf16.mxu0 0
    %2705 = vmatpush1.bf16.msra.mxu0 0
    %2706 = vmatprep.subr.bf16.mxu0 0
    %2707 = vmatpush1.bf16.msra.mxu0 0
    %2708 = vmatprep.subr.bf16.mxu0 0
    %2709 = vmatpush1.bf16.msra.mxu0 0
    %2710 = vmatprep.subr.bf16.mxu0 0
    %2711 = vmatpush1.bf16.msra.mxu0 0
    %2712 = vmatprep.subr.bf16.mxu0 0
    %2713 = vmatpush1.bf16.msra.mxu0 0
    %2714 = vmatprep.subr.bf16.mxu0 0
    %2715 = vmatpush1.bf16.msra.mxu0 0
    %2716 = vmatprep.subr.bf16.mxu0 0
    %2717 = vmatpush1.bf16.msra.mxu0 0
    %2718 = vmatprep.subr.bf16.mxu0 0
    %2719 = vmatpush1.bf16.msra.mxu0 0
    %2720 = vmatprep.subr.bf16.mxu0 0
    %2721 = vmatpush1.bf16.msra.mxu0 0
    %2722 = vmatprep.subr.bf16.mxu0 0
    %2723 = vmatpush1.bf16.msra.mxu0 0
    %2724 = vmatprep.subr.bf16.mxu0 0
    %2725 = vmatpush1.bf16.msra.mxu0 0
    %2726 = vmatprep.subr.bf16.mxu0 0
    %2727 = vmatpush1.bf16.msra.mxu0 0
    %2728 = vmatprep.subr.bf16.mxu0 0
    %2729 = vmatpush1.bf16.msra.mxu0 0
    %2730 = vmatprep.subr.bf16.mxu0 0
    %2731 = vmatpush1.bf16.msra.mxu0 0
    %2732 = vmatprep.mubr.bf16.mxu0 0
    %2733 = vmatmul.mubr.bf16.gmra.mrb[0].mxu0 %v2698
    %v2734 = vpop.f32.mrb[0].mxu0
    %v2735 = vadd.f32 0.0, %v2734
    %v2736 = vpop.f32.mrb[0].mxu0
    %v2737 = vpop.f32.mrb[0].mxu0
    %v2738 = vadd.f32 0.0, %v2737
    %v2739 = vpop.f32.mrb[0].mxu0
    %2740 = vdwg.mxu0
    %2741 = vrot.lane.b32.xlu0 %v1887, 64
    %v2742 = vpop.permute.xlu0 %2741
    %v2745 = vsel %vm695, %v2503, 0
    %2747 = vmatprep.subr.bf16.mxu0 0
    %2748 = vmatpush1.bf16.msra.mxu0 %v2742
    %2749 = vmatprep.subr.bf16.mxu0 0
    %2750 = vmatpush1.bf16.msra.mxu0 0
    %2751 = vmatprep.subr.bf16.mxu0 0
    %2752 = vmatpush1.bf16.msra.mxu0 0
    %2753 = vmatprep.subr.bf16.mxu0 0
    %2754 = vmatpush1.bf16.msra.mxu0 0
    %2755 = vmatprep.subr.bf16.mxu0 0
    %2756 = vmatpush1.bf16.msra.mxu0 0
    %2757 = vmatprep.subr.bf16.mxu0 0
    %2758 = vmatpush1.bf16.msra.mxu0 0
    %2759 = vmatprep.subr.bf16.mxu0 0
    %2760 = vmatpush1.bf16.msra.mxu0 0
    %2761 = vmatprep.subr.bf16.mxu0 0
    %2762 = vmatpush1.bf16.msra.mxu0 0
    %2763 = vmatprep.subr.bf16.mxu0 0
    %2764 = vmatpush1.bf16.msra.mxu0 0
    %2765 = vmatprep.subr.bf16.mxu0 0
    %2766 = vmatpush1.bf16.msra.mxu0 0
    %2767 = vmatprep.subr.bf16.mxu0 0
    %2768 = vmatpush1.bf16.msra.mxu0 0
    %2769 = vmatprep.subr.bf16.mxu0 0
    %2770 = vmatpush1.bf16.msra.mxu0 0
    %2771 = vmatprep.subr.bf16.mxu0 0
    %2772 = vmatpush1.bf16.msra.mxu0 0
    %2773 = vmatprep.subr.bf16.mxu0 0
    %2774 = vmatpush1.bf16.msra.mxu0 0
    %2775 = vmatprep.subr.bf16.mxu0 0
    %2776 = vmatpush1.bf16.msra.mxu0 0
    %2777 = vmatprep.subr.bf16.mxu0 0
    %2778 = vmatpush1.bf16.msra.mxu0 0
    %2779 = vmatprep.mubr.bf16.mxu0 0
    %2780 = vmatmul.mubr.bf16.gmra.mrb[0].mxu0 %v2745
    %v2781 = vpop.f32.mrb[0].mxu0
    %v2782 = vadd.f32 0.0, %v2781
    %v2783 = vpop.f32.mrb[0].mxu0
    %v2784 = vpop.f32.mrb[0].mxu0
    %v2785 = vadd.f32 0.0, %v2784
    %v2786 = vpop.f32.mrb[0].mxu0
    %2787 = vdwg.mxu0
    %2788 = vrot.lane.b32.xlu0 %v1888, 64
    %v2789 = vpop.permute.xlu0 %2788
    %v2792 = vsel %vm695, %v2504, 0
    %2794 = vmatprep.subr.bf16.mxu0 0
    %2795 = vmatpush1.bf16.msra.mxu0 %v2789
    %2796 = vmatprep.subr.bf16.mxu0 0
    %2797 = vmatpush1.bf16.msra.mxu0 0
    %2798 = vmatprep.subr.bf16.mxu0 0
    %2799 = vmatpush1.bf16.msra.mxu0 0
    %2800 = vmatprep.subr.bf16.mxu0 0
    %2801 = vmatpush1.bf16.msra.mxu0 0
    %2802 = vmatprep.subr.bf16.mxu0 0
    %2803 = vmatpush1.bf16.msra.mxu0 0
    %2804 = vmatprep.subr.bf16.mxu0 0
    %2805 = vmatpush1.bf16.msra.mxu0 0
    %2806 = vmatprep.subr.bf16.mxu0 0
    %2807 = vmatpush1.bf16.msra.mxu0 0
    %2808 = vmatprep.subr.bf16.mxu0 0
    %2809 = vmatpush1.bf16.msra.mxu0 0
    %2810 = vmatprep.subr.bf16.mxu0 0
    %2811 = vmatpush1.bf16.msra.mxu0 0
    %2812 = vmatprep.subr.bf16.mxu0 0
    %2813 = vmatpush1.bf16.msra.mxu0 0
    %2814 = vmatprep.subr.bf16.mxu0 0
    %2815 = vmatpush1.bf16.msra.mxu0 0
    %2816 = vmatprep.subr.bf16.mxu0 0
    %2817 = vmatpush1.bf16.msra.mxu0 0
    %2818 = vmatprep.subr.bf16.mxu0 0
    %2819 = vmatpush1.bf16.msra.mxu0 0
    %2820 = vmatprep.subr.bf16.mxu0 0
    %2821 = vmatpush1.bf16.msra.mxu0 0
    %2822 = vmatprep.subr.bf16.mxu0 0
    %2823 = vmatpush1.bf16.msra.mxu0 0
    %2824 = vmatprep.subr.bf16.mxu0 0
    %2825 = vmatpush1.bf16.msra.mxu0 0
    %2826 = vmatprep.mubr.bf16.mxu0 0
    %2827 = vmatmul.mubr.bf16.gmra.mrb[0].mxu0 %v2792
    %v2828 = vpop.f32.mrb[0].mxu0
    %v2829 = vadd.f32 0.0, %v2828
    %v2830 = vpop.f32.mrb[0].mxu0
    %v2831 = vpop.f32.mrb[0].mxu0
    %v2832 = vadd.f32 0.0, %v2831
    %v2833 = vpop.f32.mrb[0].mxu0
    %2834 = vdwg.mxu0
    %2835 = vrot.lane.b32.xlu0 %v1889, 64
    %v2836 = vpop.permute.xlu0 %2835
    %v2839 = vsel %vm695, %v2505, 0
    %2841 = vmatprep.subr.bf16.mxu0 0
    %2842 = vmatpush1.bf16.msra.mxu0 %v2836
    %2843 = vmatprep.subr.bf16.mxu0 0
    %2844 = vmatpush1.bf16.msra.mxu0 0
    %2845 = vmatprep.subr.bf16.mxu0 0
    %2846 = vmatpush1.bf16.msra.mxu0 0
    %2847 = vmatprep.subr.bf16.mxu0 0
    %2848 = vmatpush1.bf16.msra.mxu0 0
    %2849 = vmatprep.subr.bf16.mxu0 0
    %2850 = vmatpush1.bf16.msra.mxu0 0
    %2851 = vmatprep.subr.bf16.mxu0 0
    %2852 = vmatpush1.bf16.msra.mxu0 0
    %2853 = vmatprep.subr.bf16.mxu0 0
    %2854 = vmatpush1.bf16.msra.mxu0 0
    %2855 = vmatprep.subr.bf16.mxu0 0
    %2856 = vmatpush1.bf16.msra.mxu0 0
    %2857 = vmatprep.subr.bf16.mxu0 0
    %2858 = vmatpush1.bf16.msra.mxu0 0
    %2859 = vmatprep.subr.bf16.mxu0 0
    %2860 = vmatpush1.bf16.msra.mxu0 0
    %2861 = vmatprep.subr.bf16.mxu0 0
    %2862 = vmatpush1.bf16.msra.mxu0 0
    %2863 = vmatprep.subr.bf16.mxu0 0
    %2864 = vmatpush1.bf16.msra.mxu0 0
    %2865 = vmatprep.subr.bf16.mxu0 0
    %2866 = vmatpush1.bf16.msra.mxu0 0
    %2867 = vmatprep.subr.bf16.mxu0 0
    %2868 = vmatpush1.bf16.msra.mxu0 0
    %2869 = vmatprep.subr.bf16.mxu0 0
    %2870 = vmatpush1.bf16.msra.mxu0 0
    %2871 = vmatprep.subr.bf16.mxu0 0
    %2872 = vmatpush1.bf16.msra.mxu0 0
    %2873 = vmatprep.mubr.bf16.mxu0 0
    %2874 = vmatmul.mubr.bf16.gmra.mrb[0].mxu0 %v2839
    %v2875 = vpop.f32.mrb[0].mxu0
    %v2876 = vadd.f32 0.0, %v2875
    %v2877 = vpop.f32.mrb[0].mxu0
    %v2878 = vpop.f32.mrb[0].mxu0
    %v2879 = vadd.f32 0.0, %v2878
    %v2880 = vpop.f32.mrb[0].mxu0
    %2881 = vdwg.mxu0
    %2886 = vrot.lane.b32.xlu0 %v2641, 8
    %v2887 = vpop.permute.xlu0 %2886
    %2888 = vrot.lane.b32.xlu0 %v2644, 8
    %v2889 = vpop.permute.xlu0 %2888
    %2890 = vrot.lane.b32.xlu0 %v2688, 8
    %v2891 = vpop.permute.xlu0 %2890
    %2892 = vrot.lane.b32.xlu0 %v2691, 8
    %v2893 = vpop.permute.xlu0 %2892
    %2902 = vrot.lane.b32.xlu0 %v2735, 16
    %v2903 = vpop.permute.xlu0 %2902
    %2904 = vrot.lane.b32.xlu0 %v2738, 16
    %v2905 = vpop.permute.xlu0 %2904
    %2906 = vrot.lane.b32.xlu0 %v2782, 16
    %v2907 = vpop.permute.xlu0 %2906
    %2908 = vrot.lane.b32.xlu0 %v2785, 16
    %v2909 = vpop.permute.xlu0 %2908
    %2918 = vrot.lane.b32.xlu0 %v2829, 24
    %v2919 = vpop.permute.xlu0 %2918
    %2920 = vrot.lane.b32.xlu0 %v2832, 24
    %v2921 = vpop.permute.xlu0 %2920
    %2922 = vrot.lane.b32.xlu0 %v2876, 24
    %v2923 = vpop.permute.xlu0 %2922
    %2924 = vrot.lane.b32.xlu0 %v2879, 24
    %v2925 = vpop.permute.xlu0 %2924
    %v2930 = vsel %vm263, %v2547, %v2887
    %v2931 = vsel %vm263, %v2550, %v2889
    %v2932 = vsel %vm263, %v2594, %v2891
    %v2933 = vsel %vm263, %v2597, %v2893
    %v2934 = vsel %vm695, %v2930, %v2903
    %v2935 = vsel %vm695, %v2931, %v2905
    %v2936 = vsel %vm695, %v2932, %v2907
    %v2937 = vsel %vm695, %v2933, %v2909
    %v2938 = vsel %vm1312, %v2934, %v2919
    %v2939 = vsel %vm1312, %v2935, %v2921
    %v2940 = vsel %vm1312, %v2936, %v2923
    %v2941 = vsel %vm1312, %v2937, %v2925
    %v2942 = vpack.c.bf16 %v2939, %v2938
    %v2943 = vpack.c.bf16 %v2941, %v2940
    %s2944 = scalar_lea.vmem %s6, 16
    %v2945 = vld [vmem:[%s2944] sm:$0xf]
    %v2946 = vld [vmem:[%s2944 + $0x4] sm:$0xf]
    %v2947 = vld [vmem:[%s2944 + $0x8] sm:$0xf]
    %v2948 = vld [vmem:[%s2944 + $0xc] sm:$0xf]
    %s2949 = scalar_lea.vmem %s7, 1
    %v2950 = vld [vmem:[%s2949] sm:$0x1]
    %v2952 = vlaneseq
    %v2953 = vshrl.u32 %v2952, 7
    %v2954 = vsub.s32 0, %v2953
    %v2955 = vrot.slane %v2950, %v2954
    %v2961 = vunpack.c.l.b16 %v2945
    %v2962 = vunpack.c.l.b16 %v2946
    %v2963 = vunpack.c.l.b16 %v2947
    %v2964 = vunpack.c.l.b16 %v2948
    %v2965 = vpack.c.b16 %v2962, %v2961
    %v2966 = vpack.c.b16 %v2964, %v2963
    %v2970 = vsel %vm156, %v2942, 0
    %v2973 = vsel %vm156, %v2943, 0
    %2975 = vmatprep.subr.bf16.mxu0 0
    %2976 = vmatpush1.bf16.msra.mxu0 %v2965
    %2977 = vmatprep.subr.bf16.mxu0 0
    %2978 = vmatpush1.bf16.msra.mxu0 %v2966
    %2979 = vmatprep.subr.bf16.mxu0 0
    %2980 = vmatpush1.bf16.msra.mxu0 0
    %2981 = vmatprep.subr.bf16.mxu0 0
    %2982 = vmatpush1.bf16.msra.mxu0 0
    %2983 = vmatprep.subr.bf16.mxu0 0
    %2984 = vmatpush1.bf16.msra.mxu0 0
    %2985 = vmatprep.subr.bf16.mxu0 0
    %2986 = vmatpush1.bf16.msra.mxu0 0
    %2987 = vmatprep.subr.bf16.mxu0 0
    %2988 = vmatpush1.bf16.msra.mxu0 0
    %2989 = vmatprep.subr.bf16.mxu0 0
    %2990 = vmatpush1.bf16.msra.mxu0 0
    %2991 = vmatprep.subr.bf16.mxu0 0
    %2992 = vmatpush1.bf16.msra.mxu0 0
    %2993 = vmatprep.subr.bf16.mxu0 0
    %2994 = vmatpush1.bf16.msra.mxu0 0
    %2995 = vmatprep.subr.bf16.mxu0 0
    %2996 = vmatpush1.bf16.msra.mxu0 0
    %2997 = vmatprep.subr.bf16.mxu0 0
    %2998 = vmatpush1.bf16.msra.mxu0 0
    %2999 = vmatprep.subr.bf16.mxu0 0
    %3000 = vmatpush1.bf16.msra.mxu0 0
    %3001 = vmatprep.subr.bf16.mxu0 0
    %3002 = vmatpush1.bf16.msra.mxu0 0
    %3003 = vmatprep.subr.bf16.mxu0 0
    %3004 = vmatpush1.bf16.msra.mxu0 0
    %3005 = vmatprep.subr.bf16.mxu0 0
    %3006 = vmatpush1.bf16.msra.mxu0 0
    %3007 = vmatprep.mubr.bf16.mxu0 0
    %3008 = vmatmul.mubr.bf16.gmra.mrb[0].mxu0 %v2970
    %v3009 = vpop.f32.mrb[0].mxu0
    %v3010 = vadd.f32 %v2955, %v3009
    %v3011 = vpop.f32.mrb[0].mxu0
    %v3012 = vpop.f32.mrb[0].mxu0
    %v3013 = vadd.f32 %v2955, %v3012
    %v3014 = vpop.f32.mrb[0].mxu0
    %3015 = vmatprep.mubr.bf16.mxu0 0
    %3016 = vmatmul.mubr.bf16.gmra.mrb[0].mxu0 %v2973
    %v3017 = vpop.f32.mrb[0].mxu0
    %v3018 = vadd.f32 %v2955, %v3017
    %v3019 = vpop.f32.mrb[0].mxu0
    %v3020 = vpop.f32.mrb[0].mxu0
    %v3021 = vadd.f32 %v2955, %v3020
    %v3022 = vpop.f32.mrb[0].mxu0
    %3023 = vdwg.mxu0
    %v3024 = vadd.f32 %v1756, %v3010
    %v3025 = vadd.f32 %v1757, %v3013
    %v3026 = vadd.f32 %v1758, %v3018
    %v3027 = vadd.f32 %v1759, %v3021
    %s3028 = scalar_lea.vmem %s8, 1
    %v3029 = vld [vmem:[%s3028] sm:$0x1]
    %s3030 = scalar_lea.vmem %s9, 1
    %v3031 = vld [vmem:[%s3030] sm:$0x1]
    %v3032 = vsel %vm156, %v3024, 0.0
    %3033 = vadd.xlane.f32.xlu0 %v3032
    %v3034 = vpop.xlane.xlu0 %3033
    %v3035 = vsel %vm156, %v3025, 0.0
    %3036 = vadd.xlane.f32.xlu0 %v3035
    %v3037 = vpop.xlane.xlu0 %3036
    %v3038 = vsel %vm156, %v3026, 0.0
    %3039 = vadd.xlane.f32.xlu0 %v3038
    %v3040 = vpop.xlane.xlu0 %3039
    %v3041 = vsel %vm156, %v3027, 0.0
    %3042 = vadd.xlane.f32.xlu0 %v3041
    %v3043 = vpop.xlane.xlu0 %3042
    %v3044 = vmul.f32 %v3034, %v1415
    %v3045 = vmul.f32 %v3037, %v1415
    %v3046 = vmul.f32 %v3040, %v1415
    %v3047 = vmul.f32 %v3043, %v1415
    %v3048 = vsub.f32 %v3024, %v3044
    %v3049 = vsub.f32 %v3025, %v3045
    %v3050 = vsub.f32 %v3026, %v3046
    %v3051 = vsub.f32 %v3027, %v3047
    %v3052 = vmul.f32 %v3048, %v3048
    %v3053 = vmul.f32 %v3049, %v3049
    %v3054 = vmul.f32 %v3050, %v3050
    %v3055 = vmul.f32 %v3051, %v3051
    %v3056 = vsel %vm156, %v3052, 0.0
    %3057 = vadd.xlane.f32.xlu0 %v3056
    %v3058 = vpop.xlane.xlu0 %3057
    %v3059 = vsel %vm156, %v3053, 0.0
    %3060 = vadd.xlane.f32.xlu0 %v3059
    %v3061 = vpop.xlane.xlu0 %3060
    %v3062 = vsel %vm156, %v3054, 0.0
    %3063 = vadd.xlane.f32.xlu0 %v3062
    %v3064 = vpop.xlane.xlu0 %3063
    %v3065 = vsel %vm156, %v3055, 0.0
    %3066 = vadd.xlane.f32.xlu0 %v3065
    %v3067 = vpop.xlane.xlu0 %3066
    %v3068 = vmul.f32 %v3058, %v1415
    %v3069 = vmul.f32 %v3061, %v1415
    %v3070 = vmul.f32 %v3064, %v1415
    %v3071 = vmul.f32 %v3067, %v1415
    %v3072 = vadd.f32 %v3068, 1e-05
    %v3073 = vadd.f32 %v3069, 1e-05
    %v3074 = vadd.f32 %v3070, 1e-05
    %v3075 = vadd.f32 %v3071, 1e-05
    %v3076 = vrsqrt.pop %v3072
    %v3077 = vrsqrt.pop %v3073
    %v3078 = vrsqrt.pop %v3074
    %v3079 = vrsqrt.pop %v3075
    %v3080 = vmul.f32 %v3048, %v3076
    %v3081 = vmul.f32 %v3049, %v3077
    %v3082 = vmul.f32 %v3050, %v3078
    %v3083 = vmul.f32 %v3051, %v3079
    %v3085 = vlaneseq
    %v3086 = vshrl.u32 %v3085, 7
    %v3087 = vsub.s32 0, %v3086
    %v3088 = vrot.slane %v3029, %v3087
    %v3090 = vmul.f32 %v3080, %v3088
    %v3091 = vmul.f32 %v3081, %v3088
    %v3092 = vmul.f32 %v3082, %v3088
    %v3093 = vmul.f32 %v3083, %v3088
    %v3095 = vlaneseq
    %v3096 = vshrl.u32 %v3095, 7
    %v3097 = vsub.s32 0, %v3096
    %v3098 = vrot.slane %v3031, %v3097
    %v3100 = vadd.f32 %v3090, %v3098
    %v3101 = vadd.f32 %v3091, %v3098
    %v3102 = vadd.f32 %v3092, %v3098
    %v3103 = vadd.f32 %v3093, %v3098
    %v3104 = vpack.c.bf16 %v3101, %v3100
    %v3105 = vpack.c.bf16 %v3103, %v3102
    %s3106 = scalar_lea.vmem %s12, 16
    %v3107 = vld [vmem:[%s3106] sm:$0xf]
    %v3108 = vld [vmem:[%s3106 + $0x4] sm:$0xf]
    %v3109 = vld [vmem:[%s3106 + $0x8] sm:$0xf]
    %v3110 = vld [vmem:[%s3106 + $0xc] sm:$0xf]
    %s3111 = scalar_lea.vmem %s13, 1
    %v3112 = vld [vmem:[%s3111] sm:$0x1]
    %v3114 = vlaneseq
    %v3115 = vshrl.u32 %v3114, 7
    %v3116 = vsub.s32 0, %v3115
    %v3117 = vrot.slane %v3112, %v3116
    %v3123 = vunpack.c.l.b16 %v3107
    %v3124 = vunpack.c.l.b16 %v3108
    %v3125 = vunpack.c.l.b16 %v3109
    %v3126 = vunpack.c.l.b16 %v3110
    %v3127 = vpack.c.b16 %v3124, %v3123
    %v3128 = vpack.c.b16 %v3126, %v3125
    %v3132 = vsel %vm156, %v3104, 0
    %v3135 = vsel %vm156, %v3105, 0
    %3137 = vmatprep.subr.bf16.mxu0 0
    %3138 = vmatpush1.bf16.msra.mxu0 %v3127
    %3139 = vmatprep.subr.bf16.mxu0 0
    %3140 = vmatpush1.bf16.msra.mxu0 %v3128
    %3141 = vmatprep.subr.bf16.mxu0 0
    %3142 = vmatpush1.bf16.msra.mxu0 0
    %3143 = vmatprep.subr.bf16.mxu0 0
    %3144 = vmatpush1.bf16.msra.mxu0 0
    %3145 = vmatprep.subr.bf16.mxu0 0
    %3146 = vmatpush1.bf16.msra.mxu0 0
    %3147 = vmatprep.subr.bf16.mxu0 0
    %3148 = vmatpush1.bf16.msra.mxu0 0
    %3149 = vmatprep.subr.bf16.mxu0 0
    %3150 = vmatpush1.bf16.msra.mxu0 0
    %3151 = vmatprep.subr.bf16.mxu0 0
    %3152 = vmatpush1.bf16.msra.mxu0 0
    %3153 = vmatprep.subr.bf16.mxu0 0
    %3154 = vmatpush1.bf16.msra.mxu0 0
    %3155 = vmatprep.subr.bf16.mxu0 0
    %3156 = vmatpush1.bf16.msra.mxu0 0
    %3157 = vmatprep.subr.bf16.mxu0 0
    %3158 = vmatpush1.bf16.msra.mxu0 0
    %3159 = vmatprep.subr.bf16.mxu0 0
    %3160 = vmatpush1.bf16.msra.mxu0 0
    %3161 = vmatprep.subr.bf16.mxu0 0
    %3162 = vmatpush1.bf16.msra.mxu0 0
    %3163 = vmatprep.subr.bf16.mxu0 0
    %3164 = vmatpush1.bf16.msra.mxu0 0
    %3165 = vmatprep.subr.bf16.mxu0 0
    %3166 = vmatpush1.bf16.msra.mxu0 0
    %3167 = vmatprep.subr.bf16.mxu0 0
    %3168 = vmatpush1.bf16.msra.mxu0 0
    %3169 = vmatprep.mubr.bf16.mxu0 0
    %3170 = vmatmul.mubr.bf16.gmra.mrb[0].mxu0 %v3132
    %v3171 = vpop.f32.mrb[0].mxu0
    %v3172 = vadd.f32 %v3117, %v3171
    %v3173 = vpop.f32.mrb[0].mxu0
    %v3174 = vpop.f32.mrb[0].mxu0
    %v3175 = vadd.f32 %v3117, %v3174
    %v3176 = vpop.f32.mrb[0].mxu0
    %3177 = vmatprep.mubr.bf16.mxu0 0
    %3178 = vmatmul.mubr.bf16.gmra.mrb[0].mxu0 %v3135
    %v3179 = vpop.f32.mrb[0].mxu0
    %v3180 = vadd.f32 %v3117, %v3179
    %v3181 = vpop.f32.mrb[0].mxu0
    %v3182 = vpop.f32.mrb[0].mxu0
    %v3183 = vadd.f32 %v3117, %v3182
    %v3184 = vpop.f32.mrb[0].mxu0
    %3185 = vdwg.mxu0
    %v3186 = vmax.f32 %v3172, 0.0
    %v3187 = vmax.f32 %v3175, 0.0
    %v3188 = vmax.f32 %v3180, 0.0
    %v3189 = vmax.f32 %v3183, 0.0
    %v3190 = vpack.c.bf16 %v3187, %v3186
    %v3191 = vpack.c.bf16 %v3189, %v3188
    %s3192 = scalar_lea.vmem %s14, 64
    %v3193 = vld [vmem:[%s3192] sm:$0xf]
    %v3194 = vld [vmem:[%s3192 + $0x4] sm:$0xf]
    %v3195 = vld [vmem:[%s3192 + $0x8] sm:$0xf]
    %v3196 = vld [vmem:[%s3192 + $0xc] sm:$0xf]
    %v3197 = vld [vmem:[%s3192 + $0x10] sm:$0xf]
    %v3198 = vld [vmem:[%s3192 + $0x14] sm:$0xf]
    %v3199 = vld [vmem:[%s3192 + $0x18] sm:$0xf]
    %v3200 = vld [vmem:[%s3192 + $0x1c] sm:$0xf]
    %v3201 = vld [vmem:[%s3192 + $0x20] sm:$0xf]
    %v3202 = vld [vmem:[%s3192 + $0x24] sm:$0xf]
    %v3203 = vld [vmem:[%s3192 + $0x28] sm:$0xf]
    %v3204 = vld [vmem:[%s3192 + $0x2c] sm:$0xf]
    %v3205 = vld [vmem:[%s3192 + $0x30] sm:$0xf]
    %v3206 = vld [vmem:[%s3192 + $0x34] sm:$0xf]
    %v3207 = vld [vmem:[%s3192 + $0x38] sm:$0xf]
    %v3208 = vld [vmem:[%s3192 + $0x3c] sm:$0xf]
    %s3209 = scalar_lea.vmem %s15, 1
    %v3210 = vld [vmem:[%s3209] sm:$0x1]
    %v3212 = vlaneseq
    %v3213 = vshrl.u32 %v3212, 7
    %v3214 = vsub.s32 0, %v3213
    %v3215 = vrot.slane %v3210, %v3214
    %v3233 = vunpack.c.l.b16 %v3193
    %v3234 = vunpack.c.l.b16 %v3194
    %v3235 = vunpack.c.l.b16 %v3195
    %v3236 = vunpack.c.l.b16 %v3196
    %v3237 = vunpack.c.l.b16 %v3197
    %v3238 = vunpack.c.l.b16 %v3198
    %v3239 = vunpack.c.l.b16 %v3199
    %v3240 = vunpack.c.l.b16 %v3200
    %v3241 = vunpack.c.l.b16 %v3201
    %v3242 = vunpack.c.l.b16 %v3202
    %v3243 = vunpack.c.l.b16 %v3203
    %v3244 = vunpack.c.l.b16 %v3204
    %v3245 = vunpack.c.l.b16 %v3205
    %v3246 = vunpack.c.l.b16 %v3206
    %v3247 = vunpack.c.l.b16 %v3207
    %v3248 = vunpack.c.l.b16 %v3208
    %v3249 = vpack.c.b16 %v3234, %v3233
    %v3250 = vpack.c.b16 %v3236, %v3235
    %v3251 = vpack.c.b16 %v3238, %v3237
    %v3252 = vpack.c.b16 %v3240, %v3239
    %v3253 = vpack.c.b16 %v3242, %v3241
    %v3254 = vpack.c.b16 %v3244, %v3243
    %v3255 = vpack.c.b16 %v3246, %v3245
    %v3256 = vpack.c.b16 %v3248, %v3247
    %3265 = vmatprep.subr.bf16.mxu0 0
    %3266 = vmatpush1.bf16.msra.mxu0 %v3249
    %3267 = vmatprep.subr.bf16.mxu0 0
    %3268 = vmatpush1.bf16.msra.mxu0 %v3250
    %3269 = vmatprep.subr.bf16.mxu0 0
    %3270 = vmatpush1.bf16.msra.mxu0 %v3251
    %3271 = vmatprep.subr.bf16.mxu0 0
    %3272 = vmatpush1.bf16.msra.mxu0 %v3252
    %3273 = vmatprep.subr.bf16.mxu0 0
    %3274 = vmatpush1.bf16.msra.mxu0 %v3253
    %3275 = vmatprep.subr.bf16.mxu0 0
    %3276 = vmatpush1.bf16.msra.mxu0 %v3254
    %3277 = vmatprep.subr.bf16.mxu0 0
    %3278 = vmatpush1.bf16.msra.mxu0 %v3255
    %3279 = vmatprep.subr.bf16.mxu0 0
    %3280 = vmatpush1.bf16.msra.mxu0 %v3256
    %3281 = vmatprep.subr.bf16.mxu0 0
    %3282 = vmatpush1.bf16.msra.mxu0 0
    %3283 = vmatprep.subr.bf16.mxu0 0
    %3284 = vmatpush1.bf16.msra.mxu0 0
    %3285 = vmatprep.subr.bf16.mxu0 0
    %3286 = vmatpush1.bf16.msra.mxu0 0
    %3287 = vmatprep.subr.bf16.mxu0 0
    %3288 = vmatpush1.bf16.msra.mxu0 0
    %3289 = vmatprep.subr.bf16.mxu0 0
    %3290 = vmatpush1.bf16.msra.mxu0 0
    %3291 = vmatprep.subr.bf16.mxu0 0
    %3292 = vmatpush1.bf16.msra.mxu0 0
    %3293 = vmatprep.subr.bf16.mxu0 0
    %3294 = vmatpush1.bf16.msra.mxu0 0
    %3295 = vmatprep.subr.bf16.mxu0 0
    %3296 = vmatpush1.bf16.msra.mxu0 0
    %3297 = vmatprep.mubr.bf16.mxu0 0
    %3298 = vmatmul.mubr.bf16.gmra.mrb[0].mxu0 %v3190
    %v3299 = vpop.f32.mrb[0].mxu0
    %v3300 = vadd.f32 %v3215, %v3299
    %v3301 = vpop.f32.mrb[0].mxu0
    %v3302 = vpop.f32.mrb[0].mxu0
    %v3303 = vpop.f32.mrb[0].mxu0
    %3304 = vmatprep.mubr.bf16.mxu0 0
    %3305 = vmatmul.mubr.bf16.gmra.mrb[0].mxu0 %v3191
    %v3306 = vpop.f32.mrb[0].mxu0
    %v3307 = vadd.f32 %v3215, %v3306
    %v3308 = vpop.f32.mrb[0].mxu0
    %v3309 = vpop.f32.mrb[0].mxu0
    %v3310 = vpop.f32.mrb[0].mxu0
    %3311 = vdwg.mxu0
    %v3312 = vadd.f32 %v3100, %v3300
    %v3313 = vadd.f32 %v3102, %v3307
    %s3314 = scalar_lea.vmem %s10, 1
    %v3315 = vld [vmem:[%s3314] sm:$0x1]
    %s3316 = scalar_lea.vmem %s11, 1
    %v3317 = vld [vmem:[%s3316] sm:$0x1]
    %v3318 = vsel %vm156, %v3312, 0.0
    %3319 = vadd.xlane.f32.xlu0 %v3318
    %v3320 = vpop.xlane.xlu0 %3319
    %v3321 = vsel %vm156, %v3313, 0.0
    %3322 = vadd.xlane.f32.xlu0 %v3321
    %v3323 = vpop.xlane.xlu0 %3322
    %v3324 = vmul.f32 %v3320, %v1415
    %v3325 = vmul.f32 %v3323, %v1415
    %v3326 = vsub.f32 %v3312, %v3324
    %v3327 = vsub.f32 %v3313, %v3325
    %v3328 = vmul.f32 %v3326, %v3326
    %v3329 = vmul.f32 %v3327, %v3327
    %v3330 = vsel %vm156, %v3328, 0.0
    %3331 = vadd.xlane.f32.xlu0 %v3330
    %v3332 = vpop.xlane.xlu0 %3331
    %v3333 = vsel %vm156, %v3329, 0.0
    %3334 = vadd.xlane.f32.xlu0 %v3333
    %v3335 = vpop.xlane.xlu0 %3334
    %v3336 = vmul.f32 %v3332, %v1415
    %v3337 = vmul.f32 %v3335, %v1415
    %v3338 = vadd.f32 %v3336, 1e-05
    %v3339 = vadd.f32 %v3337, 1e-05
    %v3340 = vrsqrt.pop %v3338
    %v3341 = vrsqrt.pop %v3339
    %v3342 = vmul.f32 %v3326, %v3340
    %v3343 = vmul.f32 %v3327, %v3341
    %v3345 = vlaneseq
    %v3346 = vshrl.u32 %v3345, 7
    %v3347 = vsub.s32 0, %v3346
    %v3348 = vrot.slane %v3315, %v3347
    %v3350 = vmul.f32 %v3342, %v3348
    %v3351 = vmul.f32 %v3343, %v3348
    %v3353 = vlaneseq
    %v3354 = vshrl.u32 %v3353, 7
    %v3355 = vsub.s32 0, %v3354
    %v3356 = vrot.slane %v3317, %v3355
    %v3358 = vadd.f32 %v3350, %v3356
    %v3359 = vadd.f32 %v3351, %v3356
    %v3361 = vrot.slane %v3359, 7
    %v3363 = vsel %vm120, %v3358, %v3361
    %v3364 = vpack.c.bf16 %v3363, %v3363
    %v3365 = vld [vmem:[%s16] sm:$0xf]
    %v3366 = vld [vmem:[%s16 + $0x4] sm:$0xf]
    %v3367 = vld [vmem:[%s16 + $0x8] sm:$0xf]
    %v3368 = vld [vmem:[%s16 + $0xc] sm:$0xf]
    %v3369 = vld [vmem:[%s17] sm:$0x1]
    %v3371 = vlaneseq
    %v3372 = vshrl.u32 %v3371, 7
    %v3373 = vsub.s32 0, %v3372
    %v3374 = vrot.slane %v3369, %v3373
    %v3380 = vunpack.c.l.b16 %v3365
    %v3381 = vunpack.c.l.b16 %v3366
    %v3382 = vunpack.c.l.b16 %v3367
    %v3383 = vunpack.c.l.b16 %v3368
    %v3384 = vpack.c.b16 %v3381, %v3380
    %v3385 = vpack.c.b16 %v3383, %v3382
    %v3389 = vsel %vm156, %v3364, 0
    %3391 = vmatprep.subr.bf16.mxu0 0
    %3392 = vmatpush1.bf16.msra.mxu0 %v3384
    %3393 = vmatprep.subr.bf16.mxu0 0
    %3394 = vmatpush1.bf16.msra.mxu0 %v3385
    %3395 = vmatprep.subr.bf16.mxu0 0
    %3396 = vmatpush1.bf16.msra.mxu0 0
    %3397 = vmatprep.subr.bf16.mxu0 0
    %3398 = vmatpush1.bf16.msra.mxu0 0
    %3399 = vmatprep.subr.bf16.mxu0 0
    %3400 = vmatpush1.bf16.msra.mxu0 0
    %3401 = vmatprep.subr.bf16.mxu0 0
    %3402 = vmatpush1.bf16.msra.mxu0 0
    %3403 = vmatprep.subr.bf16.mxu0 0
    %3404 = vmatpush1.bf16.msra.mxu0 0
    %3405 = vmatprep.subr.bf16.mxu0 0
    %3406 = vmatpush1.bf16.msra.mxu0 0
    %3407 = vmatprep.subr.bf16.mxu0 0
    %3408 = vmatpush1.bf16.msra.mxu0 0
    %3409 = vmatprep.subr.bf16.mxu0 0
    %3410 = vmatpush1.bf16.msra.mxu0 0
    %3411 = vmatprep.subr.bf16.mxu0 0
    %3412 = vmatpush1.bf16.msra.mxu0 0
    %3413 = vmatprep.subr.bf16.mxu0 0
    %3414 = vmatpush1.bf16.msra.mxu0 0
    %3415 = vmatprep.subr.bf16.mxu0 0
    %3416 = vmatpush1.bf16.msra.mxu0 0
    %3417 = vmatprep.subr.bf16.mxu0 0
    %3418 = vmatpush1.bf16.msra.mxu0 0
    %3419 = vmatprep.subr.bf16.mxu0 0
    %3420 = vmatpush1.bf16.msra.mxu0 0
    %3421 = vmatprep.subr.bf16.mxu0 0
    %3422 = vmatpush1.bf16.msra.mxu0 0
    %3423 = vmatprep.mubr.bf16.mxu0 0
    %3424 = vmatmul.mubr.bf16.gmra.mrb[0].mxu0 %v3389
    %v3425 = vpop.f32.mrb[0].mxu0
    %v3426 = vadd.f32 %v3374, %v3425
    %v3427 = vpop.f32.mrb[0].mxu0
    %v3428 = vpop.f32.mrb[0].mxu0
    %v3429 = vpop.f32.mrb[0].mxu0
    %3430 = vdwg.mxu0
    %vm3431 = vcmask 25600
    %v3432 = vsel %vm3431, %v3426, -inf
    %3433 = vmax.xlane.f32.xlu0 %v3432
    %v3434 = vpop.xlane.xlu0 %3433
    %v3435 = vsub.f32 %v3426, %v3434
    %v3436 = vmul.f32 %v3435, 1.442695
    %v3437 = vpow.pop %v3436
    %v3438 = vsel %vm3431, %v3437, 0.0
    %3439 = vadd.xlane.f32.xlu0 %v3438
    %v3440 = vpop.xlane.xlu0 %3439
    %v3441 = vrcp.pop %v3440
    %v3442 = vmul.f32 %v3437, %v3441
    %3443 = vst.msk [vmem:[#allocation2] sm:$0x3] %vm3431, %v3442
    // Predicated region
    $region74: #{tpu_custom_call.1} parent=1 // pred_check
      _
    $region75: #{tpu_custom_call.1} parent=1 // pred_check_branch
      %3445 = sbr.rel (0) target = $region77
    $region76: #{tpu_custom_call.1} parent=1 // pred_region
      %s3447 = ssub.s32 32, 32
      %3448 = vsyncadd [#allocation3], %s3447
      %s3450 = sshll.u32 [#allocation2], 4
      %s3451 = int_to_ptr.vmem [resolvable:$true] %s3450
      %3453 = dma.vmem_to_hbm [thread:$0]  %s3451, 32, %s18, [#allocation3]
    $region77: #{tpu_custom_call.1} parent=1 // pred_fallthru
      _
    // Predicated region
    $region78: #{tpu_custom_call.1} parent=1 // pred_check
      _
    $region79: #{tpu_custom_call.1} parent=1 // pred_check_branch
      %3455 = sbr.rel (0) target = $region81
    $region80: #{tpu_custom_call.1} parent=1 // pred_region
      %3456 = dma.done [#allocation3], 32
    $region81: #{tpu_custom_call.1} parent=1 // pred_fallthru
      _
    %3457 = vsyncpa [#allocation3], 1

</llo_original>
